<compile_context>
chip_gen: v6e
topology: v6e:2x2x1
jax: 0.10.0
libtpu: 0.0.40
codegen_flags: <defaults>
</compile_context>

<pallas_src>
import functools

import jax
import jax.numpy as jnp
from jax import lax
from jax.experimental import pallas as pl
from jax.experimental.pallas import tpu as pltpu


def _mnr_kernel(x_ref, wih_ref, b_ref, whhf_ref, whhb_ref,
                attw_ref, fcw_ref, fcb_ref,
                out_ref,
                xg_ref, enc_f_ref, enc_b_ref,
                *, hidden_dim, seq_len, num_notes):
    H = hidden_dim
    S = seq_len
    N = num_notes
    G = 4 * H  # gates per direction

    # Fused input projection for all notes / timesteps / both directions:
    # x is time-major (S*N, H); weights are (H, 8H) = [Wih_f.T | Wih_b.T];
    # input and hidden biases are folded into b_ref.
    xg_ref[...] = (jnp.dot(x_ref[...], wih_ref[...],
                           preferred_element_type=jnp.float32) + b_ref[...])

    whh_f = whhf_ref[...]        # (H, 4H)
    whh_b = whhb_ref[...]        # (H, 4H)

    h_f = jnp.zeros((N, H), jnp.float32)
    c_f = jnp.zeros((N, H), jnp.float32)
    h_b = jnp.zeros((N, H), jnp.float32)
    c_b = jnp.zeros((N, H), jnp.float32)

    # Fully unrolled time loop; forward and backward directions interleaved so
    # their independent MXU matmuls and EUP nonlinearities overlap.
    for t in range(S):
        tb = S - 1 - t
        xg_f = xg_ref[pl.ds(t * N, N), pl.ds(0, G)]     # (N, 4H)
        xg_b = xg_ref[pl.ds(tb * N, N), pl.ds(G, G)]    # (N, 4H)

        gates_f = xg_f + jnp.dot(h_f, whh_f, preferred_element_type=jnp.float32)
        gates_b = xg_b + jnp.dot(h_b, whh_b, preferred_element_type=jnp.float32)

        sf = jax.nn.sigmoid(gates_f)                    # whole (N, 4H) on EUP
        sb = jax.nn.sigmoid(gates_b)
        g_f = jnp.tanh(gates_f[:, 2 * H:3 * H])
        g_b = jnp.tanh(gates_b[:, 2 * H:3 * H])

        # gate order (PyTorch LSTM): i, f, g, o -- slices are 128-lane aligned.
        c_f = sf[:, H:2 * H] * c_f + sf[:, 0:H] * g_f
        c_b = sb[:, H:2 * H] * c_b + sb[:, 0:H] * g_b
        h_f = sf[:, 3 * H:4 * H] * jnp.tanh(c_f)
        h_b = sb[:, 3 * H:4 * H] * jnp.tanh(c_b)

        enc_f_ref[t] = h_f
        enc_b_ref[tb] = h_b

    ef = enc_f_ref[...]                                  # (S, N, H)
    eb = enc_b_ref[...]                                  # (S, N, H)

    # Attention: Linear(2H -> 1, no bias) + softmax over time + weighted sum,
    # computed on the VPU from the two direction halves (no concat, no MXU
    # matvec).
    attw = attw_ref[...]                                 # (1, 2H)
    w_f = attw[0:1, 0:H].reshape(1, 1, H)
    w_b = attw[0:1, H:2 * H].reshape(1, 1, H)
    scores = (jnp.sum(ef * w_f, axis=-1, keepdims=True)
              + jnp.sum(eb * w_b, axis=-1, keepdims=True))   # (S, N, 1)
    m = jnp.max(scores, axis=0, keepdims=True)
    e = jnp.exp(scores - m)
    att = e / jnp.sum(e, axis=0, keepdims=True)              # (S, N, 1)

    ctx_f = jnp.sum(att * ef, axis=0)                        # (N, H)
    ctx_b = jnp.sum(att * eb, axis=0)                        # (N, H)

    # Mean over notes (AdaptiveAvgPool1d(1) over the stacked notes).
    inv_n = jnp.float32(1.0 / N)
    pooled_f = jnp.sum(ctx_f, axis=0, keepdims=True) * inv_n  # (1, H)
    pooled_b = jnp.sum(ctx_b, axis=0, keepdims=True) * inv_n  # (1, H)

    # Final Linear(2H -> OUT) split into the two halves of the weight.
    fcw = fcw_ref[...]                                        # (2H, OUT)
    out = (jnp.dot(pooled_f, fcw[0:H, :], preferred_element_type=jnp.float32)
           + jnp.dot(pooled_b, fcw[H:2 * H, :],
                     preferred_element_type=jnp.float32)
           + fcb_ref[...])
    out_ref[...] = out.astype(out_ref.dtype)


def multi_note_forward(x, params, output_dim):
    """x: (N, S, H) f32; params in PyTorch layout. Returns (1, output_dim)."""
    N, S, H = x.shape
    (wih_f, whh_f, bih_f, bhh_f,
     wih_b, whh_b, bih_b, bhh_b,
     w_att, w_fc, b_fc) = params

    # Layout plumbing in the wrapper (pure JAX):
    #  * time-major x so step t's rows are contiguous: (S*N, H)
    #  * fused input-projection weight for both directions: (H, 8H)
    #  * input + hidden biases folded into one (1, 8H) bias
    x_tm = jnp.transpose(x, (1, 0, 2)).reshape(S * N, H)
    wih_cat = jnp.concatenate([wih_f.T, wih_b.T], axis=1)           # (H, 8H)
    b_cat = jnp.concatenate([bih_f + bhh_f, bih_b + bhh_b]).reshape(1, 8 * H)

    args = (x_tm, wih_cat, b_cat,
            whh_f.T, whh_b.T,            # (H, 4H) each
            w_att,                       # (1, 2H)
            w_fc.T,                      # (2H, OUT)
            b_fc.reshape(1, -1))         # (1, OUT)

    def full_spec(a):
        return pl.BlockSpec(a.shape, lambda i, nd=a.ndim: (0,) * nd)

    kernel = functools.partial(_mnr_kernel, hidden_dim=H, seq_len=S,
                               num_notes=N)

    return pl.pallas_call(
        kernel,
        out_shape=jax.ShapeDtypeStruct((1, output_dim), jnp.float32),
        grid_spec=pltpu.PrefetchScalarGridSpec(
            num_scalar_prefetch=0,
            grid=(1,),
            in_specs=[full_spec(a) for a in args],
            out_specs=pl.BlockSpec((1, output_dim), lambda i: (0, 0)),
            scratch_shapes=[
                pltpu.VMEM((S * N, 8 * H), jnp.float32),  # fused input proj
                pltpu.VMEM((S, N, H), jnp.float32),       # fwd hidden states
                pltpu.VMEM((S, N, H), jnp.float32),       # bwd hidden states
            ]),
        compiler_params=pltpu.CompilerParams(
            dimension_semantics=("arbitrary",)),
    )(*args)


def reference_forward(x, params):
    """Pure-JAX reference mirroring the PyTorch forward."""
    (wih_f, whh_f, bih_f, bhh_f,
     wih_b, whh_b, bih_b, bhh_b,
     w_att, w_fc, b_fc) = params
    H = whh_f.shape[1]

    def lstm(xs, wih, whh, bih, bhh):
        def step(carry, x_t):
            h, c = carry
            gates = x_t @ wih.T + bih + h @ whh.T + bhh
            i, f, g, o = jnp.split(gates, 4)
            i = jax.nn.sigmoid(i)
            f = jax.nn.sigmoid(f)
            g = jnp.tanh(g)
            o = jax.nn.sigmoid(o)
            c = f * c + i * g
            h = o * jnp.tanh(c)
            return (h, c), h
        _, hs = lax.scan(step, (jnp.zeros(H), jnp.zeros(H)), xs)
        return hs

    ctxs = []
    for note in x:
        hf = lstm(note, wih_f, whh_f, bih_f, bhh_f)
        hb = lstm(note[::-1], wih_b, whh_b, bih_b, bhh_b)[::-1]
        enc = jnp.concatenate([hf, hb], axis=-1)           # (S, 2H)
        scores = enc @ w_att.T                             # (S, 1)
        w = jax.nn.softmax(scores, axis=0)
        ctxs.append(jnp.sum(enc * w, axis=0))
    pooled = jnp.mean(jnp.stack(ctxs, axis=0), axis=0)     # (2H,)
    return (pooled @ w_fc.T + b_fc)[None, :]


if __name__ == "__main__":
    # Small shapes consistent with the module (hidden_dim : output_dim = 2 : 1,
    # scaled down), chosen so gate slices land on 128-lane boundaries.
    H, OUT, S, N = 128, 64, 8, 4

    key = jax.random.PRNGKey(0)
    ks = jax.random.split(key, 12)
    scale = 0.1
    params = (
        jax.random.normal(ks[0], (4 * H, H), jnp.float32) * scale,   # W_ih fwd
        jax.random.normal(ks[1], (4 * H, H), jnp.float32) * scale,   # W_hh fwd
        jax.random.normal(ks[2], (4 * H,), jnp.float32) * scale,     # b_ih fwd
        jax.random.normal(ks[3], (4 * H,), jnp.float32) * scale,     # b_hh fwd
        jax.random.normal(ks[4], (4 * H, H), jnp.float32) * scale,   # W_ih bwd
        jax.random.normal(ks[5], (4 * H, H), jnp.float32) * scale,   # W_hh bwd
        jax.random.normal(ks[6], (4 * H,), jnp.float32) * scale,     # b_ih bwd
        jax.random.normal(ks[7], (4 * H,), jnp.float32) * scale,     # b_hh bwd
        jax.random.normal(ks[8], (1, 2 * H), jnp.float32) * scale,   # attention W
        jax.random.normal(ks[9], (OUT, 2 * H), jnp.float32) * scale, # fc W
        jax.random.normal(ks[10], (OUT,), jnp.float32) * scale,      # fc b
    )
    x = jax.random.normal(ks[11], (N, S, H), jnp.float32)

    out = multi_note_forward(x, params, OUT)
    out = jax.block_until_ready(out)

    ref = reference_forward(x, params)
    assert out.shape == (1, OUT)
    assert jnp.allclose(out, ref, rtol=1e-4, atol=1e-4), (
        f"mismatch: max abs err {jnp.max(jnp.abs(out - ref))}")

    print("KERNEL_OK")
</pallas_src>

<mosaic_0001>
module attributes {stable_mosaic.version = 11 : i64} {
  func.func @_mnr_kernel(%arg0: i32, %arg1: memref<32x128xf32, #tpu.memory_space<vmem>>, %arg2: memref<128x1024xf32, #tpu.memory_space<vmem>>, %arg3: memref<1x1024xf32, #tpu.memory_space<vmem>>, %arg4: memref<128x512xf32, #tpu.memory_space<vmem>>, %arg5: memref<128x512xf32, #tpu.memory_space<vmem>>, %arg6: memref<1x256xf32, #tpu.memory_space<vmem>>, %arg7: memref<256x64xf32, #tpu.memory_space<vmem>>, %arg8: memref<1x64xf32, #tpu.memory_space<vmem>>, %arg9: memref<1x64xf32, #tpu.memory_space<vmem>>, %arg10: memref<32x1024xf32, #tpu.memory_space<vmem>>, %arg11: memref<8x4x128xf32, #tpu.memory_space<vmem>>, %arg12: memref<8x4x128xf32, #tpu.memory_space<vmem>>) attributes {dimension_semantics = [#tpu.dimension_semantics<arbitrary>], iteration_bounds = array<i64: 1>, scalar_prefetch = 0 : i64, scratch_operands = 3 : i64, tpu.core_type = #tpu.core_type<tc>, window_params = [{pipeline_mode = #tpu.pipeline_mode<synchronous>, transform_indices = @transform_0, window_bounds = array<i64: 32, 128>}, {pipeline_mode = #tpu.pipeline_mode<synchronous>, transform_indices = @transform_1, window_bounds = array<i64: 128, 1024>}, {pipeline_mode = #tpu.pipeline_mode<synchronous>, transform_indices = @transform_2, window_bounds = array<i64: 1, 1024>}, {pipeline_mode = #tpu.pipeline_mode<synchronous>, transform_indices = @transform_3, window_bounds = array<i64: 128, 512>}, {pipeline_mode = #tpu.pipeline_mode<synchronous>, transform_indices = @transform_4, window_bounds = array<i64: 128, 512>}, {pipeline_mode = #tpu.pipeline_mode<synchronous>, transform_indices = @transform_5, window_bounds = array<i64: 1, 256>}, {pipeline_mode = #tpu.pipeline_mode<synchronous>, transform_indices = @transform_6, window_bounds = array<i64: 256, 64>}, {pipeline_mode = #tpu.pipeline_mode<synchronous>, transform_indices = @transform_7, window_bounds = array<i64: 1, 64>}, {pipeline_mode = #tpu.pipeline_mode<synchronous>, transform_indices = @transform_8, window_bounds = array<i64: 1, 64>}]} {
    %c0 = arith.constant 0 : index
    %c0_0 = arith.constant 0 : index
    %0 = vector.load %arg1[%c0, %c0_0] : memref<32x128xf32, #tpu.memory_space<vmem>>, vector<32x128xf32>
    %c0_1 = arith.constant 0 : index
    %c0_2 = arith.constant 0 : index
    %1 = vector.load %arg2[%c0_1, %c0_2] : memref<128x1024xf32, #tpu.memory_space<vmem>>, vector<128x1024xf32>
    %cst = arith.constant dense<0.000000e+00> : vector<32x1024xf32>
    %2 = tpu.matmul %0, %1, %cst {dimension_numbers = #tpu.dot_dimension_numbers<[1], [0], [0], [1], [0, 0, 1, 1], [], []>} : vector<32x128xf32>, vector<128x1024xf32>, vector<32x1024xf32> -> vector<32x1024xf32>
    %c0_3 = arith.constant 0 : index
    %c0_4 = arith.constant 0 : index
    %3 = vector.load %arg3[%c0_3, %c0_4] : memref<1x1024xf32, #tpu.memory_space<vmem>>, vector<1x1024xf32>
    %4 = vector.broadcast %3 : vector<1x1024xf32> to vector<32x1024xf32>
    %5 = arith.addf %2, %4 : vector<32x1024xf32>
    %c0_5 = arith.constant 0 : index
    %c0_6 = arith.constant 0 : index
    %6 = vector.load %arg10[%c0_5, %c0_6] : memref<32x1024xf32, #tpu.memory_space<vmem>>, vector<32x1024xf32>
    tpu.vector_store %arg10[%c0_5, %c0_6], %5 {strides = array<i32>} : memref<32x1024xf32, #tpu.memory_space<vmem>>, vector<32x1024xf32>,
    %c0_7 = arith.constant 0 : index
    %c0_8 = arith.constant 0 : index
    %7 = vector.load %arg4[%c0_7, %c0_8] : memref<128x512xf32, #tpu.memory_space<vmem>>, vector<128x512xf32>
    %c0_9 = arith.constant 0 : index
    %c0_10 = arith.constant 0 : index
    %8 = vector.load %arg5[%c0_9, %c0_10] : memref<128x512xf32, #tpu.memory_space<vmem>>, vector<128x512xf32>
    %cst_11 = arith.constant 0.000000e+00 : f32
    %9 = vector.broadcast %cst_11 : f32 to vector<4x128xf32>
    %cst_12 = arith.constant 0.000000e+00 : f32
    %10 = vector.broadcast %cst_12 : f32 to vector<4x128xf32>
    %cst_13 = arith.constant 0.000000e+00 : f32
    %11 = vector.broadcast %cst_13 : f32 to vector<4x128xf32>
    %cst_14 = arith.constant 0.000000e+00 : f32
    %12 = vector.broadcast %cst_14 : f32 to vector<4x128xf32>
    %c0_15 = arith.constant 0 : index
    %c0_16 = arith.constant 0 : index
    %13 = vector.load %arg10[%c0_15, %c0_16] : memref<32x1024xf32, #tpu.memory_space<vmem>>, vector<4x512xf32>
    %c28 = arith.constant 28 : index
    %c512 = arith.constant 512 : index
    %14 = vector.load %arg10[%c28, %c512] : memref<32x1024xf32, #tpu.memory_space<vmem>>, vector<4x512xf32>
    %cst_17 = arith.constant dense<0.000000e+00> : vector<4x512xf32>
    %15 = tpu.matmul %9, %7, %cst_17 {dimension_numbers = #tpu.dot_dimension_numbers<[1], [0], [0], [1], [0, 0, 1, 1], [], []>} : vector<4x128xf32>, vector<128x512xf32>, vector<4x512xf32> -> vector<4x512xf32>
    %16 = arith.addf %13, %15 : vector<4x512xf32>
    %cst_18 = arith.constant dense<0.000000e+00> : vector<4x512xf32>
    %17 = tpu.matmul %11, %8, %cst_18 {dimension_numbers = #tpu.dot_dimension_numbers<[1], [0], [0], [1], [0, 0, 1, 1], [], []>} : vector<4x128xf32>, vector<128x512xf32>, vector<4x512xf32> -> vector<4x512xf32>
    %18 = arith.addf %14, %17 : vector<4x512xf32>
    %19 = arith.negf %16 : vector<4x512xf32>
    %20 = math.exp %19 : vector<4x512xf32>
    %cst_19 = arith.constant 1.000000e+00 : f32
    %21 = vector.broadcast %cst_19 : f32 to vector<4x512xf32>
    %22 = arith.addf %21, %20 : vector<4x512xf32>
    %23 = arith.divf %21, %22 : vector<4x512xf32>
    %24 = arith.negf %18 : vector<4x512xf32>
    %25 = math.exp %24 : vector<4x512xf32>
    %cst_20 = arith.constant 1.000000e+00 : f32
    %26 = vector.broadcast %cst_20 : f32 to vector<4x512xf32>
    %27 = arith.addf %26, %25 : vector<4x512xf32>
    %28 = arith.divf %26, %27 : vector<4x512xf32>
    %29 = vector.extract_strided_slice %16 {offsets = [0, 256], sizes = [4, 128], strides = [1, 1]} : vector<4x512xf32> to vector<4x128xf32>
    %30 = math.tanh %29 : vector<4x128xf32>
    %31 = vector.extract_strided_slice %18 {offsets = [0, 256], sizes = [4, 128], strides = [1, 1]} : vector<4x512xf32> to vector<4x128xf32>
    %32 = math.tanh %31 : vector<4x128xf32>
    %33 = vector.extract_strided_slice %23 {offsets = [0, 128], sizes = [4, 128], strides = [1, 1]} : vector<4x512xf32> to vector<4x128xf32>
    %34 = arith.mulf %33, %10 : vector<4x128xf32>
    %35 = vector.extract_strided_slice %23 {offsets = [0, 0], sizes = [4, 128], strides = [1, 1]} : vector<4x512xf32> to vector<4x128xf32>
    %36 = arith.mulf %35, %30 : vector<4x128xf32>
    %37 = arith.addf %34, %36 : vector<4x128xf32>
    %38 = vector.extract_strided_slice %28 {offsets = [0, 128], sizes = [4, 128], strides = [1, 1]} : vector<4x512xf32> to vector<4x128xf32>
    %39 = arith.mulf %38, %12 : vector<4x128xf32>
    %40 = vector.extract_strided_slice %28 {offsets = [0, 0], sizes = [4, 128], strides = [1, 1]} : vector<4x512xf32> to vector<4x128xf32>
    %41 = arith.mulf %40, %32 : vector<4x128xf32>
    %42 = arith.addf %39, %41 : vector<4x128xf32>
    %43 = vector.extract_strided_slice %23 {offsets = [0, 384], sizes = [4, 128], strides = [1, 1]} : vector<4x512xf32> to vector<4x128xf32>
    %44 = math.tanh %37 : vector<4x128xf32>
    %45 = arith.mulf %43, %44 : vector<4x128xf32>
    %46 = vector.extract_strided_slice %28 {offsets = [0, 384], sizes = [4, 128], strides = [1, 1]} : vector<4x512xf32> to vector<4x128xf32>
    %47 = math.tanh %42 : vector<4x128xf32>
    %48 = arith.mulf %46, %47 : vector<4x128xf32>
    %c0_21 = arith.constant 0 : index
    %c0_22 = arith.constant 0 : index
    %c0_23 = arith.constant 0 : index
    %49 = vector.load %arg11[%c0_21, %c0_22, %c0_23] : memref<8x4x128xf32, #tpu.memory_space<vmem>>, vector<1x4x128xf32>
    %50 = vector.shape_cast %49 : vector<1x4x128xf32> to vector<4x128xf32>
    %51 = vector.shape_cast %45 : vector<4x128xf32> to vector<1x4x128xf32>
    tpu.vector_store %arg11[%c0_21, %c0_22, %c0_23], %51 {strides = array<i32>} : memref<8x4x128xf32, #tpu.memory_space<vmem>>, vector<1x4x128xf32>,
    %c7 = arith.constant 7 : index
    %c0_24 = arith.constant 0 : index
    %c0_25 = arith.constant 0 : index
    %52 = vector.load %arg12[%c7, %c0_24, %c0_25] : memref<8x4x128xf32, #tpu.memory_space<vmem>>, vector<1x4x128xf32>
    %53 = vector.shape_cast %52 : vector<1x4x128xf32> to vector<4x128xf32>
    %54 = vector.shape_cast %48 : vector<4x128xf32> to vector<1x4x128xf32>
    tpu.vector_store %arg12[%c7, %c0_24, %c0_25], %54 {strides = array<i32>} : memref<8x4x128xf32, #tpu.memory_space<vmem>>, vector<1x4x128xf32>,
    %c4 = arith.constant 4 : index
    %c0_26 = arith.constant 0 : index
    %55 = vector.load %arg10[%c4, %c0_26] : memref<32x1024xf32, #tpu.memory_space<vmem>>, vector<4x512xf32>
    %c24 = arith.constant 24 : index
    %c512_27 = arith.constant 512 : index
    %56 = vector.load %arg10[%c24, %c512_27] : memref<32x1024xf32, #tpu.memory_space<vmem>>, vector<4x512xf32>
    %cst_28 = arith.constant dense<0.000000e+00> : vector<4x512xf32>
    %57 = tpu.matmul %45, %7, %cst_28 {dimension_numbers = #tpu.dot_dimension_numbers<[1], [0], [0], [1], [0, 0, 1, 1], [], []>} : vector<4x128xf32>, vector<128x512xf32>, vector<4x512xf32> -> vector<4x512xf32>
    %58 = arith.addf %55, %57 : vector<4x512xf32>
    %cst_29 = arith.constant dense<0.000000e+00> : vector<4x512xf32>
    %59 = tpu.matmul %48, %8, %cst_29 {dimension_numbers = #tpu.dot_dimension_numbers<[1], [0], [0], [1], [0, 0, 1, 1], [], []>} : vector<4x128xf32>, vector<128x512xf32>, vector<4x512xf32> -> vector<4x512xf32>
    %60 = arith.addf %56, %59 : vector<4x512xf32>
    %61 = arith.negf %58 : vector<4x512xf32>
    %62 = math.exp %61 : vector<4x512xf32>
    %cst_30 = arith.constant 1.000000e+00 : f32
    %63 = vector.broadcast %cst_30 : f32 to vector<4x512xf32>
    %64 = arith.addf %63, %62 : vector<4x512xf32>
    %65 = arith.divf %63, %64 : vector<4x512xf32>
    %66 = arith.negf %60 : vector<4x512xf32>
    %67 = math.exp %66 : vector<4x512xf32>
    %cst_31 = arith.constant 1.000000e+00 : f32
    %68 = vector.broadcast %cst_31 : f32 to vector<4x512xf32>
    %69 = arith.addf %68, %67 : vector<4x512xf32>
    %70 = arith.divf %68, %69 : vector<4x512xf32>
    %71 = vector.extract_strided_slice %58 {offsets = [0, 256], sizes = [4, 128], strides = [1, 1]} : vector<4x512xf32> to vector<4x128xf32>
    %72 = math.tanh %71 : vector<4x128xf32>
    %73 = vector.extract_strided_slice %60 {offsets = [0, 256], sizes = [4, 128], strides = [1, 1]} : vector<4x512xf32> to vector<4x128xf32>
    %74 = math.tanh %73 : vector<4x128xf32>
    %75 = vector.extract_strided_slice %65 {offsets = [0, 128], sizes = [4, 128], strides = [1, 1]} : vector<4x512xf32> to vector<4x128xf32>
    %76 = arith.mulf %75, %37 : vector<4x128xf32>
    %77 = vector.extract_strided_slice %65 {offsets = [0, 0], sizes = [4, 128], strides = [1, 1]} : vector<4x512xf32> to vector<4x128xf32>
    %78 = arith.mulf %77, %72 : vector<4x128xf32>
    %79 = arith.addf %76, %78 : vector<4x128xf32>
    %80 = vector.extract_strided_slice %70 {offsets = [0, 128], sizes = [4, 128], strides = [1, 1]} : vector<4x512xf32> to vector<4x128xf32>
    %81 = arith.mulf %80, %42 : vector<4x128xf32>
    %82 = vector.extract_strided_slice %70 {offsets = [0, 0], sizes = [4, 128], strides = [1, 1]} : vector<4x512xf32> to vector<4x128xf32>
    %83 = arith.mulf %82, %74 : vector<4x128xf32>
    %84 = arith.addf %81, %83 : vector<4x128xf32>
    %85 = vector.extract_strided_slice %65 {offsets = [0, 384], sizes = [4, 128], strides = [1, 1]} : vector<4x512xf32> to vector<4x128xf32>
    %86 = math.tanh %79 : vector<4x128xf32>
    %87 = arith.mulf %85, %86 : vector<4x128xf32>
    %88 = vector.extract_strided_slice %70 {offsets = [0, 384], sizes = [4, 128], strides = [1, 1]} : vector<4x512xf32> to vector<4x128xf32>
    %89 = math.tanh %84 : vector<4x128xf32>
    %90 = arith.mulf %88, %89 : vector<4x128xf32>
    %c1 = arith.constant 1 : index
    %c0_32 = arith.constant 0 : index
    %c0_33 = arith.constant 0 : index
    %91 = vector.load %arg11[%c1, %c0_32, %c0_33] : memref<8x4x128xf32, #tpu.memory_space<vmem>>, vector<1x4x128xf32>
    %92 = vector.shape_cast %91 : vector<1x4x128xf32> to vector<4x128xf32>
    %93 = vector.shape_cast %87 : vector<4x128xf32> to vector<1x4x128xf32>
    tpu.vector_store %arg11[%c1, %c0_32, %c0_33], %93 {strides = array<i32>} : memref<8x4x128xf32, #tpu.memory_space<vmem>>, vector<1x4x128xf32>,
    %c6 = arith.constant 6 : index
    %c0_34 = arith.constant 0 : index
    %c0_35 = arith.constant 0 : index
    %94 = vector.load %arg12[%c6, %c0_34, %c0_35] : memref<8x4x128xf32, #tpu.memory_space<vmem>>, vector<1x4x128xf32>
    %95 = vector.shape_cast %94 : vector<1x4x128xf32> to vector<4x128xf32>
    %96 = vector.shape_cast %90 : vector<4x128xf32> to vector<1x4x128xf32>
    tpu.vector_store %arg12[%c6, %c0_34, %c0_35], %96 {strides = array<i32>} : memref<8x4x128xf32, #tpu.memory_space<vmem>>, vector<1x4x128xf32>,
    %c8 = arith.constant 8 : index
    %c0_36 = arith.constant 0 : index
    %97 = vector.load %arg10[%c8, %c0_36] : memref<32x1024xf32, #tpu.memory_space<vmem>>, vector<4x512xf32>
    %c20 = arith.constant 20 : index
    %c512_37 = arith.constant 512 : index
    %98 = vector.load %arg10[%c20, %c512_37] : memref<32x1024xf32, #tpu.memory_space<vmem>>, vector<4x512xf32>
    %cst_38 = arith.constant dense<0.000000e+00> : vector<4x512xf32>
    %99 = tpu.matmul %87, %7, %cst_38 {dimension_numbers = #tpu.dot_dimension_numbers<[1], [0], [0], [1], [0, 0, 1, 1], [], []>} : vector<4x128xf32>, vector<128x512xf32>, vector<4x512xf32> -> vector<4x512xf32>
    %100 = arith.addf %97, %99 : vector<4x512xf32>
    %cst_39 = arith.constant dense<0.000000e+00> : vector<4x512xf32>
    %101 = tpu.matmul %90, %8, %cst_39 {dimension_numbers = #tpu.dot_dimension_numbers<[1], [0], [0], [1], [0, 0, 1, 1], [], []>} : vector<4x128xf32>, vector<128x512xf32>, vector<4x512xf32> -> vector<4x512xf32>
    %102 = arith.addf %98, %101 : vector<4x512xf32>
    %103 = arith.negf %100 : vector<4x512xf32>
    %104 = math.exp %103 : vector<4x512xf32>
    %cst_40 = arith.constant 1.000000e+00 : f32
    %105 = vector.broadcast %cst_40 : f32 to vector<4x512xf32>
    %106 = arith.addf %105, %104 : vector<4x512xf32>
    %107 = arith.divf %105, %106 : vector<4x512xf32>
    %108 = arith.negf %102 : vector<4x512xf32>
    %109 = math.exp %108 : vector<4x512xf32>
    %cst_41 = arith.constant 1.000000e+00 : f32
    %110 = vector.broadcast %cst_41 : f32 to vector<4x512xf32>
    %111 = arith.addf %110, %109 : vector<4x512xf32>
    %112 = arith.divf %110, %111 : vector<4x512xf32>
    %113 = vector.extract_strided_slice %100 {offsets = [0, 256], sizes = [4, 128], strides = [1, 1]} : vector<4x512xf32> to vector<4x128xf32>
    %114 = math.tanh %113 : vector<4x128xf32>
    %115 = vector.extract_strided_slice %102 {offsets = [0, 256], sizes = [4, 128], strides = [1, 1]} : vector<4x512xf32> to vector<4x128xf32>
    %116 = math.tanh %115 : vector<4x128xf32>
    %117 = vector.extract_strided_slice %107 {offsets = [0, 128], sizes = [4, 128], strides = [1, 1]} : vector<4x512xf32> to vector<4x128xf32>
    %118 = arith.mulf %117, %79 : vector<4x128xf32>
    %119 = vector.extract_strided_slice %107 {offsets = [0, 0], sizes = [4, 128], strides = [1, 1]} : vector<4x512xf32> to vector<4x128xf32>
    %120 = arith.mulf %119, %114 : vector<4x128xf32>
    %121 = arith.addf %118, %120 : vector<4x128xf32>
    %122 = vector.extract_strided_slice %112 {offsets = [0, 128], sizes = [4, 128], strides = [1, 1]} : vector<4x512xf32> to vector<4x128xf32>
    %123 = arith.mulf %122, %84 : vector<4x128xf32>
    %124 = vector.extract_strided_slice %112 {offsets = [0, 0], sizes = [4, 128], strides = [1, 1]} : vector<4x512xf32> to vector<4x128xf32>
    %125 = arith.mulf %124, %116 : vector<4x128xf32>
    %126 = arith.addf %123, %125 : vector<4x128xf32>
    %127 = vector.extract_strided_slice %107 {offsets = [0, 384], sizes = [4, 128], strides = [1, 1]} : vector<4x512xf32> to vector<4x128xf32>
    %128 = math.tanh %121 : vector<4x128xf32>
    %129 = arith.mulf %127, %128 : vector<4x128xf32>
    %130 = vector.extract_strided_slice %112 {offsets = [0, 384], sizes = [4, 128], strides = [1, 1]} : vector<4x512xf32> to vector<4x128xf32>
    %131 = math.tanh %126 : vector<4x128xf32>
    %132 = arith.mulf %130, %131 : vector<4x128xf32>
    %c2 = arith.constant 2 : index
    %c0_42 = arith.constant 0 : index
    %c0_43 = arith.constant 0 : index
    %133 = vector.load %arg11[%c2, %c0_42, %c0_43] : memref<8x4x128xf32, #tpu.memory_space<vmem>>, vector<1x4x128xf32>
    %134 = vector.shape_cast %133 : vector<1x4x128xf32> to vector<4x128xf32>
    %135 = vector.shape_cast %129 : vector<4x128xf32> to vector<1x4x128xf32>
    tpu.vector_store %arg11[%c2, %c0_42, %c0_43], %135 {strides = array<i32>} : memref<8x4x128xf32, #tpu.memory_space<vmem>>, vector<1x4x128xf32>,
    %c5 = arith.constant 5 : index
    %c0_44 = arith.constant 0 : index
    %c0_45 = arith.constant 0 : index
    %136 = vector.load %arg12[%c5, %c0_44, %c0_45] : memref<8x4x128xf32, #tpu.memory_space<vmem>>, vector<1x4x128xf32>
    %137 = vector.shape_cast %136 : vector<1x4x128xf32> to vector<4x128xf32>
    %138 = vector.shape_cast %132 : vector<4x128xf32> to vector<1x4x128xf32>
    tpu.vector_store %arg12[%c5, %c0_44, %c0_45], %138 {strides = array<i32>} : memref<8x4x128xf32, #tpu.memory_space<vmem>>, vector<1x4x128xf32>,
    %c12 = arith.constant 12 : index
    %c0_46 = arith.constant 0 : index
    %139 = vector.load %arg10[%c12, %c0_46] : memref<32x1024xf32, #tpu.memory_space<vmem>>, vector<4x512xf32>
    %c16 = arith.constant 16 : index
    %c512_47 = arith.constant 512 : index
    %140 = vector.load %arg10[%c16, %c512_47] : memref<32x1024xf32, #tpu.memory_space<vmem>>, vector<4x512xf32>
    %cst_48 = arith.constant dense<0.000000e+00> : vector<4x512xf32>
    %141 = tpu.matmul %129, %7, %cst_48 {dimension_numbers = #tpu.dot_dimension_numbers<[1], [0], [0], [1], [0, 0, 1, 1], [], []>} : vector<4x128xf32>, vector<128x512xf32>, vector<4x512xf32> -> vector<4x512xf32>
    %142 = arith.addf %139, %141 : vector<4x512xf32>
    %cst_49 = arith.constant dense<0.000000e+00> : vector<4x512xf32>
    %143 = tpu.matmul %132, %8, %cst_49 {dimension_numbers = #tpu.dot_dimension_numbers<[1], [0], [0], [1], [0, 0, 1, 1], [], []>} : vector<4x128xf32>, vector<128x512xf32>, vector<4x512xf32> -> vector<4x512xf32>
    %144 = arith.addf %140, %143 : vector<4x512xf32>
    %145 = arith.negf %142 : vector<4x512xf32>
    %146 = math.exp %145 : vector<4x512xf32>
    %cst_50 = arith.constant 1.000000e+00 : f32
    %147 = vector.broadcast %cst_50 : f32 to vector<4x512xf32>
    %148 = arith.addf %147, %146 : vector<4x512xf32>
    %149 = arith.divf %147, %148 : vector<4x512xf32>
    %150 = arith.negf %144 : vector<4x512xf32>
    %151 = math.exp %150 : vector<4x512xf32>
    %cst_51 = arith.constant 1.000000e+00 : f32
    %152 = vector.broadcast %cst_51 : f32 to vector<4x512xf32>
    %153 = arith.addf %152, %151 : vector<4x512xf32>
    %154 = arith.divf %152, %153 : vector<4x512xf32>
    %155 = vector.extract_strided_slice %142 {offsets = [0, 256], sizes = [4, 128], strides = [1, 1]} : vector<4x512xf32> to vector<4x128xf32>
    %156 = math.tanh %155 : vector<4x128xf32>
    %157 = vector.extract_strided_slice %144 {offsets = [0, 256], sizes = [4, 128], strides = [1, 1]} : vector<4x512xf32> to vector<4x128xf32>
    %158 = math.tanh %157 : vector<4x128xf32>
    %159 = vector.extract_strided_slice %149 {offsets = [0, 128], sizes = [4, 128], strides = [1, 1]} : vector<4x512xf32> to vector<4x128xf32>
    %160 = arith.mulf %159, %121 : vector<4x128xf32>
    %161 = vector.extract_strided_slice %149 {offsets = [0, 0], sizes = [4, 128], strides = [1, 1]} : vector<4x512xf32> to vector<4x128xf32>
    %162 = arith.mulf %161, %156 : vector<4x128xf32>
    %163 = arith.addf %160, %162 : vector<4x128xf32>
    %164 = vector.extract_strided_slice %154 {offsets = [0, 128], sizes = [4, 128], strides = [1, 1]} : vector<4x512xf32> to vector<4x128xf32>
    %165 = arith.mulf %164, %126 : vector<4x128xf32>
    %166 = vector.extract_strided_slice %154 {offsets = [0, 0], sizes = [4, 128], strides = [1, 1]} : vector<4x512xf32> to vector<4x128xf32>
    %167 = arith.mulf %166, %158 : vector<4x128xf32>
    %168 = arith.addf %165, %167 : vector<4x128xf32>
    %169 = vector.extract_strided_slice %149 {offsets = [0, 384], sizes = [4, 128], strides = [1, 1]} : vector<4x512xf32> to vector<4x128xf32>
    %170 = math.tanh %163 : vector<4x128xf32>
    %171 = arith.mulf %169, %170 : vector<4x128xf32>
    %172 = vector.extract_strided_slice %154 {offsets = [0, 384], sizes = [4, 128], strides = [1, 1]} : vector<4x512xf32> to vector<4x128xf32>
    %173 = math.tanh %168 : vector<4x128xf32>
    %174 = arith.mulf %172, %173 : vector<4x128xf32>
    %c3 = arith.constant 3 : index
    %c0_52 = arith.constant 0 : index
    %c0_53 = arith.constant 0 : index
    %175 = vector.load %arg11[%c3, %c0_52, %c0_53] : memref<8x4x128xf32, #tpu.memory_space<vmem>>, vector<1x4x128xf32>
    %176 = vector.shape_cast %175 : vector<1x4x128xf32> to vector<4x128xf32>
    %177 = vector.shape_cast %171 : vector<4x128xf32> to vector<1x4x128xf32>
    tpu.vector_store %arg11[%c3, %c0_52, %c0_53], %177 {strides = array<i32>} : memref<8x4x128xf32, #tpu.memory_space<vmem>>, vector<1x4x128xf32>,
    %c4_54 = arith.constant 4 : index
    %c0_55 = arith.constant 0 : index
    %c0_56 = arith.constant 0 : index
    %178 = vector.load %arg12[%c4_54, %c0_55, %c0_56] : memref<8x4x128xf32, #tpu.memory_space<vmem>>, vector<1x4x128xf32>
    %179 = vector.shape_cast %178 : vector<1x4x128xf32> to vector<4x128xf32>
    %180 = vector.shape_cast %174 : vector<4x128xf32> to vector<1x4x128xf32>
    tpu.vector_store %arg12[%c4_54, %c0_55, %c0_56], %180 {strides = array<i32>} : memref<8x4x128xf32, #tpu.memory_space<vmem>>, vector<1x4x128xf32>,
    %c16_57 = arith.constant 16 : index
    %c0_58 = arith.constant 0 : index
    %181 = vector.load %arg10[%c16_57, %c0_58] : memref<32x1024xf32, #tpu.memory_space<vmem>>, vector<4x512xf32>
    %c12_59 = arith.constant 12 : index
    %c512_60 = arith.constant 512 : index
    %182 = vector.load %arg10[%c12_59, %c512_60] : memref<32x1024xf32, #tpu.memory_space<vmem>>, vector<4x512xf32>
    %cst_61 = arith.constant dense<0.000000e+00> : vector<4x512xf32>
    %183 = tpu.matmul %171, %7, %cst_61 {dimension_numbers = #tpu.dot_dimension_numbers<[1], [0], [0], [1], [0, 0, 1, 1], [], []>} : vector<4x128xf32>, vector<128x512xf32>, vector<4x512xf32> -> vector<4x512xf32>
    %184 = arith.addf %181, %183 : vector<4x512xf32>
    %cst_62 = arith.constant dense<0.000000e+00> : vector<4x512xf32>
    %185 = tpu.matmul %174, %8, %cst_62 {dimension_numbers = #tpu.dot_dimension_numbers<[1], [0], [0], [1], [0, 0, 1, 1], [], []>} : vector<4x128xf32>, vector<128x512xf32>, vector<4x512xf32> -> vector<4x512xf32>
    %186 = arith.addf %182, %185 : vector<4x512xf32>
    %187 = arith.negf %184 : vector<4x512xf32>
    %188 = math.exp %187 : vector<4x512xf32>
    %cst_63 = arith.constant 1.000000e+00 : f32
    %189 = vector.broadcast %cst_63 : f32 to vector<4x512xf32>
    %190 = arith.addf %189, %188 : vector<4x512xf32>
    %191 = arith.divf %189, %190 : vector<4x512xf32>
    %192 = arith.negf %186 : vector<4x512xf32>
    %193 = math.exp %192 : vector<4x512xf32>
    %cst_64 = arith.constant 1.000000e+00 : f32
    %194 = vector.broadcast %cst_64 : f32 to vector<4x512xf32>
    %195 = arith.addf %194, %193 : vector<4x512xf32>
    %196 = arith.divf %194, %195 : vector<4x512xf32>
    %197 = vector.extract_strided_slice %184 {offsets = [0, 256], sizes = [4, 128], strides = [1, 1]} : vector<4x512xf32> to vector<4x128xf32>
    %198 = math.tanh %197 : vector<4x128xf32>
    %199 = vector.extract_strided_slice %186 {offsets = [0, 256], sizes = [4, 128], strides = [1, 1]} : vector<4x512xf32> to vector<4x128xf32>
    %200 = math.tanh %199 : vector<4x128xf32>
    %201 = vector.extract_strided_slice %191 {offsets = [0, 128], sizes = [4, 128], strides = [1, 1]} : vector<4x512xf32> to vector<4x128xf32>
    %202 = arith.mulf %201, %163 : vector<4x128xf32>
    %203 = vector.extract_strided_slice %191 {offsets = [0, 0], sizes = [4, 128], strides = [1, 1]} : vector<4x512xf32> to vector<4x128xf32>
    %204 = arith.mulf %203, %198 : vector<4x128xf32>
    %205 = arith.addf %202, %204 : vector<4x128xf32>
    %206 = vector.extract_strided_slice %196 {offsets = [0, 128], sizes = [4, 128], strides = [1, 1]} : vector<4x512xf32> to vector<4x128xf32>
    %207 = arith.mulf %206, %168 : vector<4x128xf32>
    %208 = vector.extract_strided_slice %196 {offsets = [0, 0], sizes = [4, 128], strides = [1, 1]} : vector<4x512xf32> to vector<4x128xf32>
    %209 = arith.mulf %208, %200 : vector<4x128xf32>
    %210 = arith.addf %207, %209 : vector<4x128xf32>
    %211 = vector.extract_strided_slice %191 {offsets = [0, 384], sizes = [4, 128], strides = [1, 1]} : vector<4x512xf32> to vector<4x128xf32>
    %212 = math.tanh %205 : vector<4x128xf32>
    %213 = arith.mulf %211, %212 : vector<4x128xf32>
    %214 = vector.extract_strided_slice %196 {offsets = [0, 384], sizes = [4, 128], strides = [1, 1]} : vector<4x512xf32> to vector<4x128xf32>
    %215 = math.tanh %210 : vector<4x128xf32>
    %216 = arith.mulf %214, %215 : vector<4x128xf32>
    %c4_65 = arith.constant 4 : index
    %c0_66 = arith.constant 0 : index
    %c0_67 = arith.constant 0 : index
    %217 = vector.load %arg11[%c4_65, %c0_66, %c0_67] : memref<8x4x128xf32, #tpu.memory_space<vmem>>, vector<1x4x128xf32>
    %218 = vector.shape_cast %217 : vector<1x4x128xf32> to vector<4x128xf32>
    %219 = vector.shape_cast %213 : vector<4x128xf32> to vector<1x4x128xf32>
    tpu.vector_store %arg11[%c4_65, %c0_66, %c0_67], %219 {strides = array<i32>} : memref<8x4x128xf32, #tpu.memory_space<vmem>>, vector<1x4x128xf32>,
    %c3_68 = arith.constant 3 : index
    %c0_69 = arith.constant 0 : index
    %c0_70 = arith.constant 0 : index
    %220 = vector.load %arg12[%c3_68, %c0_69, %c0_70] : memref<8x4x128xf32, #tpu.memory_space<vmem>>, vector<1x4x128xf32>
    %221 = vector.shape_cast %220 : vector<1x4x128xf32> to vector<4x128xf32>
    %222 = vector.shape_cast %216 : vector<4x128xf32> to vector<1x4x128xf32>
    tpu.vector_store %arg12[%c3_68, %c0_69, %c0_70], %222 {strides = array<i32>} : memref<8x4x128xf32, #tpu.memory_space<vmem>>, vector<1x4x128xf32>,
    %c20_71 = arith.constant 20 : index
    %c0_72 = arith.constant 0 : index
    %223 = vector.load %arg10[%c20_71, %c0_72] : memref<32x1024xf32, #tpu.memory_space<vmem>>, vector<4x512xf32>
    %c8_73 = arith.constant 8 : index
    %c512_74 = arith.constant 512 : index
    %224 = vector.load %arg10[%c8_73, %c512_74] : memref<32x1024xf32, #tpu.memory_space<vmem>>, vector<4x512xf32>
    %cst_75 = arith.constant dense<0.000000e+00> : vector<4x512xf32>
    %225 = tpu.matmul %213, %7, %cst_75 {dimension_numbers = #tpu.dot_dimension_numbers<[1], [0], [0], [1], [0, 0, 1, 1], [], []>} : vector<4x128xf32>, vector<128x512xf32>, vector<4x512xf32> -> vector<4x512xf32>
    %226 = arith.addf %223, %225 : vector<4x512xf32>
    %cst_76 = arith.constant dense<0.000000e+00> : vector<4x512xf32>
    %227 = tpu.matmul %216, %8, %cst_76 {dimension_numbers = #tpu.dot_dimension_numbers<[1], [0], [0], [1], [0, 0, 1, 1], [], []>} : vector<4x128xf32>, vector<128x512xf32>, vector<4x512xf32> -> vector<4x512xf32>
    %228 = arith.addf %224, %227 : vector<4x512xf32>
    %229 = arith.negf %226 : vector<4x512xf32>
    %230 = math.exp %229 : vector<4x512xf32>
    %cst_77 = arith.constant 1.000000e+00 : f32
    %231 = vector.broadcast %cst_77 : f32 to vector<4x512xf32>
    %232 = arith.addf %231, %230 : vector<4x512xf32>
    %233 = arith.divf %231, %232 : vector<4x512xf32>
    %234 = arith.negf %228 : vector<4x512xf32>
    %235 = math.exp %234 : vector<4x512xf32>
    %cst_78 = arith.constant 1.000000e+00 : f32
    %236 = vector.broadcast %cst_78 : f32 to vector<4x512xf32>
    %237 = arith.addf %236, %235 : vector<4x512xf32>
    %238 = arith.divf %236, %237 : vector<4x512xf32>
    %239 = vector.extract_strided_slice %226 {offsets = [0, 256], sizes = [4, 128], strides = [1, 1]} : vector<4x512xf32> to vector<4x128xf32>
    %240 = math.tanh %239 : vector<4x128xf32>
    %241 = vector.extract_strided_slice %228 {offsets = [0, 256], sizes = [4, 128], strides = [1, 1]} : vector<4x512xf32> to vector<4x128xf32>
    %242 = math.tanh %241 : vector<4x128xf32>
    %243 = vector.extract_strided_slice %233 {offsets = [0, 128], sizes = [4, 128], strides = [1, 1]} : vector<4x512xf32> to vector<4x128xf32>
    %244 = arith.mulf %243, %205 : vector<4x128xf32>
    %245 = vector.extract_strided_slice %233 {offsets = [0, 0], sizes = [4, 128], strides = [1, 1]} : vector<4x512xf32> to vector<4x128xf32>
    %246 = arith.mulf %245, %240 : vector<4x128xf32>
    %247 = arith.addf %244, %246 : vector<4x128xf32>
    %248 = vector.extract_strided_slice %238 {offsets = [0, 128], sizes = [4, 128], strides = [1, 1]} : vector<4x512xf32> to vector<4x128xf32>
    %249 = arith.mulf %248, %210 : vector<4x128xf32>
    %250 = vector.extract_strided_slice %238 {offsets = [0, 0], sizes = [4, 128], strides = [1, 1]} : vector<4x512xf32> to vector<4x128xf32>
    %251 = arith.mulf %250, %242 : vector<4x128xf32>
    %252 = arith.addf %249, %251 : vector<4x128xf32>
    %253 = vector.extract_strided_slice %233 {offsets = [0, 384], sizes = [4, 128], strides = [1, 1]} : vector<4x512xf32> to vector<4x128xf32>
    %254 = math.tanh %247 : vector<4x128xf32>
    %255 = arith.mulf %253, %254 : vector<4x128xf32>
    %256 = vector.extract_strided_slice %238 {offsets = [0, 384], sizes = [4, 128], strides = [1, 1]} : vector<4x512xf32> to vector<4x128xf32>
    %257 = math.tanh %252 : vector<4x128xf32>
    %258 = arith.mulf %256, %257 : vector<4x128xf32>
    %c5_79 = arith.constant 5 : index
    %c0_80 = arith.constant 0 : index
    %c0_81 = arith.constant 0 : index
    %259 = vector.load %arg11[%c5_79, %c0_80, %c0_81] : memref<8x4x128xf32, #tpu.memory_space<vmem>>, vector<1x4x128xf32>
    %260 = vector.shape_cast %259 : vector<1x4x128xf32> to vector<4x128xf32>
    %261 = vector.shape_cast %255 : vector<4x128xf32> to vector<1x4x128xf32>
    tpu.vector_store %arg11[%c5_79, %c0_80, %c0_81], %261 {strides = array<i32>} : memref<8x4x128xf32, #tpu.memory_space<vmem>>, vector<1x4x128xf32>,
    %c2_82 = arith.constant 2 : index
    %c0_83 = arith.constant 0 : index
    %c0_84 = arith.constant 0 : index
    %262 = vector.load %arg12[%c2_82, %c0_83, %c0_84] : memref<8x4x128xf32, #tpu.memory_space<vmem>>, vector<1x4x128xf32>
    %263 = vector.shape_cast %262 : vector<1x4x128xf32> to vector<4x128xf32>
    %264 = vector.shape_cast %258 : vector<4x128xf32> to vector<1x4x128xf32>
    tpu.vector_store %arg12[%c2_82, %c0_83, %c0_84], %264 {strides = array<i32>} : memref<8x4x128xf32, #tpu.memory_space<vmem>>, vector<1x4x128xf32>,
    %c24_85 = arith.constant 24 : index
    %c0_86 = arith.constant 0 : index
    %265 = vector.load %arg10[%c24_85, %c0_86] : memref<32x1024xf32, #tpu.memory_space<vmem>>, vector<4x512xf32>
    %c4_87 = arith.constant 4 : index
    %c512_88 = arith.constant 512 : index
    %266 = vector.load %arg10[%c4_87, %c512_88] : memref<32x1024xf32, #tpu.memory_space<vmem>>, vector<4x512xf32>
    %cst_89 = arith.constant dense<0.000000e+00> : vector<4x512xf32>
    %267 = tpu.matmul %255, %7, %cst_89 {dimension_numbers = #tpu.dot_dimension_numbers<[1], [0], [0], [1], [0, 0, 1, 1], [], []>} : vector<4x128xf32>, vector<128x512xf32>, vector<4x512xf32> -> vector<4x512xf32>
    %268 = arith.addf %265, %267 : vector<4x512xf32>
    %cst_90 = arith.constant dense<0.000000e+00> : vector<4x512xf32>
    %269 = tpu.matmul %258, %8, %cst_90 {dimension_numbers = #tpu.dot_dimension_numbers<[1], [0], [0], [1], [0, 0, 1, 1], [], []>} : vector<4x128xf32>, vector<128x512xf32>, vector<4x512xf32> -> vector<4x512xf32>
    %270 = arith.addf %266, %269 : vector<4x512xf32>
    %271 = arith.negf %268 : vector<4x512xf32>
    %272 = math.exp %271 : vector<4x512xf32>
    %cst_91 = arith.constant 1.000000e+00 : f32
    %273 = vector.broadcast %cst_91 : f32 to vector<4x512xf32>
    %274 = arith.addf %273, %272 : vector<4x512xf32>
    %275 = arith.divf %273, %274 : vector<4x512xf32>
    %276 = arith.negf %270 : vector<4x512xf32>
    %277 = math.exp %276 : vector<4x512xf32>
    %cst_92 = arith.constant 1.000000e+00 : f32
    %278 = vector.broadcast %cst_92 : f32 to vector<4x512xf32>
    %279 = arith.addf %278, %277 : vector<4x512xf32>
    %280 = arith.divf %278, %279 : vector<4x512xf32>
    %281 = vector.extract_strided_slice %268 {offsets = [0, 256], sizes = [4, 128], strides = [1, 1]} : vector<4x512xf32> to vector<4x128xf32>
    %282 = math.tanh %281 : vector<4x128xf32>
    %283 = vector.extract_strided_slice %270 {offsets = [0, 256], sizes = [4, 128], strides = [1, 1]} : vector<4x512xf32> to vector<4x128xf32>
    %284 = math.tanh %283 : vector<4x128xf32>
    %285 = vector.extract_strided_slice %275 {offsets = [0, 128], sizes = [4, 128], strides = [1, 1]} : vector<4x512xf32> to vector<4x128xf32>
    %286 = arith.mulf %285, %247 : vector<4x128xf32>
    %287 = vector.extract_strided_slice %275 {offsets = [0, 0], sizes = [4, 128], strides = [1, 1]} : vector<4x512xf32> to vector<4x128xf32>
    %288 = arith.mulf %287, %282 : vector<4x128xf32>
    %289 = arith.addf %286, %288 : vector<4x128xf32>
    %290 = vector.extract_strided_slice %280 {offsets = [0, 128], sizes = [4, 128], strides = [1, 1]} : vector<4x512xf32> to vector<4x128xf32>
    %291 = arith.mulf %290, %252 : vector<4x128xf32>
    %292 = vector.extract_strided_slice %280 {offsets = [0, 0], sizes = [4, 128], strides = [1, 1]} : vector<4x512xf32> to vector<4x128xf32>
    %293 = arith.mulf %292, %284 : vector<4x128xf32>
    %294 = arith.addf %291, %293 : vector<4x128xf32>
    %295 = vector.extract_strided_slice %275 {offsets = [0, 384], sizes = [4, 128], strides = [1, 1]} : vector<4x512xf32> to vector<4x128xf32>
    %296 = math.tanh %289 : vector<4x128xf32>
    %297 = arith.mulf %295, %296 : vector<4x128xf32>
    %298 = vector.extract_strided_slice %280 {offsets = [0, 384], sizes = [4, 128], strides = [1, 1]} : vector<4x512xf32> to vector<4x128xf32>
    %299 = math.tanh %294 : vector<4x128xf32>
    %300 = arith.mulf %298, %299 : vector<4x128xf32>
    %c6_93 = arith.constant 6 : index
    %c0_94 = arith.constant 0 : index
    %c0_95 = arith.constant 0 : index
    %301 = vector.load %arg11[%c6_93, %c0_94, %c0_95] : memref<8x4x128xf32, #tpu.memory_space<vmem>>, vector<1x4x128xf32>
    %302 = vector.shape_cast %301 : vector<1x4x128xf32> to vector<4x128xf32>
    %303 = vector.shape_cast %297 : vector<4x128xf32> to vector<1x4x128xf32>
    tpu.vector_store %arg11[%c6_93, %c0_94, %c0_95], %303 {strides = array<i32>} : memref<8x4x128xf32, #tpu.memory_space<vmem>>, vector<1x4x128xf32>,
    %c1_96 = arith.constant 1 : index
    %c0_97 = arith.constant 0 : index
    %c0_98 = arith.constant 0 : index
    %304 = vector.load %arg12[%c1_96, %c0_97, %c0_98] : memref<8x4x128xf32, #tpu.memory_space<vmem>>, vector<1x4x128xf32>
    %305 = vector.shape_cast %304 : vector<1x4x128xf32> to vector<4x128xf32>
    %306 = vector.shape_cast %300 : vector<4x128xf32> to vector<1x4x128xf32>
    tpu.vector_store %arg12[%c1_96, %c0_97, %c0_98], %306 {strides = array<i32>} : memref<8x4x128xf32, #tpu.memory_space<vmem>>, vector<1x4x128xf32>,
    %c28_99 = arith.constant 28 : index
    %c0_100 = arith.constant 0 : index
    %307 = vector.load %arg10[%c28_99, %c0_100] : memref<32x1024xf32, #tpu.memory_space<vmem>>, vector<4x512xf32>
    %c0_101 = arith.constant 0 : index
    %c512_102 = arith.constant 512 : index
    %308 = vector.load %arg10[%c0_101, %c512_102] : memref<32x1024xf32, #tpu.memory_space<vmem>>, vector<4x512xf32>
    %cst_103 = arith.constant dense<0.000000e+00> : vector<4x512xf32>
    %309 = tpu.matmul %297, %7, %cst_103 {dimension_numbers = #tpu.dot_dimension_numbers<[1], [0], [0], [1], [0, 0, 1, 1], [], []>} : vector<4x128xf32>, vector<128x512xf32>, vector<4x512xf32> -> vector<4x512xf32>
    %310 = arith.addf %307, %309 : vector<4x512xf32>
    %cst_104 = arith.constant dense<0.000000e+00> : vector<4x512xf32>
    %311 = tpu.matmul %300, %8, %cst_104 {dimension_numbers = #tpu.dot_dimension_numbers<[1], [0], [0], [1], [0, 0, 1, 1], [], []>} : vector<4x128xf32>, vector<128x512xf32>, vector<4x512xf32> -> vector<4x512xf32>
    %312 = arith.addf %308, %311 : vector<4x512xf32>
    %313 = arith.negf %310 : vector<4x512xf32>
    %314 = math.exp %313 : vector<4x512xf32>
    %cst_105 = arith.constant 1.000000e+00 : f32
    %315 = vector.broadcast %cst_105 : f32 to vector<4x512xf32>
    %316 = arith.addf %315, %314 : vector<4x512xf32>
    %317 = arith.divf %315, %316 : vector<4x512xf32>
    %318 = arith.negf %312 : vector<4x512xf32>
    %319 = math.exp %318 : vector<4x512xf32>
    %cst_106 = arith.constant 1.000000e+00 : f32
    %320 = vector.broadcast %cst_106 : f32 to vector<4x512xf32>
    %321 = arith.addf %320, %319 : vector<4x512xf32>
    %322 = arith.divf %320, %321 : vector<4x512xf32>
    %323 = vector.extract_strided_slice %310 {offsets = [0, 256], sizes = [4, 128], strides = [1, 1]} : vector<4x512xf32> to vector<4x128xf32>
    %324 = math.tanh %323 : vector<4x128xf32>
    %325 = vector.extract_strided_slice %312 {offsets = [0, 256], sizes = [4, 128], strides = [1, 1]} : vector<4x512xf32> to vector<4x128xf32>
    %326 = math.tanh %325 : vector<4x128xf32>
    %327 = vector.extract_strided_slice %317 {offsets = [0, 128], sizes = [4, 128], strides = [1, 1]} : vector<4x512xf32> to vector<4x128xf32>
    %328 = arith.mulf %327, %289 : vector<4x128xf32>
    %329 = vector.extract_strided_slice %317 {offsets = [0, 0], sizes = [4, 128], strides = [1, 1]} : vector<4x512xf32> to vector<4x128xf32>
    %330 = arith.mulf %329, %324 : vector<4x128xf32>
    %331 = arith.addf %328, %330 : vector<4x128xf32>
    %332 = vector.extract_strided_slice %322 {offsets = [0, 128], sizes = [4, 128], strides = [1, 1]} : vector<4x512xf32> to vector<4x128xf32>
    %333 = arith.mulf %332, %294 : vector<4x128xf32>
    %334 = vector.extract_strided_slice %322 {offsets = [0, 0], sizes = [4, 128], strides = [1, 1]} : vector<4x512xf32> to vector<4x128xf32>
    %335 = arith.mulf %334, %326 : vector<4x128xf32>
    %336 = arith.addf %333, %335 : vector<4x128xf32>
    %337 = vector.extract_strided_slice %317 {offsets = [0, 384], sizes = [4, 128], strides = [1, 1]} : vector<4x512xf32> to vector<4x128xf32>
    %338 = math.tanh %331 : vector<4x128xf32>
    %339 = arith.mulf %337, %338 : vector<4x128xf32>
    %340 = vector.extract_strided_slice %322 {offsets = [0, 384], sizes = [4, 128], strides = [1, 1]} : vector<4x512xf32> to vector<4x128xf32>
    %341 = math.tanh %336 : vector<4x128xf32>
    %342 = arith.mulf %340, %341 : vector<4x128xf32>
    %c7_107 = arith.constant 7 : index
    %c0_108 = arith.constant 0 : index
    %c0_109 = arith.constant 0 : index
    %343 = vector.load %arg11[%c7_107, %c0_108, %c0_109] : memref<8x4x128xf32, #tpu.memory_space<vmem>>, vector<1x4x128xf32>
    %344 = vector.shape_cast %343 : vector<1x4x128xf32> to vector<4x128xf32>
    %345 = vector.shape_cast %339 : vector<4x128xf32> to vector<1x4x128xf32>
    tpu.vector_store %arg11[%c7_107, %c0_108, %c0_109], %345 {strides = array<i32>} : memref<8x4x128xf32, #tpu.memory_space<vmem>>, vector<1x4x128xf32>,
    %c0_110 = arith.constant 0 : index
    %c0_111 = arith.constant 0 : index
    %c0_112 = arith.constant 0 : index
    %346 = vector.load %arg12[%c0_110, %c0_111, %c0_112] : memref<8x4x128xf32, #tpu.memory_space<vmem>>, vector<1x4x128xf32>
    %347 = vector.shape_cast %346 : vector<1x4x128xf32> to vector<4x128xf32>
    %348 = vector.shape_cast %342 : vector<4x128xf32> to vector<1x4x128xf32>
    tpu.vector_store %arg12[%c0_110, %c0_111, %c0_112], %348 {strides = array<i32>} : memref<8x4x128xf32, #tpu.memory_space<vmem>>, vector<1x4x128xf32>,
    %c0_113 = arith.constant 0 : index
    %c0_114 = arith.constant 0 : index
    %c0_115 = arith.constant 0 : index
    %349 = vector.load %arg11[%c0_113, %c0_114, %c0_115] : memref<8x4x128xf32, #tpu.memory_space<vmem>>, vector<8x4x128xf32>
    %c0_116 = arith.constant 0 : index
    %c0_117 = arith.constant 0 : index
    %c0_118 = arith.constant 0 : index
    %350 = vector.load %arg12[%c0_116, %c0_117, %c0_118] : memref<8x4x128xf32, #tpu.memory_space<vmem>>, vector<8x4x128xf32>
    %c0_119 = arith.constant 0 : index
    %c0_120 = arith.constant 0 : index
    %351 = vector.load %arg6[%c0_119, %c0_120] : memref<1x256xf32, #tpu.memory_space<vmem>>, vector<1x256xf32>
    %352 = vector.extract_strided_slice %351 {offsets = [0, 0], sizes = [1, 128], strides = [1, 1]} : vector<1x256xf32> to vector<1x128xf32>
    %353 = vector.shape_cast %352 : vector<1x128xf32> to vector<1x1x128xf32>
    %354 = vector.extract_strided_slice %351 {offsets = [0, 128], sizes = [1, 128], strides = [1, 1]} : vector<1x256xf32> to vector<1x128xf32>
    %355 = vector.shape_cast %354 : vector<1x128xf32> to vector<1x1x128xf32>
    %356 = vector.broadcast %353 : vector<1x1x128xf32> to vector<8x4x128xf32>
    %357 = arith.mulf %349, %356 : vector<8x4x128xf32>
    %cst_121 = arith.constant dense<0.000000e+00> : vector<8x4xf32>
    %358 = vector.multi_reduction <add>, %357, %cst_121 [2] : vector<8x4x128xf32> to vector<8x4xf32>
    %359 = vector.shape_cast %358 : vector<8x4xf32> to vector<8x4x1xf32>
    %360 = vector.broadcast %355 : vector<1x1x128xf32> to vector<8x4x128xf32>
    %361 = arith.mulf %350, %360 : vector<8x4x128xf32>
    %cst_122 = arith.constant dense<0.000000e+00> : vector<8x4xf32>
    %362 = vector.multi_reduction <add>, %361, %cst_122 [2] : vector<8x4x128xf32> to vector<8x4xf32>
    %363 = vector.shape_cast %362 : vector<8x4xf32> to vector<8x4x1xf32>
    %364 = arith.addf %359, %363 : vector<8x4x1xf32>
    %cst_123 = arith.constant dense<0xFF800000> : vector<4x1xf32>
    %365 = vector.multi_reduction <maximumf>, %364, %cst_123 [0] : vector<8x4x1xf32> to vector<4x1xf32>
    %366 = vector.shape_cast %365 : vector<4x1xf32> to vector<1x4x1xf32>
    %367 = vector.broadcast %366 : vector<1x4x1xf32> to vector<8x4x1xf32>
    %368 = arith.subf %364, %367 : vector<8x4x1xf32>
    %369 = math.exp %368 : vector<8x4x1xf32>
    %cst_124 = arith.constant dense<0.000000e+00> : vector<4x1xf32>
    %370 = vector.multi_reduction <add>, %369, %cst_124 [0] : vector<8x4x1xf32> to vector<4x1xf32>
    %371 = vector.shape_cast %370 : vector<4x1xf32> to vector<1x4x1xf32>
    %372 = vector.broadcast %371 : vector<1x4x1xf32> to vector<8x4x1xf32>
    %373 = arith.divf %369, %372 : vector<8x4x1xf32>
    %374 = vector.broadcast %373 : vector<8x4x1xf32> to vector<8x4x128xf32>
    %375 = arith.mulf %374, %349 : vector<8x4x128xf32>
    %cst_125 = arith.constant dense<0.000000e+00> : vector<4x128xf32>
    %376 = vector.multi_reduction <add>, %375, %cst_125 [0] : vector<8x4x128xf32> to vector<4x128xf32>
    %377 = vector.broadcast %373 : vector<8x4x1xf32> to vector<8x4x128xf32>
    %378 = arith.mulf %377, %350 : vector<8x4x128xf32>
    %cst_126 = arith.constant dense<0.000000e+00> : vector<4x128xf32>
    %379 = vector.multi_reduction <add>, %378, %cst_126 [0] : vector<8x4x128xf32> to vector<4x128xf32>
    %cst_127 = arith.constant dense<0.000000e+00> : vector<128xf32>
    %380 = vector.multi_reduction <add>, %376, %cst_127 [0] : vector<4x128xf32> to vector<128xf32>
    %381 = vector.shape_cast %380 : vector<128xf32> to vector<1x128xf32>
    %cst_128 = arith.constant 2.500000e-01 : f32
    %382 = vector.broadcast %cst_128 : f32 to vector<1x128xf32>
    %383 = arith.mulf %381, %382 : vector<1x128xf32>
    %cst_129 = arith.constant dense<0.000000e+00> : vector<128xf32>
    %384 = vector.multi_reduction <add>, %379, %cst_129 [0] : vector<4x128xf32> to vector<128xf32>
    %385 = vector.shape_cast %384 : vector<128xf32> to vector<1x128xf32>
    %cst_130 = arith.constant 2.500000e-01 : f32
    %386 = vector.broadcast %cst_130 : f32 to vector<1x128xf32>
    %387 = arith.mulf %385, %386 : vector<1x128xf32>
    %c0_131 = arith.constant 0 : index
    %c0_132 = arith.constant 0 : index
    %388 = vector.load %arg7[%c0_131, %c0_132] : memref<256x64xf32, #tpu.memory_space<vmem>>, vector<256x64xf32>
    %389 = vector.extract_strided_slice %388 {offsets = [0, 0], sizes = [128, 64], strides = [1, 1]} : vector<256x64xf32> to vector<128x64xf32>
    %cst_133 = arith.constant dense<0.000000e+00> : vector<1x64xf32>
    %390 = tpu.matmul %383, %389, %cst_133 {dimension_numbers = #tpu.dot_dimension_numbers<[1], [0], [0], [1], [0, 0, 1, 1], [], []>} : vector<1x128xf32>, vector<128x64xf32>, vector<1x64xf32> -> vector<1x64xf32>
    %391 = vector.extract_strided_slice %388 {offsets = [128, 0], sizes = [128, 64], strides = [1, 1]} : vector<256x64xf32> to vector<128x64xf32>
    %cst_134 = arith.constant dense<0.000000e+00> : vector<1x64xf32>
    %392 = tpu.matmul %387, %391, %cst_134 {dimension_numbers = #tpu.dot_dimension_numbers<[1], [0], [0], [1], [0, 0, 1, 1], [], []>} : vector<1x128xf32>, vector<128x64xf32>, vector<1x64xf32> -> vector<1x64xf32>
    %393 = arith.addf %390, %392 : vector<1x64xf32>
    %c0_135 = arith.constant 0 : index
    %c0_136 = arith.constant 0 : index
    %394 = vector.load %arg8[%c0_135, %c0_136] : memref<1x64xf32, #tpu.memory_space<vmem>>, vector<1x64xf32>
    %395 = arith.addf %393, %394 : vector<1x64xf32>
    %c0_137 = arith.constant 0 : index
    %c0_138 = arith.constant 0 : index
    %396 = vector.load %arg9[%c0_137, %c0_138] : memref<1x64xf32, #tpu.memory_space<vmem>>, vector<1x64xf32>
    tpu.vector_store %arg9[%c0_137, %c0_138], %395 {strides = array<i32>} : memref<1x64xf32, #tpu.memory_space<vmem>>, vector<1x64xf32>,
    return
  }
  func.func @transform_0(%arg0: i32) -> (i32, i32) {
    %c0_i32 = arith.constant 0 : i32
    %c0_i32_0 = arith.constant 0 : i32
    %c0_i32_1 = arith.constant 0 : i32
    return %c0_i32, %c0_i32_0 : i32, i32
  }
  func.func @transform_1(%arg0: i32) -> (i32, i32) {
    %c0_i32 = arith.constant 0 : i32
    %c0_i32_0 = arith.constant 0 : i32
    %c0_i32_1 = arith.constant 0 : i32
    return %c0_i32, %c0_i32_0 : i32, i32
  }
  func.func @transform_2(%arg0: i32) -> (i32, i32) {
    %c0_i32 = arith.constant 0 : i32
    %c0_i32_0 = arith.constant 0 : i32
    %c0_i32_1 = arith.constant 0 : i32
    return %c0_i32, %c0_i32_0 : i32, i32
  }
  func.func @transform_3(%arg0: i32) -> (i32, i32) {
    %c0_i32 = arith.constant 0 : i32
    %c0_i32_0 = arith.constant 0 : i32
    %c0_i32_1 = arith.constant 0 : i32
    return %c0_i32, %c0_i32_0 : i32, i32
  }
  func.func @transform_4(%arg0: i32) -> (i32, i32) {
    %c0_i32 = arith.constant 0 : i32
    %c0_i32_0 = arith.constant 0 : i32
    %c0_i32_1 = arith.constant 0 : i32
    return %c0_i32, %c0_i32_0 : i32, i32
  }
  func.func @transform_5(%arg0: i32) -> (i32, i32) {
    %c0_i32 = arith.constant 0 : i32
    %c0_i32_0 = arith.constant 0 : i32
    %c0_i32_1 = arith.constant 0 : i32
    return %c0_i32, %c0_i32_0 : i32, i32
  }
  func.func @transform_6(%arg0: i32) -> (i32, i32) {
    %c0_i32 = arith.constant 0 : i32
    %c0_i32_0 = arith.constant 0 : i32
    %c0_i32_1 = arith.constant 0 : i32
    return %c0_i32, %c0_i32_0 : i32, i32
  }
  func.func @transform_7(%arg0: i32) -> (i32, i32) {
    %c0_i32 = arith.constant 0 : i32
    %c0_i32_0 = arith.constant 0 : i32
    %c0_i32_1 = arith.constant 0 : i32
    return %c0_i32, %c0_i32_0 : i32, i32
  }
  func.func @transform_8(%arg0: i32) -> (i32, i32) {
    %c0_i32 = arith.constant 0 : i32
    %c0_i32_0 = arith.constant 0 : i32
    %c0_i32_1 = arith.constant 0 : i32
    return %c0_i32, %c0_i32_0 : i32, i32
  }
}

</mosaic_0001>

<llo_original>
// kernel: tpu_custom_call.1
$region0: #{tpu_custom_call.1}
  #allocation0 [shape = 'u32[]', space=smem, size = 0x4, offset = 0x4, fixed_abs, tag = 'smem constant byte address 0x4 - core index']
  #allocation1 [shape = 'u32[144,128]{1,0:T(1,128)}', space=vmem, size = 0x12000, scoped, tag = 'internal scratch']
  #allocation2 [shape = 'f32[32,1024]{1,0:T(8,128)}', space=vmem, size = 0x20000, scoped, tag = 'scratch operand']
  #allocation3 [shape = 'f32[8,4,128]{2,1,0:T(4,128)}', space=vmem, size = 0x4000, scoped, tag = 'scratch operand']
  #allocation4 [shape = 'f32[8,4,128]{2,1,0:T(4,128)}', space=vmem, size = 0x4000, scoped, tag = 'scratch operand']
  %s0 = inlined_call_operand.vmem [shape: f32[32,128], index: 0, kind: input, shape index: {}]
  %s1 = inlined_call_operand.hbm [shape: f32[128,1024], index: 1, kind: input, shape index: {}]
  %s2 = inlined_call_operand.vmem [shape: f32[1,1024], index: 2, kind: input, shape index: {}]
  %s3 = inlined_call_operand.hbm [shape: f32[128,512], index: 3, kind: input, shape index: {}]
  %s4 = inlined_call_operand.hbm [shape: f32[128,512], index: 4, kind: input, shape index: {}]
  %s5 = inlined_call_operand.vmem [shape: f32[1,256], index: 5, kind: input, shape index: {}]
  %s6 = inlined_call_operand.vmem [shape: f32[256,64], index: 6, kind: input, shape index: {}]
  %s7 = inlined_call_operand.vmem [shape: f32[1,64], index: 7, kind: input, shape index: {}]
  %s8 = inlined_call_operand.hbm [shape: f32[1,64], index: 8, kind: output, shape index: {}]
  %s9 = sld [smem:[#allocation0]]
  $region54: #{tpu_custom_call.1} parent=0
    _
  %s11 = ssub.s32 1, %s9
  %s12 = scalar_select 0, %s11, %s9
  $region1: #{tpu_custom_call.1} parent=0
    #allocation5 [shape = 'u8[524288]{0}', space=vmem, size = 0x80000, scoped, tag = 'input window, operand 1, single buffered']
    #allocation6 [shape = 's32[1]{0}', space=sflag, size = 0x4, scoped, tag = 'scoped memory for tpu_custom_call.1']
    #allocation7 [shape = 's32[1]{0}', space=sflag, size = 0x4, scoped, tag = 'scoped memory for tpu_custom_call.1']
    #allocation8 [shape = 'u8[262144]{0}', space=vmem, size = 0x40000, scoped, tag = 'input window, operand 3, single buffered']
    #allocation9 [shape = 's32[1]{0}', space=sflag, size = 0x4, scoped, tag = 'scoped memory for tpu_custom_call.1']
    #allocation10 [shape = 'u8[262144]{0}', space=vmem, size = 0x40000, scoped, tag = 'input window, operand 4, single buffered']
    #allocation11 [shape = 'u8[512]{0}', space=vmem, size = 0x400, scoped, tag = 'output window, operand 0, single buffered']
    %13 = vsyncpa [#allocation6], 0
    %14 = vsyncpa [#allocation9], 0
    %15 = vsyncpa [#allocation7], 0
    // Predicated region
    $region2: #{tpu_custom_call.1} parent=1 // pred_check
      _
    $region3: #{tpu_custom_call.1} parent=1 // pred_check_branch
      %17 = sbr.rel (0) target = $region5
    $region4: #{tpu_custom_call.1} parent=1 // pred_region
      _
    $region5: #{tpu_custom_call.1} parent=1 // pred_fallthru
      _
    // Predicated region
    $region6: #{tpu_custom_call.1} parent=1 // pred_check
      _
    $region7: #{tpu_custom_call.1} parent=1 // pred_check_branch
      %19 = sbr.rel (0) target = $region9
    $region8: #{tpu_custom_call.1} parent=1 // pred_region
      %s21 = ssub.s32 16384, 16384
      %22 = vsyncadd [#allocation6], %s21
      %s23 = sshll.u32 [#allocation5], 4
      %s24 = int_to_ptr.vmem [resolvable:$true] %s23
      %29 = dma.hbm_to_vmem [thread:$0]  %s1, 16384, %s24, [#allocation6], 1024, 1024, 64
    $region9: #{tpu_custom_call.1} parent=1 // pred_fallthru
      _
    // Predicated region
    $region10: #{tpu_custom_call.1} parent=1 // pred_check
      _
    $region11: #{tpu_custom_call.1} parent=1 // pred_check_branch
      %31 = sbr.rel (0) target = $region13
    $region12: #{tpu_custom_call.1} parent=1 // pred_region
      _
    $region13: #{tpu_custom_call.1} parent=1 // pred_fallthru
      _
    // Predicated region
    $region14: #{tpu_custom_call.1} parent=1 // pred_check
      _
    $region15: #{tpu_custom_call.1} parent=1 // pred_check_branch
      %33 = sbr.rel (0) target = $region17
    $region16: #{tpu_custom_call.1} parent=1 // pred_region
      %s35 = ssub.s32 8192, 8192
      %36 = vsyncadd [#allocation9], %s35
      %s37 = sshll.u32 [#allocation8], 4
      %s38 = int_to_ptr.vmem [resolvable:$true] %s37
      %43 = dma.hbm_to_vmem [thread:$0]  %s3, 8192, %s38, [#allocation9], 512, 512, 32
    $region17: #{tpu_custom_call.1} parent=1 // pred_fallthru
      _
    // Predicated region
    $region18: #{tpu_custom_call.1} parent=1 // pred_check
      _
    $region19: #{tpu_custom_call.1} parent=1 // pred_check_branch
      %45 = sbr.rel (0) target = $region21
    $region20: #{tpu_custom_call.1} parent=1 // pred_region
      %s47 = ssub.s32 8192, 8192
      %48 = vsyncadd [#allocation9], %s47
      %s49 = sshll.u32 [#allocation10], 4
      %s50 = int_to_ptr.vmem [resolvable:$true] %s49
      %55 = dma.hbm_to_vmem [thread:$0]  %s4, 8192, %s50, [#allocation9], 512, 512, 32
    $region21: #{tpu_custom_call.1} parent=1 // pred_fallthru
      _
    // Predicated region
    $region22: #{tpu_custom_call.1} parent=1 // pred_check
      _
    $region23: #{tpu_custom_call.1} parent=1 // pred_check_branch
      %57 = sbr.rel (0) target = $region25
    $region24: #{tpu_custom_call.1} parent=1 // pred_region
      _
    $region25: #{tpu_custom_call.1} parent=1 // pred_fallthru
      _
    // Predicated region
    $region26: #{tpu_custom_call.1} parent=1 // pred_check
      _
    $region27: #{tpu_custom_call.1} parent=1 // pred_check_branch
      %59 = sbr.rel (0) target = $region29
    $region28: #{tpu_custom_call.1} parent=1 // pred_region
      _
    $region29: #{tpu_custom_call.1} parent=1 // pred_fallthru
      _
    // Predicated region
    $region30: #{tpu_custom_call.1} parent=1 // pred_check
      _
    $region31: #{tpu_custom_call.1} parent=1 // pred_check_branch
      %61 = sbr.rel (0) target = $region33
    $region32: #{tpu_custom_call.1} parent=1 // pred_region
      _
    $region33: #{tpu_custom_call.1} parent=1 // pred_fallthru
      _
    // Predicated region
    $region34: #{tpu_custom_call.1} parent=1 // pred_check
      _
    $region35: #{tpu_custom_call.1} parent=1 // pred_check_branch
      %63 = sbr.rel (0) target = $region37
    $region36: #{tpu_custom_call.1} parent=1 // pred_region
      %64 = dma.done [#allocation6], 16384
    $region37: #{tpu_custom_call.1} parent=1 // pred_fallthru
      _
    // Predicated region
    $region38: #{tpu_custom_call.1} parent=1 // pred_check
      _
    $region39: #{tpu_custom_call.1} parent=1 // pred_check_branch
      %66 = sbr.rel (0) target = $region41
    $region40: #{tpu_custom_call.1} parent=1 // pred_region
      %67 = dma.done [#allocation9], 8192
    $region41: #{tpu_custom_call.1} parent=1 // pred_fallthru
      _
    // Predicated region
    $region42: #{tpu_custom_call.1} parent=1 // pred_check
      _
    $region43: #{tpu_custom_call.1} parent=1 // pred_check_branch
      %69 = sbr.rel (0) target = $region45
    $region44: #{tpu_custom_call.1} parent=1 // pred_region
      %70 = dma.done [#allocation9], 8192
    $region45: #{tpu_custom_call.1} parent=1 // pred_fallthru
      _
    %v71 = vld [vmem:[%s0] sm:$0xff]
    %v72 = vld [vmem:[%s0 + $0x8] sm:$0xff]
    %v73 = vld [vmem:[%s0 + $0x10] sm:$0xff]
    %v74 = vld [vmem:[%s0 + $0x18] sm:$0xff]
    %v75 = vld [vmem:[#allocation5] sm:$0xff]
    %v76 = vld [vmem:[#allocation5 + $0x8] sm:$0xff]
    %v77 = vld [vmem:[#allocation5 + $0x10] sm:$0xff]
    %v78 = vld [vmem:[#allocation5 + $0x18] sm:$0xff]
    %v79 = vld [vmem:[#allocation5 + $0x20] sm:$0xff]
    %v80 = vld [vmem:[#allocation5 + $0x28] sm:$0xff]
    %v81 = vld [vmem:[#allocation5 + $0x30] sm:$0xff]
    %v82 = vld [vmem:[#allocation5 + $0x38] sm:$0xff]
    %v83 = vld [vmem:[#allocation5 + $0x40] sm:$0xff]
    %v84 = vld [vmem:[#allocation5 + $0x48] sm:$0xff]
    %v85 = vld [vmem:[#allocation5 + $0x50] sm:$0xff]
    %v86 = vld [vmem:[#allocation5 + $0x58] sm:$0xff]
    %v87 = vld [vmem:[#allocation5 + $0x60] sm:$0xff]
    %v88 = vld [vmem:[#allocation5 + $0x68] sm:$0xff]
    %v89 = vld [vmem:[#allocation5 + $0x70] sm:$0xff]
    %v90 = vld [vmem:[#allocation5 + $0x78] sm:$0xff]
    %v91 = vld [vmem:[#allocation5 + $0x80] sm:$0xff]
    %v92 = vld [vmem:[#allocation5 + $0x88] sm:$0xff]
    %v93 = vld [vmem:[#allocation5 + $0x90] sm:$0xff]
    %v94 = vld [vmem:[#allocation5 + $0x98] sm:$0xff]
    %v95 = vld [vmem:[#allocation5 + $0xa0] sm:$0xff]
    %v96 = vld [vmem:[#allocation5 + $0xa8] sm:$0xff]
    %v97 = vld [vmem:[#allocation5 + $0xb0] sm:$0xff]
    %v98 = vld [vmem:[#allocation5 + $0xb8] sm:$0xff]
    %v99 = vld [vmem:[#allocation5 + $0xc0] sm:$0xff]
    %v100 = vld [vmem:[#allocation5 + $0xc8] sm:$0xff]
    %v101 = vld [vmem:[#allocation5 + $0xd0] sm:$0xff]
    %v102 = vld [vmem:[#allocation5 + $0xd8] sm:$0xff]
    %v103 = vld [vmem:[#allocation5 + $0xe0] sm:$0xff]
    %v104 = vld [vmem:[#allocation5 + $0xe8] sm:$0xff]
    %v105 = vld [vmem:[#allocation5 + $0xf0] sm:$0xff]
    %v106 = vld [vmem:[#allocation5 + $0xf8] sm:$0xff]
    %v107 = vld [vmem:[#allocation5 + $0x100] sm:$0xff]
    %v108 = vld [vmem:[#allocation5 + $0x108] sm:$0xff]
    %v109 = vld [vmem:[#allocation5 + $0x110] sm:$0xff]
    %v110 = vld [vmem:[#allocation5 + $0x118] sm:$0xff]
    %v111 = vld [vmem:[#allocation5 + $0x120] sm:$0xff]
    %v112 = vld [vmem:[#allocation5 + $0x128] sm:$0xff]
    %v113 = vld [vmem:[#allocation5 + $0x130] sm:$0xff]
    %v114 = vld [vmem:[#allocation5 + $0x138] sm:$0xff]
    %v115 = vld [vmem:[#allocation5 + $0x140] sm:$0xff]
    %v116 = vld [vmem:[#allocation5 + $0x148] sm:$0xff]
    %v117 = vld [vmem:[#allocation5 + $0x150] sm:$0xff]
    %v118 = vld [vmem:[#allocation5 + $0x158] sm:$0xff]
    %v119 = vld [vmem:[#allocation5 + $0x160] sm:$0xff]
    %v120 = vld [vmem:[#allocation5 + $0x168] sm:$0xff]
    %v121 = vld [vmem:[#allocation5 + $0x170] sm:$0xff]
    %v122 = vld [vmem:[#allocation5 + $0x178] sm:$0xff]
    %v123 = vld [vmem:[#allocation5 + $0x180] sm:$0xff]
    %v124 = vld [vmem:[#allocation5 + $0x188] sm:$0xff]
    %v125 = vld [vmem:[#allocation5 + $0x190] sm:$0xff]
    %v126 = vld [vmem:[#allocation5 + $0x198] sm:$0xff]
    %v127 = vld [vmem:[#allocation5 + $0x1a0] sm:$0xff]
    %v128 = vld [vmem:[#allocation5 + $0x1a8] sm:$0xff]
    %v129 = vld [vmem:[#allocation5 + $0x1b0] sm:$0xff]
    %v130 = vld [vmem:[#allocation5 + $0x1b8] sm:$0xff]
    %v131 = vld [vmem:[#allocation5 + $0x1c0] sm:$0xff]
    %v132 = vld [vmem:[#allocation5 + $0x1c8] sm:$0xff]
    %v133 = vld [vmem:[#allocation5 + $0x1d0] sm:$0xff]
    %v134 = vld [vmem:[#allocation5 + $0x1d8] sm:$0xff]
    %v135 = vld [vmem:[#allocation5 + $0x1e0] sm:$0xff]
    %v136 = vld [vmem:[#allocation5 + $0x1e8] sm:$0xff]
    %v137 = vld [vmem:[#allocation5 + $0x1f0] sm:$0xff]
    %v138 = vld [vmem:[#allocation5 + $0x1f8] sm:$0xff]
    %v139 = vld [vmem:[#allocation5 + $0x200] sm:$0xff]
    %v140 = vld [vmem:[#allocation5 + $0x208] sm:$0xff]
    %v141 = vld [vmem:[#allocation5 + $0x210] sm:$0xff]
    %v142 = vld [vmem:[#allocation5 + $0x218] sm:$0xff]
    %v143 = vld [vmem:[#allocation5 + $0x220] sm:$0xff]
    %v144 = vld [vmem:[#allocation5 + $0x228] sm:$0xff]
    %v145 = vld [vmem:[#allocation5 + $0x230] sm:$0xff]
    %v146 = vld [vmem:[#allocation5 + $0x238] sm:$0xff]
    %v147 = vld [vmem:[#allocation5 + $0x240] sm:$0xff]
    %v148 = vld [vmem:[#allocation5 + $0x248] sm:$0xff]
    %v149 = vld [vmem:[#allocation5 + $0x250] sm:$0xff]
    %v150 = vld [vmem:[#allocation5 + $0x258] sm:$0xff]
    %v151 = vld [vmem:[#allocation5 + $0x260] sm:$0xff]
    %v152 = vld [vmem:[#allocation5 + $0x268] sm:$0xff]
    %v153 = vld [vmem:[#allocation5 + $0x270] sm:$0xff]
    %v154 = vld [vmem:[#allocation5 + $0x278] sm:$0xff]
    %v155 = vld [vmem:[#allocation5 + $0x280] sm:$0xff]
    %v156 = vld [vmem:[#allocation5 + $0x288] sm:$0xff]
    %v157 = vld [vmem:[#allocation5 + $0x290] sm:$0xff]
    %v158 = vld [vmem:[#allocation5 + $0x298] sm:$0xff]
    %v159 = vld [vmem:[#allocation5 + $0x2a0] sm:$0xff]
    %v160 = vld [vmem:[#allocation5 + $0x2a8] sm:$0xff]
    %v161 = vld [vmem:[#allocation5 + $0x2b0] sm:$0xff]
    %v162 = vld [vmem:[#allocation5 + $0x2b8] sm:$0xff]
    %v163 = vld [vmem:[#allocation5 + $0x2c0] sm:$0xff]
    %v164 = vld [vmem:[#allocation5 + $0x2c8] sm:$0xff]
    %v165 = vld [vmem:[#allocation5 + $0x2d0] sm:$0xff]
    %v166 = vld [vmem:[#allocation5 + $0x2d8] sm:$0xff]
    %v167 = vld [vmem:[#allocation5 + $0x2e0] sm:$0xff]
    %v168 = vld [vmem:[#allocation5 + $0x2e8] sm:$0xff]
    %v169 = vld [vmem:[#allocation5 + $0x2f0] sm:$0xff]
    %v170 = vld [vmem:[#allocation5 + $0x2f8] sm:$0xff]
    %v171 = vld [vmem:[#allocation5 + $0x300] sm:$0xff]
    %v172 = vld [vmem:[#allocation5 + $0x308] sm:$0xff]
    %v173 = vld [vmem:[#allocation5 + $0x310] sm:$0xff]
    %v174 = vld [vmem:[#allocation5 + $0x318] sm:$0xff]
    %v175 = vld [vmem:[#allocation5 + $0x320] sm:$0xff]
    %v176 = vld [vmem:[#allocation5 + $0x328] sm:$0xff]
    %v177 = vld [vmem:[#allocation5 + $0x330] sm:$0xff]
    %v178 = vld [vmem:[#allocation5 + $0x338] sm:$0xff]
    %v179 = vld [vmem:[#allocation5 + $0x340] sm:$0xff]
    %v180 = vld [vmem:[#allocation5 + $0x348] sm:$0xff]
    %v181 = vld [vmem:[#allocation5 + $0x350] sm:$0xff]
    %v182 = vld [vmem:[#allocation5 + $0x358] sm:$0xff]
    %v183 = vld [vmem:[#allocation5 + $0x360] sm:$0xff]
    %v184 = vld [vmem:[#allocation5 + $0x368] sm:$0xff]
    %v185 = vld [vmem:[#allocation5 + $0x370] sm:$0xff]
    %v186 = vld [vmem:[#allocation5 + $0x378] sm:$0xff]
    %v187 = vld [vmem:[#allocation5 + $0x380] sm:$0xff]
    %v188 = vld [vmem:[#allocation5 + $0x388] sm:$0xff]
    %v189 = vld [vmem:[#allocation5 + $0x390] sm:$0xff]
    %v190 = vld [vmem:[#allocation5 + $0x398] sm:$0xff]
    %v191 = vld [vmem:[#allocation5 + $0x3a0] sm:$0xff]
    %v192 = vld [vmem:[#allocation5 + $0x3a8] sm:$0xff]
    %v193 = vld [vmem:[#allocation5 + $0x3b0] sm:$0xff]
    %v194 = vld [vmem:[#allocation5 + $0x3b8] sm:$0xff]
    %v195 = vld [vmem:[#allocation5 + $0x3c0] sm:$0xff]
    %v196 = vld [vmem:[#allocation5 + $0x3c8] sm:$0xff]
    %v197 = vld [vmem:[#allocation5 + $0x3d0] sm:$0xff]
    %v198 = vld [vmem:[#allocation5 + $0x3d8] sm:$0xff]
    %v199 = vld [vmem:[#allocation5 + $0x3e0] sm:$0xff]
    %v200 = vld [vmem:[#allocation5 + $0x3e8] sm:$0xff]
    %v201 = vld [vmem:[#allocation5 + $0x3f0] sm:$0xff]
    %v202 = vld [vmem:[#allocation5 + $0x3f8] sm:$0xff]
    %v203 = vld [vmem:[%s2] sm:$0xff]
    %v205 = vlaneseq
    %v206 = vshrl.u32 %v205, 7
    %v207 = vsub.s32 0, %v206
    %v208 = vrot.slane %v203, %v207
    %v209 = vlaneseq
    %v210 = vshrl.u32 %v209, 7
    %v211 = vsub.s32 1, %v210
    %v212 = vrot.slane %v203, %v211
    %v213 = vlaneseq
    %v214 = vshrl.u32 %v213, 7
    %v215 = vsub.s32 2, %v214
    %v216 = vrot.slane %v203, %v215
    %v217 = vlaneseq
    %v218 = vshrl.u32 %v217, 7
    %v219 = vsub.s32 3, %v218
    %v220 = vrot.slane %v203, %v219
    %v221 = vlaneseq
    %v222 = vshrl.u32 %v221, 7
    %v223 = vsub.s32 4, %v222
    %v224 = vrot.slane %v203, %v223
    %v225 = vlaneseq
    %v226 = vshrl.u32 %v225, 7
    %v227 = vsub.s32 5, %v226
    %v228 = vrot.slane %v203, %v227
    %v229 = vlaneseq
    %v230 = vshrl.u32 %v229, 7
    %v231 = vsub.s32 6, %v230
    %v232 = vrot.slane %v203, %v231
    %v233 = vlaneseq
    %v234 = vshrl.u32 %v233, 7
    %v235 = vsub.s32 7, %v234
    %v236 = vrot.slane %v203, %v235
    %245 = vmatprep.subr.mxu0 %v196
    %246 = vmatpush1.msra.mxu0 %v195
    %247 = vmatprep.subr.mxu0 %v188
    %248 = vmatpush1.msra.mxu0 %v187
    %249 = vmatprep.subr.mxu0 %v180
    %250 = vmatpush1.msra.mxu0 %v179
    %251 = vmatprep.subr.mxu0 %v172
    %252 = vmatpush1.msra.mxu0 %v171
    %253 = vmatprep.subr.mxu0 %v164
    %254 = vmatpush1.msra.mxu0 %v163
    %255 = vmatprep.subr.mxu0 %v156
    %256 = vmatpush1.msra.mxu0 %v155
    %257 = vmatprep.subr.mxu0 %v148
    %258 = vmatpush1.msra.mxu0 %v147
    %259 = vmatprep.subr.mxu0 %v140
    %260 = vmatpush1.msra.mxu0 %v139
    %261 = vmatprep.subr.mxu0 %v132
    %262 = vmatpush1.msra.mxu0 %v131
    %263 = vmatprep.subr.mxu0 %v124
    %264 = vmatpush1.msra.mxu0 %v123
    %265 = vmatprep.subr.mxu0 %v116
    %266 = vmatpush1.msra.mxu0 %v115
    %267 = vmatprep.subr.mxu0 %v108
    %268 = vmatpush1.msra.mxu0 %v107
    %269 = vmatprep.subr.mxu0 %v100
    %270 = vmatpush1.msra.mxu0 %v99
    %271 = vmatprep.subr.mxu0 %v92
    %272 = vmatpush1.msra.mxu0 %v91
    %273 = vmatprep.subr.mxu0 %v84
    %274 = vmatpush1.msra.mxu0 %v83
    %275 = vmatprep.subr.mxu0 %v76
    %276 = vmatpush1.msra.mxu0 %v75
    %277 = vmatprep.subr.mxu0 0.0
    %278 = vmatpush2.msra.mxu0 0.0
    %279 = vmatprep.subr.mxu0 0.0
    %280 = vmatpush2.msra.mxu0 0.0
    %281 = vmatprep.subr.mxu0 0.0
    %282 = vmatpush2.msra.mxu0 0.0
    %283 = vmatprep.subr.mxu0 0.0
    %284 = vmatpush2.msra.mxu0 0.0
    %285 = vmatprep.subr.mxu0 0.0
    %286 = vmatpush2.msra.mxu0 0.0
    %287 = vmatprep.subr.mxu0 0.0
    %288 = vmatpush2.msra.mxu0 0.0
    %289 = vmatprep.subr.mxu0 0.0
    %290 = vmatpush2.msra.mxu0 0.0
    %291 = vmatprep.subr.mxu0 0.0
    %292 = vmatpush2.msra.mxu0 0.0
    %293 = vmatprep.subr.mxu0 0.0
    %294 = vmatpush2.msra.mxu0 0.0
    %295 = vmatprep.subr.mxu0 0.0
    %296 = vmatpush2.msra.mxu0 0.0
    %297 = vmatprep.subr.mxu0 0.0
    %298 = vmatpush2.msra.mxu0 0.0
    %299 = vmatprep.subr.mxu0 0.0
    %300 = vmatpush2.msra.mxu0 0.0
    %301 = vmatprep.subr.mxu0 0.0
    %302 = vmatpush2.msra.mxu0 0.0
    %303 = vmatprep.subr.mxu0 0.0
    %304 = vmatpush2.msra.mxu0 0.0
    %305 = vmatprep.subr.mxu0 0.0
    %306 = vmatpush2.msra.mxu0 0.0
    %307 = vmatprep.subr.mxu0 0.0
    %308 = vmatpush2.msra.mxu0 0.0
    %309 = vmatprep.mubr.f32.mxu0 0.0
    %310 = vmatmul.mubr.f32.gmra.mxu0 %v71
    %v311 = vpop.f32.mrf.mxu0
    %v312 = vadd.f32 %v208, %v311
    %v313 = vpop.f32.mrf.mxu0
    %v314 = vadd.f32 %v212, %v313
    %315 = vmatprep.mubr.f32.mxu0 0.0
    %316 = vmatmul.mubr.f32.gmra.mxu0 %v72
    %v317 = vpop.f32.mrf.mxu0
    %v318 = vadd.f32 %v208, %v317
    %v319 = vpop.f32.mrf.mxu0
    %v320 = vadd.f32 %v212, %v319
    %321 = vmatprep.mubr.f32.mxu0 0.0
    %322 = vmatmul.mubr.f32.gmra.mxu0 %v73
    %v323 = vpop.f32.mrf.mxu0
    %v324 = vadd.f32 %v208, %v323
    %v325 = vpop.f32.mrf.mxu0
    %v326 = vadd.f32 %v212, %v325
    %327 = vmatprep.mubr.f32.mxu0 0.0
    %328 = vmatmul.mubr.f32.gmra.mxu0 %v74
    %v329 = vpop.f32.mrf.mxu0
    %v330 = vadd.f32 %v208, %v329
    %v331 = vpop.f32.mrf.mxu0
    %v332 = vadd.f32 %v212, %v331
    %333 = vdwg.mxu0
    %334 = vmatprep.subr.mxu0 %v198
    %335 = vmatpush1.msra.mxu0 %v197
    %336 = vmatprep.subr.mxu0 %v190
    %337 = vmatpush1.msra.mxu0 %v189
    %338 = vmatprep.subr.mxu0 %v182
    %339 = vmatpush1.msra.mxu0 %v181
    %340 = vmatprep.subr.mxu0 %v174
    %341 = vmatpush1.msra.mxu0 %v173
    %342 = vmatprep.subr.mxu0 %v166
    %343 = vmatpush1.msra.mxu0 %v165
    %344 = vmatprep.subr.mxu0 %v158
    %345 = vmatpush1.msra.mxu0 %v157
    %346 = vmatprep.subr.mxu0 %v150
    %347 = vmatpush1.msra.mxu0 %v149
    %348 = vmatprep.subr.mxu0 %v142
    %349 = vmatpush1.msra.mxu0 %v141
    %350 = vmatprep.subr.mxu0 %v134
    %351 = vmatpush1.msra.mxu0 %v133
    %352 = vmatprep.subr.mxu0 %v126
    %353 = vmatpush1.msra.mxu0 %v125
    %354 = vmatprep.subr.mxu0 %v118
    %355 = vmatpush1.msra.mxu0 %v117
    %356 = vmatprep.subr.mxu0 %v110
    %357 = vmatpush1.msra.mxu0 %v109
    %358 = vmatprep.subr.mxu0 %v102
    %359 = vmatpush1.msra.mxu0 %v101
    %360 = vmatprep.subr.mxu0 %v94
    %361 = vmatpush1.msra.mxu0 %v93
    %362 = vmatprep.subr.mxu0 %v86
    %363 = vmatpush1.msra.mxu0 %v85
    %364 = vmatprep.subr.mxu0 %v78
    %365 = vmatpush1.msra.mxu0 %v77
    %366 = vmatprep.subr.mxu0 0.0
    %367 = vmatpush2.msra.mxu0 0.0
    %368 = vmatprep.subr.mxu0 0.0
    %369 = vmatpush2.msra.mxu0 0.0
    %370 = vmatprep.subr.mxu0 0.0
    %371 = vmatpush2.msra.mxu0 0.0
    %372 = vmatprep.subr.mxu0 0.0
    %373 = vmatpush2.msra.mxu0 0.0
    %374 = vmatprep.subr.mxu0 0.0
    %375 = vmatpush2.msra.mxu0 0.0
    %376 = vmatprep.subr.mxu0 0.0
    %377 = vmatpush2.msra.mxu0 0.0
    %378 = vmatprep.subr.mxu0 0.0
    %379 = vmatpush2.msra.mxu0 0.0
    %380 = vmatprep.subr.mxu0 0.0
    %381 = vmatpush2.msra.mxu0 0.0
    %382 = vmatprep.subr.mxu0 0.0
    %383 = vmatpush2.msra.mxu0 0.0
    %384 = vmatprep.subr.mxu0 0.0
    %385 = vmatpush2.msra.mxu0 0.0
    %386 = vmatprep.subr.mxu0 0.0
    %387 = vmatpush2.msra.mxu0 0.0
    %388 = vmatprep.subr.mxu0 0.0
    %389 = vmatpush2.msra.mxu0 0.0
    %390 = vmatprep.subr.mxu0 0.0
    %391 = vmatpush2.msra.mxu0 0.0
    %392 = vmatprep.subr.mxu0 0.0
    %393 = vmatpush2.msra.mxu0 0.0
    %394 = vmatprep.subr.mxu0 0.0
    %395 = vmatpush2.msra.mxu0 0.0
    %396 = vmatprep.subr.mxu0 0.0
    %397 = vmatpush2.msra.mxu0 0.0
    %398 = vmatprep.mubr.f32.mxu0 0.0
    %399 = vmatmul.mubr.f32.gmra.mxu0 %v71
    %v400 = vpop.f32.mrf.mxu0
    %v401 = vadd.f32 %v216, %v400
    %v402 = vpop.f32.mrf.mxu0
    %v403 = vadd.f32 %v220, %v402
    %404 = vmatprep.mubr.f32.mxu0 0.0
    %405 = vmatmul.mubr.f32.gmra.mxu0 %v72
    %v406 = vpop.f32.mrf.mxu0
    %v407 = vadd.f32 %v216, %v406
    %v408 = vpop.f32.mrf.mxu0
    %v409 = vadd.f32 %v220, %v408
    %410 = vmatprep.mubr.f32.mxu0 0.0
    %411 = vmatmul.mubr.f32.gmra.mxu0 %v73
    %v412 = vpop.f32.mrf.mxu0
    %v413 = vadd.f32 %v216, %v412
    %v414 = vpop.f32.mrf.mxu0
    %v415 = vadd.f32 %v220, %v414
    %416 = vmatprep.mubr.f32.mxu0 0.0
    %417 = vmatmul.mubr.f32.gmra.mxu0 %v74
    %v418 = vpop.f32.mrf.mxu0
    %v419 = vadd.f32 %v216, %v418
    %v420 = vpop.f32.mrf.mxu0
    %v421 = vadd.f32 %v220, %v420
    %422 = vdwg.mxu0
    %423 = vmatprep.subr.mxu0 %v200
    %424 = vmatpush1.msra.mxu0 %v199
    %425 = vmatprep.subr.mxu0 %v192
    %426 = vmatpush1.msra.mxu0 %v191
    %427 = vmatprep.subr.mxu0 %v184
    %428 = vmatpush1.msra.mxu0 %v183
    %429 = vmatprep.subr.mxu0 %v176
    %430 = vmatpush1.msra.mxu0 %v175
    %431 = vmatprep.subr.mxu0 %v168
    %432 = vmatpush1.msra.mxu0 %v167
    %433 = vmatprep.subr.mxu0 %v160
    %434 = vmatpush1.msra.mxu0 %v159
    %435 = vmatprep.subr.mxu0 %v152
    %436 = vmatpush1.msra.mxu0 %v151
    %437 = vmatprep.subr.mxu0 %v144
    %438 = vmatpush1.msra.mxu0 %v143
    %439 = vmatprep.subr.mxu0 %v136
    %440 = vmatpush1.msra.mxu0 %v135
    %441 = vmatprep.subr.mxu0 %v128
    %442 = vmatpush1.msra.mxu0 %v127
    %443 = vmatprep.subr.mxu0 %v120
    %444 = vmatpush1.msra.mxu0 %v119
    %445 = vmatprep.subr.mxu0 %v112
    %446 = vmatpush1.msra.mxu0 %v111
    %447 = vmatprep.subr.mxu0 %v104
    %448 = vmatpush1.msra.mxu0 %v103
    %449 = vmatprep.subr.mxu0 %v96
    %450 = vmatpush1.msra.mxu0 %v95
    %451 = vmatprep.subr.mxu0 %v88
    %452 = vmatpush1.msra.mxu0 %v87
    %453 = vmatprep.subr.mxu0 %v80
    %454 = vmatpush1.msra.mxu0 %v79
    %455 = vmatprep.subr.mxu0 0.0
    %456 = vmatpush2.msra.mxu0 0.0
    %457 = vmatprep.subr.mxu0 0.0
    %458 = vmatpush2.msra.mxu0 0.0
    %459 = vmatprep.subr.mxu0 0.0
    %460 = vmatpush2.msra.mxu0 0.0
    %461 = vmatprep.subr.mxu0 0.0
    %462 = vmatpush2.msra.mxu0 0.0
    %463 = vmatprep.subr.mxu0 0.0
    %464 = vmatpush2.msra.mxu0 0.0
    %465 = vmatprep.subr.mxu0 0.0
    %466 = vmatpush2.msra.mxu0 0.0
    %467 = vmatprep.subr.mxu0 0.0
    %468 = vmatpush2.msra.mxu0 0.0
    %469 = vmatprep.subr.mxu0 0.0
    %470 = vmatpush2.msra.mxu0 0.0
    %471 = vmatprep.subr.mxu0 0.0
    %472 = vmatpush2.msra.mxu0 0.0
    %473 = vmatprep.subr.mxu0 0.0
    %474 = vmatpush2.msra.mxu0 0.0
    %475 = vmatprep.subr.mxu0 0.0
    %476 = vmatpush2.msra.mxu0 0.0
    %477 = vmatprep.subr.mxu0 0.0
    %478 = vmatpush2.msra.mxu0 0.0
    %479 = vmatprep.subr.mxu0 0.0
    %480 = vmatpush2.msra.mxu0 0.0
    %481 = vmatprep.subr.mxu0 0.0
    %482 = vmatpush2.msra.mxu0 0.0
    %483 = vmatprep.subr.mxu0 0.0
    %484 = vmatpush2.msra.mxu0 0.0
    %485 = vmatprep.subr.mxu0 0.0
    %486 = vmatpush2.msra.mxu0 0.0
    %487 = vmatprep.mubr.f32.mxu0 0.0
    %488 = vmatmul.mubr.f32.gmra.mxu0 %v71
    %v489 = vpop.f32.mrf.mxu0
    %v490 = vadd.f32 %v224, %v489
    %v491 = vpop.f32.mrf.mxu0
    %v492 = vadd.f32 %v228, %v491
    %493 = vmatprep.mubr.f32.mxu0 0.0
    %494 = vmatmul.mubr.f32.gmra.mxu0 %v72
    %v495 = vpop.f32.mrf.mxu0
    %v496 = vadd.f32 %v224, %v495
    %v497 = vpop.f32.mrf.mxu0
    %v498 = vadd.f32 %v228, %v497
    %499 = vmatprep.mubr.f32.mxu0 0.0
    %500 = vmatmul.mubr.f32.gmra.mxu0 %v73
    %v501 = vpop.f32.mrf.mxu0
    %v502 = vadd.f32 %v224, %v501
    %v503 = vpop.f32.mrf.mxu0
    %v504 = vadd.f32 %v228, %v503
    %505 = vmatprep.mubr.f32.mxu0 0.0
    %506 = vmatmul.mubr.f32.gmra.mxu0 %v74
    %v507 = vpop.f32.mrf.mxu0
    %v508 = vadd.f32 %v224, %v507
    %v509 = vpop.f32.mrf.mxu0
    %v510 = vadd.f32 %v228, %v509
    %511 = vdwg.mxu0
    %512 = vmatprep.subr.mxu0 %v202
    %513 = vmatpush1.msra.mxu0 %v201
    %514 = vmatprep.subr.mxu0 %v194
    %515 = vmatpush1.msra.mxu0 %v193
    %516 = vmatprep.subr.mxu0 %v186
    %517 = vmatpush1.msra.mxu0 %v185
    %518 = vmatprep.subr.mxu0 %v178
    %519 = vmatpush1.msra.mxu0 %v177
    %520 = vmatprep.subr.mxu0 %v170
    %521 = vmatpush1.msra.mxu0 %v169
    %522 = vmatprep.subr.mxu0 %v162
    %523 = vmatpush1.msra.mxu0 %v161
    %524 = vmatprep.subr.mxu0 %v154
    %525 = vmatpush1.msra.mxu0 %v153
    %526 = vmatprep.subr.mxu0 %v146
    %527 = vmatpush1.msra.mxu0 %v145
    %528 = vmatprep.subr.mxu0 %v138
    %529 = vmatpush1.msra.mxu0 %v137
    %530 = vmatprep.subr.mxu0 %v130
    %531 = vmatpush1.msra.mxu0 %v129
    %532 = vmatprep.subr.mxu0 %v122
    %533 = vmatpush1.msra.mxu0 %v121
    %534 = vmatprep.subr.mxu0 %v114
    %535 = vmatpush1.msra.mxu0 %v113
    %536 = vmatprep.subr.mxu0 %v106
    %537 = vmatpush1.msra.mxu0 %v105
    %538 = vmatprep.subr.mxu0 %v98
    %539 = vmatpush1.msra.mxu0 %v97
    %540 = vmatprep.subr.mxu0 %v90
    %541 = vmatpush1.msra.mxu0 %v89
    %542 = vmatprep.subr.mxu0 %v82
    %543 = vmatpush1.msra.mxu0 %v81
    %544 = vmatprep.subr.mxu0 0.0
    %545 = vmatpush2.msra.mxu0 0.0
    %546 = vmatprep.subr.mxu0 0.0
    %547 = vmatpush2.msra.mxu0 0.0
    %548 = vmatprep.subr.mxu0 0.0
    %549 = vmatpush2.msra.mxu0 0.0
    %550 = vmatprep.subr.mxu0 0.0
    %551 = vmatpush2.msra.mxu0 0.0
    %552 = vmatprep.subr.mxu0 0.0
    %553 = vmatpush2.msra.mxu0 0.0
    %554 = vmatprep.subr.mxu0 0.0
    %555 = vmatpush2.msra.mxu0 0.0
    %556 = vmatprep.subr.mxu0 0.0
    %557 = vmatpush2.msra.mxu0 0.0
    %558 = vmatprep.subr.mxu0 0.0
    %559 = vmatpush2.msra.mxu0 0.0
    %560 = vmatprep.subr.mxu0 0.0
    %561 = vmatpush2.msra.mxu0 0.0
    %562 = vmatprep.subr.mxu0 0.0
    %563 = vmatpush2.msra.mxu0 0.0
    %564 = vmatprep.subr.mxu0 0.0
    %565 = vmatpush2.msra.mxu0 0.0
    %566 = vmatprep.subr.mxu0 0.0
    %567 = vmatpush2.msra.mxu0 0.0
    %568 = vmatprep.subr.mxu0 0.0
    %569 = vmatpush2.msra.mxu0 0.0
    %570 = vmatprep.subr.mxu0 0.0
    %571 = vmatpush2.msra.mxu0 0.0
    %572 = vmatprep.subr.mxu0 0.0
    %573 = vmatpush2.msra.mxu0 0.0
    %574 = vmatprep.subr.mxu0 0.0
    %575 = vmatpush2.msra.mxu0 0.0
    %576 = vmatprep.mubr.f32.mxu0 0.0
    %577 = vmatmul.mubr.f32.gmra.mxu0 %v71
    %v578 = vpop.f32.mrf.mxu0
    %v579 = vadd.f32 %v232, %v578
    %v580 = vpop.f32.mrf.mxu0
    %v581 = vadd.f32 %v236, %v580
    %582 = vmatprep.mubr.f32.mxu0 0.0
    %583 = vmatmul.mubr.f32.gmra.mxu0 %v72
    %v584 = vpop.f32.mrf.mxu0
    %v585 = vadd.f32 %v232, %v584
    %v586 = vpop.f32.mrf.mxu0
    %v587 = vadd.f32 %v236, %v586
    %588 = vmatprep.mubr.f32.mxu0 0.0
    %589 = vmatmul.mubr.f32.gmra.mxu0 %v73
    %v590 = vpop.f32.mrf.mxu0
    %v591 = vadd.f32 %v232, %v590
    %v592 = vpop.f32.mrf.mxu0
    %v593 = vadd.f32 %v236, %v592
    %594 = vmatprep.mubr.f32.mxu0 0.0
    %595 = vmatmul.mubr.f32.gmra.mxu0 %v74
    %v596 = vpop.f32.mrf.mxu0
    %v597 = vadd.f32 %v232, %v596
    %v598 = vpop.f32.mrf.mxu0
    %v599 = vadd.f32 %v236, %v598
    %600 = vdwg.mxu0
    %601 = vst [vmem:[#allocation2] sm:$0xff] %v312
    %602 = vst [vmem:[#allocation2 + $0x8] sm:$0xff] %v314
    %603 = vst [vmem:[#allocation2 + $0x10] sm:$0xff] %v401
    %604 = vst [vmem:[#allocation2 + $0x18] sm:$0xff] %v403
    %605 = vst [vmem:[#allocation2 + $0x20] sm:$0xff] %v490
    %606 = vst [vmem:[#allocation2 + $0x28] sm:$0xff] %v492
    %607 = vst [vmem:[#allocation2 + $0x30] sm:$0xff] %v579
    %608 = vst [vmem:[#allocation2 + $0x38] sm:$0xff] %v581
    %609 = vst [vmem:[#allocation2 + $0x40] sm:$0xff] %v318
    %610 = vst [vmem:[#allocation2 + $0x48] sm:$0xff] %v320
    %611 = vst [vmem:[#allocation2 + $0x50] sm:$0xff] %v407
    %612 = vst [vmem:[#allocation2 + $0x58] sm:$0xff] %v409
    %613 = vst [vmem:[#allocation2 + $0x60] sm:$0xff] %v496
    %614 = vst [vmem:[#allocation2 + $0x68] sm:$0xff] %v498
    %615 = vst [vmem:[#allocation2 + $0x70] sm:$0xff] %v585
    %616 = vst [vmem:[#allocation2 + $0x78] sm:$0xff] %v587
    %617 = vst [vmem:[#allocation2 + $0x80] sm:$0xff] %v324
    %618 = vst [vmem:[#allocation2 + $0x88] sm:$0xff] %v326
    %619 = vst [vmem:[#allocation2 + $0x90] sm:$0xff] %v413
    %620 = vst [vmem:[#allocation2 + $0x98] sm:$0xff] %v415
    %621 = vst [vmem:[#allocation2 + $0xa0] sm:$0xff] %v502
    %622 = vst [vmem:[#allocation2 + $0xa8] sm:$0xff] %v504
    %623 = vst [vmem:[#allocation2 + $0xb0] sm:$0xff] %v591
    %624 = vst [vmem:[#allocation2 + $0xb8] sm:$0xff] %v593
    %625 = vst [vmem:[#allocation2 + $0xc0] sm:$0xff] %v330
    %626 = vst [vmem:[#allocation2 + $0xc8] sm:$0xff] %v332
    %627 = vst [vmem:[#allocation2 + $0xd0] sm:$0xff] %v419
    %628 = vst [vmem:[#allocation2 + $0xd8] sm:$0xff] %v421
    %629 = vst [vmem:[#allocation2 + $0xe0] sm:$0xff] %v508
    %630 = vst [vmem:[#allocation2 + $0xe8] sm:$0xff] %v510
    %631 = vst [vmem:[#allocation2 + $0xf0] sm:$0xff] %v597
    %632 = vst [vmem:[#allocation2 + $0xf8] sm:$0xff] %v599
    %v633 = vld [vmem:[#allocation8] sm:$0xff]
    %v634 = vld [vmem:[#allocation8 + $0x8] sm:$0xff]
    %v635 = vld [vmem:[#allocation8 + $0x10] sm:$0xff]
    %v636 = vld [vmem:[#allocation8 + $0x18] sm:$0xff]
    %v637 = vld [vmem:[#allocation8 + $0x20] sm:$0xff]
    %v638 = vld [vmem:[#allocation8 + $0x28] sm:$0xff]
    %v639 = vld [vmem:[#allocation8 + $0x30] sm:$0xff]
    %v640 = vld [vmem:[#allocation8 + $0x38] sm:$0xff]
    %v641 = vld [vmem:[#allocation8 + $0x40] sm:$0xff]
    %v642 = vld [vmem:[#allocation8 + $0x48] sm:$0xff]
    %v643 = vld [vmem:[#allocation8 + $0x50] sm:$0xff]
    %v644 = vld [vmem:[#allocation8 + $0x58] sm:$0xff]
    %v645 = vld [vmem:[#allocation8 + $0x60] sm:$0xff]
    %v646 = vld [vmem:[#allocation8 + $0x68] sm:$0xff]
    %v647 = vld [vmem:[#allocation8 + $0x70] sm:$0xff]
    %v648 = vld [vmem:[#allocation8 + $0x78] sm:$0xff]
    %v649 = vld [vmem:[#allocation8 + $0x80] sm:$0xff]
    %v650 = vld [vmem:[#allocation8 + $0x88] sm:$0xff]
    %v651 = vld [vmem:[#allocation8 + $0x90] sm:$0xff]
    %v652 = vld [vmem:[#allocation8 + $0x98] sm:$0xff]
    %v653 = vld [vmem:[#allocation8 + $0xa0] sm:$0xff]
    %v654 = vld [vmem:[#allocation8 + $0xa8] sm:$0xff]
    %v655 = vld [vmem:[#allocation8 + $0xb0] sm:$0xff]
    %v656 = vld [vmem:[#allocation8 + $0xb8] sm:$0xff]
    %v657 = vld [vmem:[#allocation8 + $0xc0] sm:$0xff]
    %v658 = vld [vmem:[#allocation8 + $0xc8] sm:$0xff]
    %v659 = vld [vmem:[#allocation8 + $0xd0] sm:$0xff]
    %v660 = vld [vmem:[#allocation8 + $0xd8] sm:$0xff]
    %v661 = vld [vmem:[#allocation8 + $0xe0] sm:$0xff]
    %v662 = vld [vmem:[#allocation8 + $0xe8] sm:$0xff]
    %v663 = vld [vmem:[#allocation8 + $0xf0] sm:$0xff]
    %v664 = vld [vmem:[#allocation8 + $0xf8] sm:$0xff]
    %v665 = vld [vmem:[#allocation8 + $0x100] sm:$0xff]
    %v666 = vld [vmem:[#allocation8 + $0x108] sm:$0xff]
    %v667 = vld [vmem:[#allocation8 + $0x110] sm:$0xff]
    %v668 = vld [vmem:[#allocation8 + $0x118] sm:$0xff]
    %v669 = vld [vmem:[#allocation8 + $0x120] sm:$0xff]
    %v670 = vld [vmem:[#allocation8 + $0x128] sm:$0xff]
    %v671 = vld [vmem:[#allocation8 + $0x130] sm:$0xff]
    %v672 = vld [vmem:[#allocation8 + $0x138] sm:$0xff]
    %v673 = vld [vmem:[#allocation8 + $0x140] sm:$0xff]
    %v674 = vld [vmem:[#allocation8 + $0x148] sm:$0xff]
    %v675 = vld [vmem:[#allocation8 + $0x150] sm:$0xff]
    %v676 = vld [vmem:[#allocation8 + $0x158] sm:$0xff]
    %v677 = vld [vmem:[#allocation8 + $0x160] sm:$0xff]
    %v678 = vld [vmem:[#allocation8 + $0x168] sm:$0xff]
    %v679 = vld [vmem:[#allocation8 + $0x170] sm:$0xff]
    %v680 = vld [vmem:[#allocation8 + $0x178] sm:$0xff]
    %v681 = vld [vmem:[#allocation8 + $0x180] sm:$0xff]
    %v682 = vld [vmem:[#allocation8 + $0x188] sm:$0xff]
    %v683 = vld [vmem:[#allocation8 + $0x190] sm:$0xff]
    %v684 = vld [vmem:[#allocation8 + $0x198] sm:$0xff]
    %v685 = vld [vmem:[#allocation8 + $0x1a0] sm:$0xff]
    %v686 = vld [vmem:[#allocation8 + $0x1a8] sm:$0xff]
    %v687 = vld [vmem:[#allocation8 + $0x1b0] sm:$0xff]
    %v688 = vld [vmem:[#allocation8 + $0x1b8] sm:$0xff]
    %v689 = vld [vmem:[#allocation8 + $0x1c0] sm:$0xff]
    %v690 = vld [vmem:[#allocation8 + $0x1c8] sm:$0xff]
    %v691 = vld [vmem:[#allocation8 + $0x1d0] sm:$0xff]
    %v692 = vld [vmem:[#allocation8 + $0x1d8] sm:$0xff]
    %v693 = vld [vmem:[#allocation8 + $0x1e0] sm:$0xff]
    %v694 = vld [vmem:[#allocation8 + $0x1e8] sm:$0xff]
    %v695 = vld [vmem:[#allocation8 + $0x1f0] sm:$0xff]
    %v696 = vld [vmem:[#allocation8 + $0x1f8] sm:$0xff]
    %v697 = vld [vmem:[#allocation10] sm:$0xff]
    %v698 = vld [vmem:[#allocation10 + $0x8] sm:$0xff]
    %v699 = vld [vmem:[#allocation10 + $0x10] sm:$0xff]
    %v700 = vld [vmem:[#allocation10 + $0x18] sm:$0xff]
    %v701 = vld [vmem:[#allocation10 + $0x20] sm:$0xff]
    %v702 = vld [vmem:[#allocation10 + $0x28] sm:$0xff]
    %v703 = vld [vmem:[#allocation10 + $0x30] sm:$0xff]
    %v704 = vld [vmem:[#allocation10 + $0x38] sm:$0xff]
    %v705 = vld [vmem:[#allocation10 + $0x40] sm:$0xff]
    %v706 = vld [vmem:[#allocation10 + $0x48] sm:$0xff]
    %v707 = vld [vmem:[#allocation10 + $0x50] sm:$0xff]
    %v708 = vld [vmem:[#allocation10 + $0x58] sm:$0xff]
    %v709 = vld [vmem:[#allocation10 + $0x60] sm:$0xff]
    %v710 = vld [vmem:[#allocation10 + $0x68] sm:$0xff]
    %v711 = vld [vmem:[#allocation10 + $0x70] sm:$0xff]
    %v712 = vld [vmem:[#allocation10 + $0x78] sm:$0xff]
    %v713 = vld [vmem:[#allocation10 + $0x80] sm:$0xff]
    %v714 = vld [vmem:[#allocation10 + $0x88] sm:$0xff]
    %v715 = vld [vmem:[#allocation10 + $0x90] sm:$0xff]
    %v716 = vld [vmem:[#allocation10 + $0x98] sm:$0xff]
    %v717 = vld [vmem:[#allocation10 + $0xa0] sm:$0xff]
    %v718 = vld [vmem:[#allocation10 + $0xa8] sm:$0xff]
    %v719 = vld [vmem:[#allocation10 + $0xb0] sm:$0xff]
    %v720 = vld [vmem:[#allocation10 + $0xb8] sm:$0xff]
    %v721 = vld [vmem:[#allocation10 + $0xc0] sm:$0xff]
    %v722 = vld [vmem:[#allocation10 + $0xc8] sm:$0xff]
    %v723 = vld [vmem:[#allocation10 + $0xd0] sm:$0xff]
    %v724 = vld [vmem:[#allocation10 + $0xd8] sm:$0xff]
    %v725 = vld [vmem:[#allocation10 + $0xe0] sm:$0xff]
    %v726 = vld [vmem:[#allocation10 + $0xe8] sm:$0xff]
    %v727 = vld [vmem:[#allocation10 + $0xf0] sm:$0xff]
    %v728 = vld [vmem:[#allocation10 + $0xf8] sm:$0xff]
    %v729 = vld [vmem:[#allocation10 + $0x100] sm:$0xff]
    %v730 = vld [vmem:[#allocation10 + $0x108] sm:$0xff]
    %v731 = vld [vmem:[#allocation10 + $0x110] sm:$0xff]
    %v732 = vld [vmem:[#allocation10 + $0x118] sm:$0xff]
    %v733 = vld [vmem:[#allocation10 + $0x120] sm:$0xff]
    %v734 = vld [vmem:[#allocation10 + $0x128] sm:$0xff]
    %v735 = vld [vmem:[#allocation10 + $0x130] sm:$0xff]
    %v736 = vld [vmem:[#allocation10 + $0x138] sm:$0xff]
    %v737 = vld [vmem:[#allocation10 + $0x140] sm:$0xff]
    %v738 = vld [vmem:[#allocation10 + $0x148] sm:$0xff]
    %v739 = vld [vmem:[#allocation10 + $0x150] sm:$0xff]
    %v740 = vld [vmem:[#allocation10 + $0x158] sm:$0xff]
    %v741 = vld [vmem:[#allocation10 + $0x160] sm:$0xff]
    %v742 = vld [vmem:[#allocation10 + $0x168] sm:$0xff]
    %v743 = vld [vmem:[#allocation10 + $0x170] sm:$0xff]
    %v744 = vld [vmem:[#allocation10 + $0x178] sm:$0xff]
    %v745 = vld [vmem:[#allocation10 + $0x180] sm:$0xff]
    %v746 = vld [vmem:[#allocation10 + $0x188] sm:$0xff]
    %v747 = vld [vmem:[#allocation10 + $0x190] sm:$0xff]
    %v748 = vld [vmem:[#allocation10 + $0x198] sm:$0xff]
    %v749 = vld [vmem:[#allocation10 + $0x1a0] sm:$0xff]
    %v750 = vld [vmem:[#allocation10 + $0x1a8] sm:$0xff]
    %v751 = vld [vmem:[#allocation10 + $0x1b0] sm:$0xff]
    %v752 = vld [vmem:[#allocation10 + $0x1b8] sm:$0xff]
    %v753 = vld [vmem:[#allocation10 + $0x1c0] sm:$0xff]
    %v754 = vld [vmem:[#allocation10 + $0x1c8] sm:$0xff]
    %v755 = vld [vmem:[#allocation10 + $0x1d0] sm:$0xff]
    %v756 = vld [vmem:[#allocation10 + $0x1d8] sm:$0xff]
    %v757 = vld [vmem:[#allocation10 + $0x1e0] sm:$0xff]
    %v758 = vld [vmem:[#allocation10 + $0x1e8] sm:$0xff]
    %v759 = vld [vmem:[#allocation10 + $0x1f0] sm:$0xff]
    %v760 = vld [vmem:[#allocation10 + $0x1f8] sm:$0xff]
    %v761 = vld [vmem:[#allocation2] sm:$0xf]
    %v762 = vld [vmem:[#allocation2 + $0x8] sm:$0xf]
    %v763 = vld [vmem:[#allocation2 + $0x10] sm:$0xf]
    %v764 = vld [vmem:[#allocation2 + $0x18] sm:$0xf]
    %v765 = vld [vmem:[#allocation2 + $0xe0] sm:$0xf0]
    %v766 = vld [vmem:[#allocation2 + $0xe8] sm:$0xf0]
    %v767 = vld [vmem:[#allocation2 + $0xf0] sm:$0xf0]
    %v768 = vld [vmem:[#allocation2 + $0xf8] sm:$0xf0]
    %769 = vmatprep.subr.mxu0 %v694
    %770 = vmatpush1.msra.mxu0 %v693
    %771 = vmatprep.subr.mxu0 %v690
    %772 = vmatpush1.msra.mxu0 %v689
    %773 = vmatprep.subr.mxu0 %v686
    %774 = vmatpush1.msra.mxu0 %v685
    %775 = vmatprep.subr.mxu0 %v682
    %776 = vmatpush1.msra.mxu0 %v681
    %777 = vmatprep.subr.mxu0 %v678
    %778 = vmatpush1.msra.mxu0 %v677
    %779 = vmatprep.subr.mxu0 %v674
    %780 = vmatpush1.msra.mxu0 %v673
    %781 = vmatprep.subr.mxu0 %v670
    %782 = vmatpush1.msra.mxu0 %v669
    %783 = vmatprep.subr.mxu0 %v666
    %784 = vmatpush1.msra.mxu0 %v665
    %785 = vmatprep.subr.mxu0 %v662
    %786 = vmatpush1.msra.mxu0 %v661
    %787 = vmatprep.subr.mxu0 %v658
    %788 = vmatpush1.msra.mxu0 %v657
    %789 = vmatprep.subr.mxu0 %v654
    %790 = vmatpush1.msra.mxu0 %v653
    %791 = vmatprep.subr.mxu0 %v650
    %792 = vmatpush1.msra.mxu0 %v649
    %793 = vmatprep.subr.mxu0 %v646
    %794 = vmatpush1.msra.mxu0 %v645
    %795 = vmatprep.subr.mxu0 %v642
    %796 = vmatpush1.msra.mxu0 %v641
    %797 = vmatprep.subr.mxu0 %v638
    %798 = vmatpush1.msra.mxu0 %v637
    %799 = vmatprep.subr.mxu0 %v634
    %800 = vmatpush1.msra.mxu0 %v633
    %801 = vmatprep.subr.mxu0 0.0
    %802 = vmatpush2.msra.mxu0 0.0
    %803 = vmatprep.subr.mxu0 0.0
    %804 = vmatpush2.msra.mxu0 0.0
    %805 = vmatprep.subr.mxu0 0.0
    %806 = vmatpush2.msra.mxu0 0.0
    %807 = vmatprep.subr.mxu0 0.0
    %808 = vmatpush2.msra.mxu0 0.0
    %809 = vmatprep.subr.mxu0 0.0
    %810 = vmatpush2.msra.mxu0 0.0
    %811 = vmatprep.subr.mxu0 0.0
    %812 = vmatpush2.msra.mxu0 0.0
    %813 = vmatprep.subr.mxu0 0.0
    %814 = vmatpush2.msra.mxu0 0.0
    %815 = vmatprep.subr.mxu0 0.0
    %816 = vmatpush2.msra.mxu0 0.0
    %817 = vmatprep.subr.mxu0 0.0
    %818 = vmatpush2.msra.mxu0 0.0
    %819 = vmatprep.subr.mxu0 0.0
    %820 = vmatpush2.msra.mxu0 0.0
    %821 = vmatprep.subr.mxu0 0.0
    %822 = vmatpush2.msra.mxu0 0.0
    %823 = vmatprep.subr.mxu0 0.0
    %824 = vmatpush2.msra.mxu0 0.0
    %825 = vmatprep.subr.mxu0 0.0
    %826 = vmatpush2.msra.mxu0 0.0
    %827 = vmatprep.subr.mxu0 0.0
    %828 = vmatpush2.msra.mxu0 0.0
    %829 = vmatprep.subr.mxu0 0.0
    %830 = vmatpush2.msra.mxu0 0.0
    %831 = vmatprep.subr.mxu0 0.0
    %832 = vmatpush2.msra.mxu0 0.0
    %833 = vmatprep.mubr.f32.mxu0 0.0
    %834 = vmatmul.mubr.f32.gmra.mxu0 0.0
    %v835 = vpop.f32.mrf.mxu0
    %v836 = vadd.f32 0.0, %v835
    %v837 = vpop.f32.mrf.mxu0
    %v838 = vadd.f32 0.0, %v837
    %839 = vdwg.mxu0
    %840 = vmatprep.subr.mxu0 %v696
    %841 = vmatpush1.msra.mxu0 %v695
    %842 = vmatprep.subr.mxu0 %v692
    %843 = vmatpush1.msra.mxu0 %v691
    %844 = vmatprep.subr.mxu0 %v688
    %845 = vmatpush1.msra.mxu0 %v687
    %846 = vmatprep.subr.mxu0 %v684
    %847 = vmatpush1.msra.mxu0 %v683
    %848 = vmatprep.subr.mxu0 %v680
    %849 = vmatpush1.msra.mxu0 %v679
    %850 = vmatprep.subr.mxu0 %v676
    %851 = vmatpush1.msra.mxu0 %v675
    %852 = vmatprep.subr.mxu0 %v672
    %853 = vmatpush1.msra.mxu0 %v671
    %854 = vmatprep.subr.mxu0 %v668
    %855 = vmatpush1.msra.mxu0 %v667
    %856 = vmatprep.subr.mxu0 %v664
    %857 = vmatpush1.msra.mxu0 %v663
    %858 = vmatprep.subr.mxu0 %v660
    %859 = vmatpush1.msra.mxu0 %v659
    %860 = vmatprep.subr.mxu0 %v656
    %861 = vmatpush1.msra.mxu0 %v655
    %862 = vmatprep.subr.mxu0 %v652
    %863 = vmatpush1.msra.mxu0 %v651
    %864 = vmatprep.subr.mxu0 %v648
    %865 = vmatpush1.msra.mxu0 %v647
    %866 = vmatprep.subr.mxu0 %v644
    %867 = vmatpush1.msra.mxu0 %v643
    %868 = vmatprep.subr.mxu0 %v640
    %869 = vmatpush1.msra.mxu0 %v639
    %870 = vmatprep.subr.mxu0 %v636
    %871 = vmatpush1.msra.mxu0 %v635
    %872 = vmatprep.subr.mxu0 0.0
    %873 = vmatpush2.msra.mxu0 0.0
    %874 = vmatprep.subr.mxu0 0.0
    %875 = vmatpush2.msra.mxu0 0.0
    %876 = vmatprep.subr.mxu0 0.0
    %877 = vmatpush2.msra.mxu0 0.0
    %878 = vmatprep.subr.mxu0 0.0
    %879 = vmatpush2.msra.mxu0 0.0
    %880 = vmatprep.subr.mxu0 0.0
    %881 = vmatpush2.msra.mxu0 0.0
    %882 = vmatprep.subr.mxu0 0.0
    %883 = vmatpush2.msra.mxu0 0.0
    %884 = vmatprep.subr.mxu0 0.0
    %885 = vmatpush2.msra.mxu0 0.0
    %886 = vmatprep.subr.mxu0 0.0
    %887 = vmatpush2.msra.mxu0 0.0
    %888 = vmatprep.subr.mxu0 0.0
    %889 = vmatpush2.msra.mxu0 0.0
    %890 = vmatprep.subr.mxu0 0.0
    %891 = vmatpush2.msra.mxu0 0.0
    %892 = vmatprep.subr.mxu0 0.0
    %893 = vmatpush2.msra.mxu0 0.0
    %894 = vmatprep.subr.mxu0 0.0
    %895 = vmatpush2.msra.mxu0 0.0
    %896 = vmatprep.subr.mxu0 0.0
    %897 = vmatpush2.msra.mxu0 0.0
    %898 = vmatprep.subr.mxu0 0.0
    %899 = vmatpush2.msra.mxu0 0.0
    %900 = vmatprep.subr.mxu0 0.0
    %901 = vmatpush2.msra.mxu0 0.0
    %902 = vmatprep.subr.mxu0 0.0
    %903 = vmatpush2.msra.mxu0 0.0
    %904 = vmatprep.mubr.f32.mxu0 0.0
    %905 = vmatmul.mubr.f32.gmra.mxu0 0.0
    %v906 = vpop.f32.mrf.mxu0
    %v907 = vadd.f32 0.0, %v906
    %v908 = vpop.f32.mrf.mxu0
    %v909 = vadd.f32 0.0, %v908
    %910 = vdwg.mxu0
    %v911 = vadd.f32 %v761, %v836
    %v912 = vadd.f32 %v762, %v838
    %v913 = vadd.f32 %v763, %v907
    %v914 = vadd.f32 %v764, %v909
    %915 = vmatprep.subr.mxu0 %v758
    %916 = vmatpush1.msra.mxu0 %v757
    %917 = vmatprep.subr.mxu0 %v754
    %918 = vmatpush1.msra.mxu0 %v753
    %919 = vmatprep.subr.mxu0 %v750
    %920 = vmatpush1.msra.mxu0 %v749
    %921 = vmatprep.subr.mxu0 %v746
    %922 = vmatpush1.msra.mxu0 %v745
    %923 = vmatprep.subr.mxu0 %v742
    %924 = vmatpush1.msra.mxu0 %v741
    %925 = vmatprep.subr.mxu0 %v738
    %926 = vmatpush1.msra.mxu0 %v737
    %927 = vmatprep.subr.mxu0 %v734
    %928 = vmatpush1.msra.mxu0 %v733
    %929 = vmatprep.subr.mxu0 %v730
    %930 = vmatpush1.msra.mxu0 %v729
    %931 = vmatprep.subr.mxu0 %v726
    %932 = vmatpush1.msra.mxu0 %v725
    %933 = vmatprep.subr.mxu0 %v722
    %934 = vmatpush1.msra.mxu0 %v721
    %935 = vmatprep.subr.mxu0 %v718
    %936 = vmatpush1.msra.mxu0 %v717
    %937 = vmatprep.subr.mxu0 %v714
    %938 = vmatpush1.msra.mxu0 %v713
    %939 = vmatprep.subr.mxu0 %v710
    %940 = vmatpush1.msra.mxu0 %v709
    %941 = vmatprep.subr.mxu0 %v706
    %942 = vmatpush1.msra.mxu0 %v705
    %943 = vmatprep.subr.mxu0 %v702
    %944 = vmatpush1.msra.mxu0 %v701
    %945 = vmatprep.subr.mxu0 %v698
    %946 = vmatpush1.msra.mxu0 %v697
    %947 = vmatprep.subr.mxu0 0.0
    %948 = vmatpush2.msra.mxu0 0.0
    %949 = vmatprep.subr.mxu0 0.0
    %950 = vmatpush2.msra.mxu0 0.0
    %951 = vmatprep.subr.mxu0 0.0
    %952 = vmatpush2.msra.mxu0 0.0
    %953 = vmatprep.subr.mxu0 0.0
    %954 = vmatpush2.msra.mxu0 0.0
    %955 = vmatprep.subr.mxu0 0.0
    %956 = vmatpush2.msra.mxu0 0.0
    %957 = vmatprep.subr.mxu0 0.0
    %958 = vmatpush2.msra.mxu0 0.0
    %959 = vmatprep.subr.mxu0 0.0
    %960 = vmatpush2.msra.mxu0 0.0
    %961 = vmatprep.subr.mxu0 0.0
    %962 = vmatpush2.msra.mxu0 0.0
    %963 = vmatprep.subr.mxu0 0.0
    %964 = vmatpush2.msra.mxu0 0.0
    %965 = vmatprep.subr.mxu0 0.0
    %966 = vmatpush2.msra.mxu0 0.0
    %967 = vmatprep.subr.mxu0 0.0
    %968 = vmatpush2.msra.mxu0 0.0
    %969 = vmatprep.subr.mxu0 0.0
    %970 = vmatpush2.msra.mxu0 0.0
    %971 = vmatprep.subr.mxu0 0.0
    %972 = vmatpush2.msra.mxu0 0.0
    %973 = vmatprep.subr.mxu0 0.0
    %974 = vmatpush2.msra.mxu0 0.0
    %975 = vmatprep.subr.mxu0 0.0
    %976 = vmatpush2.msra.mxu0 0.0
    %977 = vmatprep.subr.mxu0 0.0
    %978 = vmatpush2.msra.mxu0 0.0
    %979 = vmatprep.mubr.f32.mxu0 0.0
    %980 = vmatmul.mubr.f32.gmra.mxu0 0.0
    %v981 = vpop.f32.mrf.mxu0
    %v982 = vadd.f32 0.0, %v981
    %v983 = vpop.f32.mrf.mxu0
    %v984 = vadd.f32 0.0, %v983
    %985 = vdwg.mxu0
    %986 = vmatprep.subr.mxu0 %v760
    %987 = vmatpush1.msra.mxu0 %v759
    %988 = vmatprep.subr.mxu0 %v756
    %989 = vmatpush1.msra.mxu0 %v755
    %990 = vmatprep.subr.mxu0 %v752
    %991 = vmatpush1.msra.mxu0 %v751
    %992 = vmatprep.subr.mxu0 %v748
    %993 = vmatpush1.msra.mxu0 %v747
    %994 = vmatprep.subr.mxu0 %v744
    %995 = vmatpush1.msra.mxu0 %v743
    %996 = vmatprep.subr.mxu0 %v740
    %997 = vmatpush1.msra.mxu0 %v739
    %998 = vmatprep.subr.mxu0 %v736
    %999 = vmatpush1.msra.mxu0 %v735
    %1000 = vmatprep.subr.mxu0 %v732
    %1001 = vmatpush1.msra.mxu0 %v731
    %1002 = vmatprep.subr.mxu0 %v728
    %1003 = vmatpush1.msra.mxu0 %v727
    %1004 = vmatprep.subr.mxu0 %v724
    %1005 = vmatpush1.msra.mxu0 %v723
    %1006 = vmatprep.subr.mxu0 %v720
    %1007 = vmatpush1.msra.mxu0 %v719
    %1008 = vmatprep.subr.mxu0 %v716
    %1009 = vmatpush1.msra.mxu0 %v715
    %1010 = vmatprep.subr.mxu0 %v712
    %1011 = vmatpush1.msra.mxu0 %v711
    %1012 = vmatprep.subr.mxu0 %v708
    %1013 = vmatpush1.msra.mxu0 %v707
    %1014 = vmatprep.subr.mxu0 %v704
    %1015 = vmatpush1.msra.mxu0 %v703
    %1016 = vmatprep.subr.mxu0 %v700
    %1017 = vmatpush1.msra.mxu0 %v699
    %1018 = vmatprep.subr.mxu0 0.0
    %1019 = vmatpush2.msra.mxu0 0.0
    %1020 = vmatprep.subr.mxu0 0.0
    %1021 = vmatpush2.msra.mxu0 0.0
    %1022 = vmatprep.subr.mxu0 0.0
    %1023 = vmatpush2.msra.mxu0 0.0
    %1024 = vmatprep.subr.mxu0 0.0
    %1025 = vmatpush2.msra.mxu0 0.0
    %1026 = vmatprep.subr.mxu0 0.0
    %1027 = vmatpush2.msra.mxu0 0.0
    %1028 = vmatprep.subr.mxu0 0.0
    %1029 = vmatpush2.msra.mxu0 0.0
    %1030 = vmatprep.subr.mxu0 0.0
    %1031 = vmatpush2.msra.mxu0 0.0
    %1032 = vmatprep.subr.mxu0 0.0
    %1033 = vmatpush2.msra.mxu0 0.0
    %1034 = vmatprep.subr.mxu0 0.0
    %1035 = vmatpush2.msra.mxu0 0.0
    %1036 = vmatprep.subr.mxu0 0.0
    %1037 = vmatpush2.msra.mxu0 0.0
    %1038 = vmatprep.subr.mxu0 0.0
    %1039 = vmatpush2.msra.mxu0 0.0
    %1040 = vmatprep.subr.mxu0 0.0
    %1041 = vmatpush2.msra.mxu0 0.0
    %1042 = vmatprep.subr.mxu0 0.0
    %1043 = vmatpush2.msra.mxu0 0.0
    %1044 = vmatprep.subr.mxu0 0.0
    %1045 = vmatpush2.msra.mxu0 0.0
    %1046 = vmatprep.subr.mxu0 0.0
    %1047 = vmatpush2.msra.mxu0 0.0
    %1048 = vmatprep.subr.mxu0 0.0
    %1049 = vmatpush2.msra.mxu0 0.0
    %1050 = vmatprep.mubr.f32.mxu0 0.0
    %1051 = vmatmul.mubr.f32.gmra.mxu0 0.0
    %v1052 = vpop.f32.mrf.mxu0
    %v1053 = vadd.f32 0.0, %v1052
    %v1054 = vpop.f32.mrf.mxu0
    %v1055 = vadd.f32 0.0, %v1054
    %1056 = vdwg.mxu0
    %v1061 = vrot.slane %v982, 4
    %v1062 = vrot.slane %v984, 4
    %v1063 = vrot.slane %v1053, 4
    %v1064 = vrot.slane %v1055, 4
    %v1069 = vadd.f32 %v765, %v1061
    %v1070 = vadd.f32 %v766, %v1062
    %v1071 = vadd.f32 %v767, %v1063
    %v1072 = vadd.f32 %v768, %v1064
    %v1073 = vxor.u32 %v911, 2147483648
    %v1074 = vxor.u32 %v912, 2147483648
    %v1075 = vxor.u32 %v914, 2147483648
    %v1076 = vmul.f32 %v1073, 1.442695
    %v1077 = vpow.pop %v1076
    %v1078 = vmul.f32 %v1074, 1.442695
    %v1079 = vpow.pop %v1078
    %v1080 = vmul.f32 %v1075, 1.442695
    %v1081 = vpow.pop %v1080
    %v1082 = vadd.f32 %v1077, 1.0
    %v1083 = vadd.f32 %v1079, 1.0
    %v1084 = vadd.f32 %v1081, 1.0
    %v1085 = vrcp.pop %v1082
    %v1086 = vmul.f32 1.0, %v1085
    %v1087 = vrcp.pop %v1083
    %v1088 = vmul.f32 1.0, %v1087
    %v1089 = vrcp.pop %v1084
    %v1090 = vmul.f32 1.0, %v1089
    %v1091 = vxor.u32 %v1069, 2147483648
    %v1092 = vxor.u32 %v1070, 2147483648
    %v1093 = vxor.u32 %v1072, 2147483648
    %v1094 = vmul.f32 %v1091, 1.442695
    %v1095 = vpow.pop %v1094
    %v1096 = vmul.f32 %v1092, 1.442695
    %v1097 = vpow.pop %v1096
    %v1098 = vmul.f32 %v1093, 1.442695
    %v1099 = vpow.pop %v1098
    %v1100 = vadd.f32 %v1095, 1.0
    %v1101 = vadd.f32 %v1097, 1.0
    %v1102 = vadd.f32 %v1099, 1.0
    %v1103 = vrcp.pop %v1100
    %v1104 = vmul.f32 1.0, %v1103
    %v1105 = vrcp.pop %v1101
    %v1106 = vmul.f32 1.0, %v1105
    %v1107 = vrcp.pop %v1102
    %v1108 = vmul.f32 1.0, %v1107
    %v1109 = vtanh.pop %v913
    %v1110 = vtanh.pop %v1071
    %v1111 = vmul.f32 %v1088, 0.0
    %v1112 = vmul.f32 %v1086, %v1109
    %v1113 = vadd.f32 %v1111, %v1112
    %v1114 = vmul.f32 %v1106, 0.0
    %v1115 = vmul.f32 %v1104, %v1110
    %v1116 = vadd.f32 %v1114, %v1115
    %v1117 = vtanh.pop %v1113
    %v1118 = vmul.f32 %v1090, %v1117
    %v1119 = vtanh.pop %v1116
    %v1120 = vmul.f32 %v1108, %v1119
    %1121 = vst [vmem:[#allocation3] sm:$0xf] %v1118
    %s1122 = scalar_lea.vmem [#allocation4], 28
    %1123 = vst [vmem:[%s1122 - $0x4] sm:$0xf0] %v1120
    %v1124 = vld [vmem:[#allocation2] sm:$0xf0]
    %v1125 = vld [vmem:[#allocation2 + $0x8] sm:$0xf0]
    %v1126 = vld [vmem:[#allocation2 + $0x10] sm:$0xf0]
    %v1127 = vld [vmem:[#allocation2 + $0x18] sm:$0xf0]
    %v1128 = vld [vmem:[#allocation2 + $0xe0] sm:$0xf]
    %v1129 = vld [vmem:[#allocation2 + $0xe8] sm:$0xf]
    %v1130 = vld [vmem:[#allocation2 + $0xf0] sm:$0xf]
    %v1131 = vld [vmem:[#allocation2 + $0xf8] sm:$0xf]
    %1132 = vmatprep.subr.mxu0 %v694
    %1133 = vmatpush1.msra.mxu0 %v693
    %1134 = vmatprep.subr.mxu0 %v690
    %1135 = vmatpush1.msra.mxu0 %v689
    %1136 = vmatprep.subr.mxu0 %v686
    %1137 = vmatpush1.msra.mxu0 %v685
    %1138 = vmatprep.subr.mxu0 %v682
    %1139 = vmatpush1.msra.mxu0 %v681
    %1140 = vmatprep.subr.mxu0 %v678
    %1141 = vmatpush1.msra.mxu0 %v677
    %1142 = vmatprep.subr.mxu0 %v674
    %1143 = vmatpush1.msra.mxu0 %v673
    %1144 = vmatprep.subr.mxu0 %v670
    %1145 = vmatpush1.msra.mxu0 %v669
    %1146 = vmatprep.subr.mxu0 %v666
    %1147 = vmatpush1.msra.mxu0 %v665
    %1148 = vmatprep.subr.mxu0 %v662
    %1149 = vmatpush1.msra.mxu0 %v661
    %1150 = vmatprep.subr.mxu0 %v658
    %1151 = vmatpush1.msra.mxu0 %v657
    %1152 = vmatprep.subr.mxu0 %v654
    %1153 = vmatpush1.msra.mxu0 %v653
    %1154 = vmatprep.subr.mxu0 %v650
    %1155 = vmatpush1.msra.mxu0 %v649
    %1156 = vmatprep.subr.mxu0 %v646
    %1157 = vmatpush1.msra.mxu0 %v645
    %1158 = vmatprep.subr.mxu0 %v642
    %1159 = vmatpush1.msra.mxu0 %v641
    %1160 = vmatprep.subr.mxu0 %v638
    %1161 = vmatpush1.msra.mxu0 %v637
    %1162 = vmatprep.subr.mxu0 %v634
    %1163 = vmatpush1.msra.mxu0 %v633
    %1164 = vmatprep.subr.mxu0 0.0
    %1165 = vmatpush2.msra.mxu0 0.0
    %1166 = vmatprep.subr.mxu0 0.0
    %1167 = vmatpush2.msra.mxu0 0.0
    %1168 = vmatprep.subr.mxu0 0.0
    %1169 = vmatpush2.msra.mxu0 0.0
    %1170 = vmatprep.subr.mxu0 0.0
    %1171 = vmatpush2.msra.mxu0 0.0
    %1172 = vmatprep.subr.mxu0 0.0
    %1173 = vmatpush2.msra.mxu0 0.0
    %1174 = vmatprep.subr.mxu0 0.0
    %1175 = vmatpush2.msra.mxu0 0.0
    %1176 = vmatprep.subr.mxu0 0.0
    %1177 = vmatpush2.msra.mxu0 0.0
    %1178 = vmatprep.subr.mxu0 0.0
    %1179 = vmatpush2.msra.mxu0 0.0
    %1180 = vmatprep.subr.mxu0 0.0
    %1181 = vmatpush2.msra.mxu0 0.0
    %1182 = vmatprep.subr.mxu0 0.0
    %1183 = vmatpush2.msra.mxu0 0.0
    %1184 = vmatprep.subr.mxu0 0.0
    %1185 = vmatpush2.msra.mxu0 0.0
    %1186 = vmatprep.subr.mxu0 0.0
    %1187 = vmatpush2.msra.mxu0 0.0
    %1188 = vmatprep.subr.mxu0 0.0
    %1189 = vmatpush2.msra.mxu0 0.0
    %1190 = vmatprep.subr.mxu0 0.0
    %1191 = vmatpush2.msra.mxu0 0.0
    %1192 = vmatprep.subr.mxu0 0.0
    %1193 = vmatpush2.msra.mxu0 0.0
    %1194 = vmatprep.subr.mxu0 0.0
    %1195 = vmatpush2.msra.mxu0 0.0
    %1196 = vmatprep.mubr.f32.mxu0 0.0
    %1197 = vmatmul.mubr.f32.gmra.mxu0 %v1118
    %v1198 = vpop.f32.mrf.mxu0
    %v1199 = vadd.f32 0.0, %v1198
    %v1200 = vpop.f32.mrf.mxu0
    %v1201 = vadd.f32 0.0, %v1200
    %1202 = vdwg.mxu0
    %1203 = vmatprep.subr.mxu0 %v696
    %1204 = vmatpush1.msra.mxu0 %v695
    %1205 = vmatprep.subr.mxu0 %v692
    %1206 = vmatpush1.msra.mxu0 %v691
    %1207 = vmatprep.subr.mxu0 %v688
    %1208 = vmatpush1.msra.mxu0 %v687
    %1209 = vmatprep.subr.mxu0 %v684
    %1210 = vmatpush1.msra.mxu0 %v683
    %1211 = vmatprep.subr.mxu0 %v680
    %1212 = vmatpush1.msra.mxu0 %v679
    %1213 = vmatprep.subr.mxu0 %v676
    %1214 = vmatpush1.msra.mxu0 %v675
    %1215 = vmatprep.subr.mxu0 %v672
    %1216 = vmatpush1.msra.mxu0 %v671
    %1217 = vmatprep.subr.mxu0 %v668
    %1218 = vmatpush1.msra.mxu0 %v667
    %1219 = vmatprep.subr.mxu0 %v664
    %1220 = vmatpush1.msra.mxu0 %v663
    %1221 = vmatprep.subr.mxu0 %v660
    %1222 = vmatpush1.msra.mxu0 %v659
    %1223 = vmatprep.subr.mxu0 %v656
    %1224 = vmatpush1.msra.mxu0 %v655
    %1225 = vmatprep.subr.mxu0 %v652
    %1226 = vmatpush1.msra.mxu0 %v651
    %1227 = vmatprep.subr.mxu0 %v648
    %1228 = vmatpush1.msra.mxu0 %v647
    %1229 = vmatprep.subr.mxu0 %v644
    %1230 = vmatpush1.msra.mxu0 %v643
    %1231 = vmatprep.subr.mxu0 %v640
    %1232 = vmatpush1.msra.mxu0 %v639
    %1233 = vmatprep.subr.mxu0 %v636
    %1234 = vmatpush1.msra.mxu0 %v635
    %1235 = vmatprep.subr.mxu0 0.0
    %1236 = vmatpush2.msra.mxu0 0.0
    %1237 = vmatprep.subr.mxu0 0.0
    %1238 = vmatpush2.msra.mxu0 0.0
    %1239 = vmatprep.subr.mxu0 0.0
    %1240 = vmatpush2.msra.mxu0 0.0
    %1241 = vmatprep.subr.mxu0 0.0
    %1242 = vmatpush2.msra.mxu0 0.0
    %1243 = vmatprep.subr.mxu0 0.0
    %1244 = vmatpush2.msra.mxu0 0.0
    %1245 = vmatprep.subr.mxu0 0.0
    %1246 = vmatpush2.msra.mxu0 0.0
    %1247 = vmatprep.subr.mxu0 0.0
    %1248 = vmatpush2.msra.mxu0 0.0
    %1249 = vmatprep.subr.mxu0 0.0
    %1250 = vmatpush2.msra.mxu0 0.0
    %1251 = vmatprep.subr.mxu0 0.0
    %1252 = vmatpush2.msra.mxu0 0.0
    %1253 = vmatprep.subr.mxu0 0.0
    %1254 = vmatpush2.msra.mxu0 0.0
    %1255 = vmatprep.subr.mxu0 0.0
    %1256 = vmatpush2.msra.mxu0 0.0
    %1257 = vmatprep.subr.mxu0 0.0
    %1258 = vmatpush2.msra.mxu0 0.0
    %1259 = vmatprep.subr.mxu0 0.0
    %1260 = vmatpush2.msra.mxu0 0.0
    %1261 = vmatprep.subr.mxu0 0.0
    %1262 = vmatpush2.msra.mxu0 0.0
    %1263 = vmatprep.subr.mxu0 0.0
    %1264 = vmatpush2.msra.mxu0 0.0
    %1265 = vmatprep.subr.mxu0 0.0
    %1266 = vmatpush2.msra.mxu0 0.0
    %1267 = vmatprep.mubr.f32.mxu0 0.0
    %1268 = vmatmul.mubr.f32.gmra.mxu0 %v1118
    %v1269 = vpop.f32.mrf.mxu0
    %v1270 = vadd.f32 0.0, %v1269
    %v1271 = vpop.f32.mrf.mxu0
    %v1272 = vadd.f32 0.0, %v1271
    %1273 = vdwg.mxu0
    %v1278 = vrot.slane %v1199, 4
    %v1279 = vrot.slane %v1201, 4
    %v1280 = vrot.slane %v1270, 4
    %v1281 = vrot.slane %v1272, 4
    %v1286 = vadd.f32 %v1124, %v1278
    %v1287 = vadd.f32 %v1125, %v1279
    %v1288 = vadd.f32 %v1126, %v1280
    %v1289 = vadd.f32 %v1127, %v1281
    %v1291 = vrot.slane %v1120, 4
    %1293 = vmatprep.subr.mxu0 %v758
    %1294 = vmatpush1.msra.mxu0 %v757
    %1295 = vmatprep.subr.mxu0 %v754
    %1296 = vmatpush1.msra.mxu0 %v753
    %1297 = vmatprep.subr.mxu0 %v750
    %1298 = vmatpush1.msra.mxu0 %v749
    %1299 = vmatprep.subr.mxu0 %v746
    %1300 = vmatpush1.msra.mxu0 %v745
    %1301 = vmatprep.subr.mxu0 %v742
    %1302 = vmatpush1.msra.mxu0 %v741
    %1303 = vmatprep.subr.mxu0 %v738
    %1304 = vmatpush1.msra.mxu0 %v737
    %1305 = vmatprep.subr.mxu0 %v734
    %1306 = vmatpush1.msra.mxu0 %v733
    %1307 = vmatprep.subr.mxu0 %v730
    %1308 = vmatpush1.msra.mxu0 %v729
    %1309 = vmatprep.subr.mxu0 %v726
    %1310 = vmatpush1.msra.mxu0 %v725
    %1311 = vmatprep.subr.mxu0 %v722
    %1312 = vmatpush1.msra.mxu0 %v721
    %1313 = vmatprep.subr.mxu0 %v718
    %1314 = vmatpush1.msra.mxu0 %v717
    %1315 = vmatprep.subr.mxu0 %v714
    %1316 = vmatpush1.msra.mxu0 %v713
    %1317 = vmatprep.subr.mxu0 %v710
    %1318 = vmatpush1.msra.mxu0 %v709
    %1319 = vmatprep.subr.mxu0 %v706
    %1320 = vmatpush1.msra.mxu0 %v705
    %1321 = vmatprep.subr.mxu0 %v702
    %1322 = vmatpush1.msra.mxu0 %v701
    %1323 = vmatprep.subr.mxu0 %v698
    %1324 = vmatpush1.msra.mxu0 %v697
    %1325 = vmatprep.subr.mxu0 0.0
    %1326 = vmatpush2.msra.mxu0 0.0
    %1327 = vmatprep.subr.mxu0 0.0
    %1328 = vmatpush2.msra.mxu0 0.0
    %1329 = vmatprep.subr.mxu0 0.0
    %1330 = vmatpush2.msra.mxu0 0.0
    %1331 = vmatprep.subr.mxu0 0.0
    %1332 = vmatpush2.msra.mxu0 0.0
    %1333 = vmatprep.subr.mxu0 0.0
    %1334 = vmatpush2.msra.mxu0 0.0
    %1335 = vmatprep.subr.mxu0 0.0
    %1336 = vmatpush2.msra.mxu0 0.0
    %1337 = vmatprep.subr.mxu0 0.0
    %1338 = vmatpush2.msra.mxu0 0.0
    %1339 = vmatprep.subr.mxu0 0.0
    %1340 = vmatpush2.msra.mxu0 0.0
    %1341 = vmatprep.subr.mxu0 0.0
    %1342 = vmatpush2.msra.mxu0 0.0
    %1343 = vmatprep.subr.mxu0 0.0
    %1344 = vmatpush2.msra.mxu0 0.0
    %1345 = vmatprep.subr.mxu0 0.0
    %1346 = vmatpush2.msra.mxu0 0.0
    %1347 = vmatprep.subr.mxu0 0.0
    %1348 = vmatpush2.msra.mxu0 0.0
    %1349 = vmatprep.subr.mxu0 0.0
    %1350 = vmatpush2.msra.mxu0 0.0
    %1351 = vmatprep.subr.mxu0 0.0
    %1352 = vmatpush2.msra.mxu0 0.0
    %1353 = vmatprep.subr.mxu0 0.0
    %1354 = vmatpush2.msra.mxu0 0.0
    %1355 = vmatprep.subr.mxu0 0.0
    %1356 = vmatpush2.msra.mxu0 0.0
    %1357 = vmatprep.mubr.f32.mxu0 0.0
    %1358 = vmatmul.mubr.f32.gmra.mxu0 %v1291
    %v1359 = vpop.f32.mrf.mxu0
    %v1360 = vadd.f32 0.0, %v1359
    %v1361 = vpop.f32.mrf.mxu0
    %v1362 = vadd.f32 0.0, %v1361
    %1363 = vdwg.mxu0
    %1364 = vmatprep.subr.mxu0 %v760
    %1365 = vmatpush1.msra.mxu0 %v759
    %1366 = vmatprep.subr.mxu0 %v756
    %1367 = vmatpush1.msra.mxu0 %v755
    %1368 = vmatprep.subr.mxu0 %v752
    %1369 = vmatpush1.msra.mxu0 %v751
    %1370 = vmatprep.subr.mxu0 %v748
    %1371 = vmatpush1.msra.mxu0 %v747
    %1372 = vmatprep.subr.mxu0 %v744
    %1373 = vmatpush1.msra.mxu0 %v743
    %1374 = vmatprep.subr.mxu0 %v740
    %1375 = vmatpush1.msra.mxu0 %v739
    %1376 = vmatprep.subr.mxu0 %v736
    %1377 = vmatpush1.msra.mxu0 %v735
    %1378 = vmatprep.subr.mxu0 %v732
    %1379 = vmatpush1.msra.mxu0 %v731
    %1380 = vmatprep.subr.mxu0 %v728
    %1381 = vmatpush1.msra.mxu0 %v727
    %1382 = vmatprep.subr.mxu0 %v724
    %1383 = vmatpush1.msra.mxu0 %v723
    %1384 = vmatprep.subr.mxu0 %v720
    %1385 = vmatpush1.msra.mxu0 %v719
    %1386 = vmatprep.subr.mxu0 %v716
    %1387 = vmatpush1.msra.mxu0 %v715
    %1388 = vmatprep.subr.mxu0 %v712
    %1389 = vmatpush1.msra.mxu0 %v711
    %1390 = vmatprep.subr.mxu0 %v708
    %1391 = vmatpush1.msra.mxu0 %v707
    %1392 = vmatprep.subr.mxu0 %v704
    %1393 = vmatpush1.msra.mxu0 %v703
    %1394 = vmatprep.subr.mxu0 %v700
    %1395 = vmatpush1.msra.mxu0 %v699
    %1396 = vmatprep.subr.mxu0 0.0
    %1397 = vmatpush2.msra.mxu0 0.0
    %1398 = vmatprep.subr.mxu0 0.0
    %1399 = vmatpush2.msra.mxu0 0.0
    %1400 = vmatprep.subr.mxu0 0.0
    %1401 = vmatpush2.msra.mxu0 0.0
    %1402 = vmatprep.subr.mxu0 0.0
    %1403 = vmatpush2.msra.mxu0 0.0
    %1404 = vmatprep.subr.mxu0 0.0
    %1405 = vmatpush2.msra.mxu0 0.0
    %1406 = vmatprep.subr.mxu0 0.0
    %1407 = vmatpush2.msra.mxu0 0.0
    %1408 = vmatprep.subr.mxu0 0.0
    %1409 = vmatpush2.msra.mxu0 0.0
    %1410 = vmatprep.subr.mxu0 0.0
    %1411 = vmatpush2.msra.mxu0 0.0
    %1412 = vmatprep.subr.mxu0 0.0
    %1413 = vmatpush2.msra.mxu0 0.0
    %1414 = vmatprep.subr.mxu0 0.0
    %1415 = vmatpush2.msra.mxu0 0.0
    %1416 = vmatprep.subr.mxu0 0.0
    %1417 = vmatpush2.msra.mxu0 0.0
    %1418 = vmatprep.subr.mxu0 0.0
    %1419 = vmatpush2.msra.mxu0 0.0
    %1420 = vmatprep.subr.mxu0 0.0
    %1421 = vmatpush2.msra.mxu0 0.0
    %1422 = vmatprep.subr.mxu0 0.0
    %1423 = vmatpush2.msra.mxu0 0.0
    %1424 = vmatprep.subr.mxu0 0.0
    %1425 = vmatpush2.msra.mxu0 0.0
    %1426 = vmatprep.subr.mxu0 0.0
    %1427 = vmatpush2.msra.mxu0 0.0
    %1428 = vmatprep.mubr.f32.mxu0 0.0
    %1429 = vmatmul.mubr.f32.gmra.mxu0 %v1291
    %v1430 = vpop.f32.mrf.mxu0
    %v1431 = vadd.f32 0.0, %v1430
    %v1432 = vpop.f32.mrf.mxu0
    %v1433 = vadd.f32 0.0, %v1432
    %1434 = vdwg.mxu0
    %v1435 = vadd.f32 %v1128, %v1360
    %v1436 = vadd.f32 %v1129, %v1362
    %v1437 = vadd.f32 %v1130, %v1431
    %v1438 = vadd.f32 %v1131, %v1433
    %v1439 = vxor.u32 %v1286, 2147483648
    %v1440 = vxor.u32 %v1287, 2147483648
    %v1441 = vxor.u32 %v1289, 2147483648
    %v1442 = vmul.f32 %v1439, 1.442695
    %v1443 = vpow.pop %v1442
    %v1444 = vmul.f32 %v1440, 1.442695
    %v1445 = vpow.pop %v1444
    %v1446 = vmul.f32 %v1441, 1.442695
    %v1447 = vpow.pop %v1446
    %v1448 = vadd.f32 %v1443, 1.0
    %v1449 = vadd.f32 %v1445, 1.0
    %v1450 = vadd.f32 %v1447, 1.0
    %v1451 = vrcp.pop %v1448
    %v1452 = vmul.f32 1.0, %v1451
    %v1453 = vrcp.pop %v1449
    %v1454 = vmul.f32 1.0, %v1453
    %v1455 = vrcp.pop %v1450
    %v1456 = vmul.f32 1.0, %v1455
    %v1457 = vxor.u32 %v1435, 2147483648
    %v1458 = vxor.u32 %v1436, 2147483648
    %v1459 = vxor.u32 %v1438, 2147483648
    %v1460 = vmul.f32 %v1457, 1.442695
    %v1461 = vpow.pop %v1460
    %v1462 = vmul.f32 %v1458, 1.442695
    %v1463 = vpow.pop %v1462
    %v1464 = vmul.f32 %v1459, 1.442695
    %v1465 = vpow.pop %v1464
    %v1466 = vadd.f32 %v1461, 1.0
    %v1467 = vadd.f32 %v1463, 1.0
    %v1468 = vadd.f32 %v1465, 1.0
    %v1469 = vrcp.pop %v1466
    %v1470 = vmul.f32 1.0, %v1469
    %v1471 = vrcp.pop %v1467
    %v1472 = vmul.f32 1.0, %v1471
    %v1473 = vrcp.pop %v1468
    %v1474 = vmul.f32 1.0, %v1473
    %v1475 = vtanh.pop %v1288
    %v1476 = vtanh.pop %v1437
    %v1478 = vrot.slane %v1113, 4
    %v1480 = vmul.f32 %v1454, %v1478
    %v1481 = vmul.f32 %v1452, %v1475
    %v1482 = vadd.f32 %v1480, %v1481
    %v1484 = vrot.slane %v1116, 4
    %v1486 = vmul.f32 %v1472, %v1484
    %v1487 = vmul.f32 %v1470, %v1476
    %v1488 = vadd.f32 %v1486, %v1487
    %v1489 = vtanh.pop %v1482
    %v1490 = vmul.f32 %v1456, %v1489
    %v1491 = vtanh.pop %v1488
    %v1492 = vmul.f32 %v1474, %v1491
    %s1493 = scalar_lea.vmem [#allocation3], 4
    %1494 = vst [vmem:[%s1493 - $0x4] sm:$0xf0] %v1490
    %s1495 = scalar_lea.vmem [#allocation4], 24
    %1496 = vst [vmem:[%s1495] sm:$0xf] %v1492
    %v1497 = vld [vmem:[#allocation2 + $0x40] sm:$0xf]
    %v1498 = vld [vmem:[#allocation2 + $0x48] sm:$0xf]
    %v1499 = vld [vmem:[#allocation2 + $0x50] sm:$0xf]
    %v1500 = vld [vmem:[#allocation2 + $0x58] sm:$0xf]
    %v1501 = vld [vmem:[#allocation2 + $0xa0] sm:$0xf0]
    %v1502 = vld [vmem:[#allocation2 + $0xa8] sm:$0xf0]
    %v1503 = vld [vmem:[#allocation2 + $0xb0] sm:$0xf0]
    %v1504 = vld [vmem:[#allocation2 + $0xb8] sm:$0xf0]
    %v1506 = vrot.slane %v1490, 4
    %1508 = vmatprep.subr.mxu0 %v694
    %1509 = vmatpush1.msra.mxu0 %v693
    %1510 = vmatprep.subr.mxu0 %v690
    %1511 = vmatpush1.msra.mxu0 %v689
    %1512 = vmatprep.subr.mxu0 %v686
    %1513 = vmatpush1.msra.mxu0 %v685
    %1514 = vmatprep.subr.mxu0 %v682
    %1515 = vmatpush1.msra.mxu0 %v681
    %1516 = vmatprep.subr.mxu0 %v678
    %1517 = vmatpush1.msra.mxu0 %v677
    %1518 = vmatprep.subr.mxu0 %v674
    %1519 = vmatpush1.msra.mxu0 %v673
    %1520 = vmatprep.subr.mxu0 %v670
    %1521 = vmatpush1.msra.mxu0 %v669
    %1522 = vmatprep.subr.mxu0 %v666
    %1523 = vmatpush1.msra.mxu0 %v665
    %1524 = vmatprep.subr.mxu0 %v662
    %1525 = vmatpush1.msra.mxu0 %v661
    %1526 = vmatprep.subr.mxu0 %v658
    %1527 = vmatpush1.msra.mxu0 %v657
    %1528 = vmatprep.subr.mxu0 %v654
    %1529 = vmatpush1.msra.mxu0 %v653
    %1530 = vmatprep.subr.mxu0 %v650
    %1531 = vmatpush1.msra.mxu0 %v649
    %1532 = vmatprep.subr.mxu0 %v646
    %1533 = vmatpush1.msra.mxu0 %v645
    %1534 = vmatprep.subr.mxu0 %v642
    %1535 = vmatpush1.msra.mxu0 %v641
    %1536 = vmatprep.subr.mxu0 %v638
    %1537 = vmatpush1.msra.mxu0 %v637
    %1538 = vmatprep.subr.mxu0 %v634
    %1539 = vmatpush1.msra.mxu0 %v633
    %1540 = vmatprep.subr.mxu0 0.0
    %1541 = vmatpush2.msra.mxu0 0.0
    %1542 = vmatprep.subr.mxu0 0.0
    %1543 = vmatpush2.msra.mxu0 0.0
    %1544 = vmatprep.subr.mxu0 0.0
    %1545 = vmatpush2.msra.mxu0 0.0
    %1546 = vmatprep.subr.mxu0 0.0
    %1547 = vmatpush2.msra.mxu0 0.0
    %1548 = vmatprep.subr.mxu0 0.0
    %1549 = vmatpush2.msra.mxu0 0.0
    %1550 = vmatprep.subr.mxu0 0.0
    %1551 = vmatpush2.msra.mxu0 0.0
    %1552 = vmatprep.subr.mxu0 0.0
    %1553 = vmatpush2.msra.mxu0 0.0
    %1554 = vmatprep.subr.mxu0 0.0
    %1555 = vmatpush2.msra.mxu0 0.0
    %1556 = vmatprep.subr.mxu0 0.0
    %1557 = vmatpush2.msra.mxu0 0.0
    %1558 = vmatprep.subr.mxu0 0.0
    %1559 = vmatpush2.msra.mxu0 0.0
    %1560 = vmatprep.subr.mxu0 0.0
    %1561 = vmatpush2.msra.mxu0 0.0
    %1562 = vmatprep.subr.mxu0 0.0
    %1563 = vmatpush2.msra.mxu0 0.0
    %1564 = vmatprep.subr.mxu0 0.0
    %1565 = vmatpush2.msra.mxu0 0.0
    %1566 = vmatprep.subr.mxu0 0.0
    %1567 = vmatpush2.msra.mxu0 0.0
    %1568 = vmatprep.subr.mxu0 0.0
    %1569 = vmatpush2.msra.mxu0 0.0
    %1570 = vmatprep.subr.mxu0 0.0
    %1571 = vmatpush2.msra.mxu0 0.0
    %1572 = vmatprep.mubr.f32.mxu0 0.0
    %1573 = vmatmul.mubr.f32.gmra.mxu0 %v1506
    %v1574 = vpop.f32.mrf.mxu0
    %v1575 = vadd.f32 0.0, %v1574
    %v1576 = vpop.f32.mrf.mxu0
    %v1577 = vadd.f32 0.0, %v1576
    %1578 = vdwg.mxu0
    %1579 = vmatprep.subr.mxu0 %v696
    %1580 = vmatpush1.msra.mxu0 %v695
    %1581 = vmatprep.subr.mxu0 %v692
    %1582 = vmatpush1.msra.mxu0 %v691
    %1583 = vmatprep.subr.mxu0 %v688
    %1584 = vmatpush1.msra.mxu0 %v687
    %1585 = vmatprep.subr.mxu0 %v684
    %1586 = vmatpush1.msra.mxu0 %v683
    %1587 = vmatprep.subr.mxu0 %v680
    %1588 = vmatpush1.msra.mxu0 %v679
    %1589 = vmatprep.subr.mxu0 %v676
    %1590 = vmatpush1.msra.mxu0 %v675
    %1591 = vmatprep.subr.mxu0 %v672
    %1592 = vmatpush1.msra.mxu0 %v671
    %1593 = vmatprep.subr.mxu0 %v668
    %1594 = vmatpush1.msra.mxu0 %v667
    %1595 = vmatprep.subr.mxu0 %v664
    %1596 = vmatpush1.msra.mxu0 %v663
    %1597 = vmatprep.subr.mxu0 %v660
    %1598 = vmatpush1.msra.mxu0 %v659
    %1599 = vmatprep.subr.mxu0 %v656
    %1600 = vmatpush1.msra.mxu0 %v655
    %1601 = vmatprep.subr.mxu0 %v652
    %1602 = vmatpush1.msra.mxu0 %v651
    %1603 = vmatprep.subr.mxu0 %v648
    %1604 = vmatpush1.msra.mxu0 %v647
    %1605 = vmatprep.subr.mxu0 %v644
    %1606 = vmatpush1.msra.mxu0 %v643
    %1607 = vmatprep.subr.mxu0 %v640
    %1608 = vmatpush1.msra.mxu0 %v639
    %1609 = vmatprep.subr.mxu0 %v636
    %1610 = vmatpush1.msra.mxu0 %v635
    %1611 = vmatprep.subr.mxu0 0.0
    %1612 = vmatpush2.msra.mxu0 0.0
    %1613 = vmatprep.subr.mxu0 0.0
    %1614 = vmatpush2.msra.mxu0 0.0
    %1615 = vmatprep.subr.mxu0 0.0
    %1616 = vmatpush2.msra.mxu0 0.0
    %1617 = vmatprep.subr.mxu0 0.0
    %1618 = vmatpush2.msra.mxu0 0.0
    %1619 = vmatprep.subr.mxu0 0.0
    %1620 = vmatpush2.msra.mxu0 0.0
    %1621 = vmatprep.subr.mxu0 0.0
    %1622 = vmatpush2.msra.mxu0 0.0
    %1623 = vmatprep.subr.mxu0 0.0
    %1624 = vmatpush2.msra.mxu0 0.0
    %1625 = vmatprep.subr.mxu0 0.0
    %1626 = vmatpush2.msra.mxu0 0.0
    %1627 = vmatprep.subr.mxu0 0.0
    %1628 = vmatpush2.msra.mxu0 0.0
    %1629 = vmatprep.subr.mxu0 0.0
    %1630 = vmatpush2.msra.mxu0 0.0
    %1631 = vmatprep.subr.mxu0 0.0
    %1632 = vmatpush2.msra.mxu0 0.0
    %1633 = vmatprep.subr.mxu0 0.0
    %1634 = vmatpush2.msra.mxu0 0.0
    %1635 = vmatprep.subr.mxu0 0.0
    %1636 = vmatpush2.msra.mxu0 0.0
    %1637 = vmatprep.subr.mxu0 0.0
    %1638 = vmatpush2.msra.mxu0 0.0
    %1639 = vmatprep.subr.mxu0 0.0
    %1640 = vmatpush2.msra.mxu0 0.0
    %1641 = vmatprep.subr.mxu0 0.0
    %1642 = vmatpush2.msra.mxu0 0.0
    %1643 = vmatprep.mubr.f32.mxu0 0.0
    %1644 = vmatmul.mubr.f32.gmra.mxu0 %v1506
    %v1645 = vpop.f32.mrf.mxu0
    %v1646 = vadd.f32 0.0, %v1645
    %v1647 = vpop.f32.mrf.mxu0
    %v1648 = vadd.f32 0.0, %v1647
    %1649 = vdwg.mxu0
    %v1650 = vadd.f32 %v1497, %v1575
    %v1651 = vadd.f32 %v1498, %v1577
    %v1652 = vadd.f32 %v1499, %v1646
    %v1653 = vadd.f32 %v1500, %v1648
    %1654 = vmatprep.subr.mxu0 %v758
    %1655 = vmatpush1.msra.mxu0 %v757
    %1656 = vmatprep.subr.mxu0 %v754
    %1657 = vmatpush1.msra.mxu0 %v753
    %1658 = vmatprep.subr.mxu0 %v750
    %1659 = vmatpush1.msra.mxu0 %v749
    %1660 = vmatprep.subr.mxu0 %v746
    %1661 = vmatpush1.msra.mxu0 %v745
    %1662 = vmatprep.subr.mxu0 %v742
    %1663 = vmatpush1.msra.mxu0 %v741
    %1664 = vmatprep.subr.mxu0 %v738
    %1665 = vmatpush1.msra.mxu0 %v737
    %1666 = vmatprep.subr.mxu0 %v734
    %1667 = vmatpush1.msra.mxu0 %v733
    %1668 = vmatprep.subr.mxu0 %v730
    %1669 = vmatpush1.msra.mxu0 %v729
    %1670 = vmatprep.subr.mxu0 %v726
    %1671 = vmatpush1.msra.mxu0 %v725
    %1672 = vmatprep.subr.mxu0 %v722
    %1673 = vmatpush1.msra.mxu0 %v721
    %1674 = vmatprep.subr.mxu0 %v718
    %1675 = vmatpush1.msra.mxu0 %v717
    %1676 = vmatprep.subr.mxu0 %v714
    %1677 = vmatpush1.msra.mxu0 %v713
    %1678 = vmatprep.subr.mxu0 %v710
    %1679 = vmatpush1.msra.mxu0 %v709
    %1680 = vmatprep.subr.mxu0 %v706
    %1681 = vmatpush1.msra.mxu0 %v705
    %1682 = vmatprep.subr.mxu0 %v702
    %1683 = vmatpush1.msra.mxu0 %v701
    %1684 = vmatprep.subr.mxu0 %v698
    %1685 = vmatpush1.msra.mxu0 %v697
    %1686 = vmatprep.subr.mxu0 0.0
    %1687 = vmatpush2.msra.mxu0 0.0
    %1688 = vmatprep.subr.mxu0 0.0
    %1689 = vmatpush2.msra.mxu0 0.0
    %1690 = vmatprep.subr.mxu0 0.0
    %1691 = vmatpush2.msra.mxu0 0.0
    %1692 = vmatprep.subr.mxu0 0.0
    %1693 = vmatpush2.msra.mxu0 0.0
    %1694 = vmatprep.subr.mxu0 0.0
    %1695 = vmatpush2.msra.mxu0 0.0
    %1696 = vmatprep.subr.mxu0 0.0
    %1697 = vmatpush2.msra.mxu0 0.0
    %1698 = vmatprep.subr.mxu0 0.0
    %1699 = vmatpush2.msra.mxu0 0.0
    %1700 = vmatprep.subr.mxu0 0.0
    %1701 = vmatpush2.msra.mxu0 0.0
    %1702 = vmatprep.subr.mxu0 0.0
    %1703 = vmatpush2.msra.mxu0 0.0
    %1704 = vmatprep.subr.mxu0 0.0
    %1705 = vmatpush2.msra.mxu0 0.0
    %1706 = vmatprep.subr.mxu0 0.0
    %1707 = vmatpush2.msra.mxu0 0.0
    %1708 = vmatprep.subr.mxu0 0.0
    %1709 = vmatpush2.msra.mxu0 0.0
    %1710 = vmatprep.subr.mxu0 0.0
    %1711 = vmatpush2.msra.mxu0 0.0
    %1712 = vmatprep.subr.mxu0 0.0
    %1713 = vmatpush2.msra.mxu0 0.0
    %1714 = vmatprep.subr.mxu0 0.0
    %1715 = vmatpush2.msra.mxu0 0.0
    %1716 = vmatprep.subr.mxu0 0.0
    %1717 = vmatpush2.msra.mxu0 0.0
    %1718 = vmatprep.mubr.f32.mxu0 0.0
    %1719 = vmatmul.mubr.f32.gmra.mxu0 %v1492
    %v1720 = vpop.f32.mrf.mxu0
    %v1721 = vadd.f32 0.0, %v1720
    %v1722 = vpop.f32.mrf.mxu0
    %v1723 = vadd.f32 0.0, %v1722
    %1724 = vdwg.mxu0
    %1725 = vmatprep.subr.mxu0 %v760
    %1726 = vmatpush1.msra.mxu0 %v759
    %1727 = vmatprep.subr.mxu0 %v756
    %1728 = vmatpush1.msra.mxu0 %v755
    %1729 = vmatprep.subr.mxu0 %v752
    %1730 = vmatpush1.msra.mxu0 %v751
    %1731 = vmatprep.subr.mxu0 %v748
    %1732 = vmatpush1.msra.mxu0 %v747
    %1733 = vmatprep.subr.mxu0 %v744
    %1734 = vmatpush1.msra.mxu0 %v743
    %1735 = vmatprep.subr.mxu0 %v740
    %1736 = vmatpush1.msra.mxu0 %v739
    %1737 = vmatprep.subr.mxu0 %v736
    %1738 = vmatpush1.msra.mxu0 %v735
    %1739 = vmatprep.subr.mxu0 %v732
    %1740 = vmatpush1.msra.mxu0 %v731
    %1741 = vmatprep.subr.mxu0 %v728
    %1742 = vmatpush1.msra.mxu0 %v727
    %1743 = vmatprep.subr.mxu0 %v724
    %1744 = vmatpush1.msra.mxu0 %v723
    %1745 = vmatprep.subr.mxu0 %v720
    %1746 = vmatpush1.msra.mxu0 %v719
    %1747 = vmatprep.subr.mxu0 %v716
    %1748 = vmatpush1.msra.mxu0 %v715
    %1749 = vmatprep.subr.mxu0 %v712
    %1750 = vmatpush1.msra.mxu0 %v711
    %1751 = vmatprep.subr.mxu0 %v708
    %1752 = vmatpush1.msra.mxu0 %v707
    %1753 = vmatprep.subr.mxu0 %v704
    %1754 = vmatpush1.msra.mxu0 %v703
    %1755 = vmatprep.subr.mxu0 %v700
    %1756 = vmatpush1.msra.mxu0 %v699
    %1757 = vmatprep.subr.mxu0 0.0
    %1758 = vmatpush2.msra.mxu0 0.0
    %1759 = vmatprep.subr.mxu0 0.0
    %1760 = vmatpush2.msra.mxu0 0.0
    %1761 = vmatprep.subr.mxu0 0.0
    %1762 = vmatpush2.msra.mxu0 0.0
    %1763 = vmatprep.subr.mxu0 0.0
    %1764 = vmatpush2.msra.mxu0 0.0
    %1765 = vmatprep.subr.mxu0 0.0
    %1766 = vmatpush2.msra.mxu0 0.0
    %1767 = vmatprep.subr.mxu0 0.0
    %1768 = vmatpush2.msra.mxu0 0.0
    %1769 = vmatprep.subr.mxu0 0.0
    %1770 = vmatpush2.msra.mxu0 0.0
    %1771 = vmatprep.subr.mxu0 0.0
    %1772 = vmatpush2.msra.mxu0 0.0
    %1773 = vmatprep.subr.mxu0 0.0
    %1774 = vmatpush2.msra.mxu0 0.0
    %1775 = vmatprep.subr.mxu0 0.0
    %1776 = vmatpush2.msra.mxu0 0.0
    %1777 = vmatprep.subr.mxu0 0.0
    %1778 = vmatpush2.msra.mxu0 0.0
    %1779 = vmatprep.subr.mxu0 0.0
    %1780 = vmatpush2.msra.mxu0 0.0
    %1781 = vmatprep.subr.mxu0 0.0
    %1782 = vmatpush2.msra.mxu0 0.0
    %1783 = vmatprep.subr.mxu0 0.0
    %1784 = vmatpush2.msra.mxu0 0.0
    %1785 = vmatprep.subr.mxu0 0.0
    %1786 = vmatpush2.msra.mxu0 0.0
    %1787 = vmatprep.subr.mxu0 0.0
    %1788 = vmatpush2.msra.mxu0 0.0
    %1789 = vmatprep.mubr.f32.mxu0 0.0
    %1790 = vmatmul.mubr.f32.gmra.mxu0 %v1492
    %v1791 = vpop.f32.mrf.mxu0
    %v1792 = vadd.f32 0.0, %v1791
    %v1793 = vpop.f32.mrf.mxu0
    %v1794 = vadd.f32 0.0, %v1793
    %1795 = vdwg.mxu0
    %v1800 = vrot.slane %v1721, 4
    %v1801 = vrot.slane %v1723, 4
    %v1802 = vrot.slane %v1792, 4
    %v1803 = vrot.slane %v1794, 4
    %v1808 = vadd.f32 %v1501, %v1800
    %v1809 = vadd.f32 %v1502, %v1801
    %v1810 = vadd.f32 %v1503, %v1802
    %v1811 = vadd.f32 %v1504, %v1803
    %v1812 = vxor.u32 %v1650, 2147483648
    %v1813 = vxor.u32 %v1651, 2147483648
    %v1814 = vxor.u32 %v1653, 2147483648
    %v1815 = vmul.f32 %v1812, 1.442695
    %v1816 = vpow.pop %v1815
    %v1817 = vmul.f32 %v1813, 1.442695
    %v1818 = vpow.pop %v1817
    %v1819 = vmul.f32 %v1814, 1.442695
    %v1820 = vpow.pop %v1819
    %v1821 = vadd.f32 %v1816, 1.0
    %v1822 = vadd.f32 %v1818, 1.0
    %v1823 = vadd.f32 %v1820, 1.0
    %v1824 = vrcp.pop %v1821
    %v1825 = vmul.f32 1.0, %v1824
    %v1826 = vrcp.pop %v1822
    %v1827 = vmul.f32 1.0, %v1826
    %v1828 = vrcp.pop %v1823
    %v1829 = vmul.f32 1.0, %v1828
    %v1830 = vxor.u32 %v1808, 2147483648
    %v1831 = vxor.u32 %v1809, 2147483648
    %v1832 = vxor.u32 %v1811, 2147483648
    %v1833 = vmul.f32 %v1830, 1.442695
    %v1834 = vpow.pop %v1833
    %v1835 = vmul.f32 %v1831, 1.442695
    %v1836 = vpow.pop %v1835
    %v1837 = vmul.f32 %v1832, 1.442695
    %v1838 = vpow.pop %v1837
    %v1839 = vadd.f32 %v1834, 1.0
    %v1840 = vadd.f32 %v1836, 1.0
    %v1841 = vadd.f32 %v1838, 1.0
    %v1842 = vrcp.pop %v1839
    %v1843 = vmul.f32 1.0, %v1842
    %v1844 = vrcp.pop %v1840
    %v1845 = vmul.f32 1.0, %v1844
    %v1846 = vrcp.pop %v1841
    %v1847 = vmul.f32 1.0, %v1846
    %v1848 = vtanh.pop %v1652
    %v1849 = vtanh.pop %v1810
    %v1851 = vrot.slane %v1482, 4
    %v1853 = vmul.f32 %v1827, %v1851
    %v1854 = vmul.f32 %v1825, %v1848
    %v1855 = vadd.f32 %v1853, %v1854
    %v1857 = vrot.slane %v1488, 4
    %v1859 = vmul.f32 %v1845, %v1857
    %v1860 = vmul.f32 %v1843, %v1849
    %v1861 = vadd.f32 %v1859, %v1860
    %v1862 = vtanh.pop %v1855
    %v1863 = vmul.f32 %v1829, %v1862
    %v1864 = vtanh.pop %v1861
    %v1865 = vmul.f32 %v1847, %v1864
    %s1866 = scalar_lea.vmem [#allocation3], 8
    %1867 = vst [vmem:[%s1866] sm:$0xf] %v1863
    %s1868 = scalar_lea.vmem [#allocation4], 20
    %1869 = vst [vmem:[%s1868 - $0x4] sm:$0xf0] %v1865
    %v1870 = vld [vmem:[#allocation2 + $0x40] sm:$0xf0]
    %v1871 = vld [vmem:[#allocation2 + $0x48] sm:$0xf0]
    %v1872 = vld [vmem:[#allocation2 + $0x50] sm:$0xf0]
    %v1873 = vld [vmem:[#allocation2 + $0x58] sm:$0xf0]
    %v1874 = vld [vmem:[#allocation2 + $0xa0] sm:$0xf]
    %v1875 = vld [vmem:[#allocation2 + $0xa8] sm:$0xf]
    %v1876 = vld [vmem:[#allocation2 + $0xb0] sm:$0xf]
    %v1877 = vld [vmem:[#allocation2 + $0xb8] sm:$0xf]
    %1878 = vmatprep.subr.mxu0 %v694
    %1879 = vmatpush1.msra.mxu0 %v693
    %1880 = vmatprep.subr.mxu0 %v690
    %1881 = vmatpush1.msra.mxu0 %v689
    %1882 = vmatprep.subr.mxu0 %v686
    %1883 = vmatpush1.msra.mxu0 %v685
    %1884 = vmatprep.subr.mxu0 %v682
    %1885 = vmatpush1.msra.mxu0 %v681
    %1886 = vmatprep.subr.mxu0 %v678
    %1887 = vmatpush1.msra.mxu0 %v677
    %1888 = vmatprep.subr.mxu0 %v674
    %1889 = vmatpush1.msra.mxu0 %v673
    %1890 = vmatprep.subr.mxu0 %v670
    %1891 = vmatpush1.msra.mxu0 %v669
    %1892 = vmatprep.subr.mxu0 %v666
    %1893 = vmatpush1.msra.mxu0 %v665
    %1894 = vmatprep.subr.mxu0 %v662
    %1895 = vmatpush1.msra.mxu0 %v661
    %1896 = vmatprep.subr.mxu0 %v658
    %1897 = vmatpush1.msra.mxu0 %v657
    %1898 = vmatprep.subr.mxu0 %v654
    %1899 = vmatpush1.msra.mxu0 %v653
    %1900 = vmatprep.subr.mxu0 %v650
    %1901 = vmatpush1.msra.mxu0 %v649
    %1902 = vmatprep.subr.mxu0 %v646
    %1903 = vmatpush1.msra.mxu0 %v645
    %1904 = vmatprep.subr.mxu0 %v642
    %1905 = vmatpush1.msra.mxu0 %v641
    %1906 = vmatprep.subr.mxu0 %v638
    %1907 = vmatpush1.msra.mxu0 %v637
    %1908 = vmatprep.subr.mxu0 %v634
    %1909 = vmatpush1.msra.mxu0 %v633
    %1910 = vmatprep.subr.mxu0 0.0
    %1911 = vmatpush2.msra.mxu0 0.0
    %1912 = vmatprep.subr.mxu0 0.0
    %1913 = vmatpush2.msra.mxu0 0.0
    %1914 = vmatprep.subr.mxu0 0.0
    %1915 = vmatpush2.msra.mxu0 0.0
    %1916 = vmatprep.subr.mxu0 0.0
    %1917 = vmatpush2.msra.mxu0 0.0
    %1918 = vmatprep.subr.mxu0 0.0
    %1919 = vmatpush2.msra.mxu0 0.0
    %1920 = vmatprep.subr.mxu0 0.0
    %1921 = vmatpush2.msra.mxu0 0.0
    %1922 = vmatprep.subr.mxu0 0.0
    %1923 = vmatpush2.msra.mxu0 0.0
    %1924 = vmatprep.subr.mxu0 0.0
    %1925 = vmatpush2.msra.mxu0 0.0
    %1926 = vmatprep.subr.mxu0 0.0
    %1927 = vmatpush2.msra.mxu0 0.0
    %1928 = vmatprep.subr.mxu0 0.0
    %1929 = vmatpush2.msra.mxu0 0.0
    %1930 = vmatprep.subr.mxu0 0.0
    %1931 = vmatpush2.msra.mxu0 0.0
    %1932 = vmatprep.subr.mxu0 0.0
    %1933 = vmatpush2.msra.mxu0 0.0
    %1934 = vmatprep.subr.mxu0 0.0
    %1935 = vmatpush2.msra.mxu0 0.0
    %1936 = vmatprep.subr.mxu0 0.0
    %1937 = vmatpush2.msra.mxu0 0.0
    %1938 = vmatprep.subr.mxu0 0.0
    %1939 = vmatpush2.msra.mxu0 0.0
    %1940 = vmatprep.subr.mxu0 0.0
    %1941 = vmatpush2.msra.mxu0 0.0
    %1942 = vmatprep.mubr.f32.mxu0 0.0
    %1943 = vmatmul.mubr.f32.gmra.mxu0 %v1863
    %v1944 = vpop.f32.mrf.mxu0
    %v1945 = vadd.f32 0.0, %v1944
    %v1946 = vpop.f32.mrf.mxu0
    %v1947 = vadd.f32 0.0, %v1946
    %1948 = vdwg.mxu0
    %1949 = vmatprep.subr.mxu0 %v696
    %1950 = vmatpush1.msra.mxu0 %v695
    %1951 = vmatprep.subr.mxu0 %v692
    %1952 = vmatpush1.msra.mxu0 %v691
    %1953 = vmatprep.subr.mxu0 %v688
    %1954 = vmatpush1.msra.mxu0 %v687
    %1955 = vmatprep.subr.mxu0 %v684
    %1956 = vmatpush1.msra.mxu0 %v683
    %1957 = vmatprep.subr.mxu0 %v680
    %1958 = vmatpush1.msra.mxu0 %v679
    %1959 = vmatprep.subr.mxu0 %v676
    %1960 = vmatpush1.msra.mxu0 %v675
    %1961 = vmatprep.subr.mxu0 %v672
    %1962 = vmatpush1.msra.mxu0 %v671
    %1963 = vmatprep.subr.mxu0 %v668
    %1964 = vmatpush1.msra.mxu0 %v667
    %1965 = vmatprep.subr.mxu0 %v664
    %1966 = vmatpush1.msra.mxu0 %v663
    %1967 = vmatprep.subr.mxu0 %v660
    %1968 = vmatpush1.msra.mxu0 %v659
    %1969 = vmatprep.subr.mxu0 %v656
    %1970 = vmatpush1.msra.mxu0 %v655
    %1971 = vmatprep.subr.mxu0 %v652
    %1972 = vmatpush1.msra.mxu0 %v651
    %1973 = vmatprep.subr.mxu0 %v648
    %1974 = vmatpush1.msra.mxu0 %v647
    %1975 = vmatprep.subr.mxu0 %v644
    %1976 = vmatpush1.msra.mxu0 %v643
    %1977 = vmatprep.subr.mxu0 %v640
    %1978 = vmatpush1.msra.mxu0 %v639
    %1979 = vmatprep.subr.mxu0 %v636
    %1980 = vmatpush1.msra.mxu0 %v635
    %1981 = vmatprep.subr.mxu0 0.0
    %1982 = vmatpush2.msra.mxu0 0.0
    %1983 = vmatprep.subr.mxu0 0.0
    %1984 = vmatpush2.msra.mxu0 0.0
    %1985 = vmatprep.subr.mxu0 0.0
    %1986 = vmatpush2.msra.mxu0 0.0
    %1987 = vmatprep.subr.mxu0 0.0
    %1988 = vmatpush2.msra.mxu0 0.0
    %1989 = vmatprep.subr.mxu0 0.0
    %1990 = vmatpush2.msra.mxu0 0.0
    %1991 = vmatprep.subr.mxu0 0.0
    %1992 = vmatpush2.msra.mxu0 0.0
    %1993 = vmatprep.subr.mxu0 0.0
    %1994 = vmatpush2.msra.mxu0 0.0
    %1995 = vmatprep.subr.mxu0 0.0
    %1996 = vmatpush2.msra.mxu0 0.0
    %1997 = vmatprep.subr.mxu0 0.0
    %1998 = vmatpush2.msra.mxu0 0.0
    %1999 = vmatprep.subr.mxu0 0.0
    %2000 = vmatpush2.msra.mxu0 0.0
    %2001 = vmatprep.subr.mxu0 0.0
    %2002 = vmatpush2.msra.mxu0 0.0
    %2003 = vmatprep.subr.mxu0 0.0
    %2004 = vmatpush2.msra.mxu0 0.0
    %2005 = vmatprep.subr.mxu0 0.0
    %2006 = vmatpush2.msra.mxu0 0.0
    %2007 = vmatprep.subr.mxu0 0.0
    %2008 = vmatpush2.msra.mxu0 0.0
    %2009 = vmatprep.subr.mxu0 0.0
    %2010 = vmatpush2.msra.mxu0 0.0
    %2011 = vmatprep.subr.mxu0 0.0
    %2012 = vmatpush2.msra.mxu0 0.0
    %2013 = vmatprep.mubr.f32.mxu0 0.0
    %2014 = vmatmul.mubr.f32.gmra.mxu0 %v1863
    %v2015 = vpop.f32.mrf.mxu0
    %v2016 = vadd.f32 0.0, %v2015
    %v2017 = vpop.f32.mrf.mxu0
    %v2018 = vadd.f32 0.0, %v2017
    %2019 = vdwg.mxu0
    %v2024 = vrot.slane %v1945, 4
    %v2025 = vrot.slane %v1947, 4
    %v2026 = vrot.slane %v2016, 4
    %v2027 = vrot.slane %v2018, 4
    %v2032 = vadd.f32 %v1870, %v2024
    %v2033 = vadd.f32 %v1871, %v2025
    %v2034 = vadd.f32 %v1872, %v2026
    %v2035 = vadd.f32 %v1873, %v2027
    %v2037 = vrot.slane %v1865, 4
    %2039 = vmatprep.subr.mxu0 %v758
    %2040 = vmatpush1.msra.mxu0 %v757
    %2041 = vmatprep.subr.mxu0 %v754
    %2042 = vmatpush1.msra.mxu0 %v753
    %2043 = vmatprep.subr.mxu0 %v750
    %2044 = vmatpush1.msra.mxu0 %v749
    %2045 = vmatprep.subr.mxu0 %v746
    %2046 = vmatpush1.msra.mxu0 %v745
    %2047 = vmatprep.subr.mxu0 %v742
    %2048 = vmatpush1.msra.mxu0 %v741
    %2049 = vmatprep.subr.mxu0 %v738
    %2050 = vmatpush1.msra.mxu0 %v737
    %2051 = vmatprep.subr.mxu0 %v734
    %2052 = vmatpush1.msra.mxu0 %v733
    %2053 = vmatprep.subr.mxu0 %v730
    %2054 = vmatpush1.msra.mxu0 %v729
    %2055 = vmatprep.subr.mxu0 %v726
    %2056 = vmatpush1.msra.mxu0 %v725
    %2057 = vmatprep.subr.mxu0 %v722
    %2058 = vmatpush1.msra.mxu0 %v721
    %2059 = vmatprep.subr.mxu0 %v718
    %2060 = vmatpush1.msra.mxu0 %v717
    %2061 = vmatprep.subr.mxu0 %v714
    %2062 = vmatpush1.msra.mxu0 %v713
    %2063 = vmatprep.subr.mxu0 %v710
    %2064 = vmatpush1.msra.mxu0 %v709
    %2065 = vmatprep.subr.mxu0 %v706
    %2066 = vmatpush1.msra.mxu0 %v705
    %2067 = vmatprep.subr.mxu0 %v702
    %2068 = vmatpush1.msra.mxu0 %v701
    %2069 = vmatprep.subr.mxu0 %v698
    %2070 = vmatpush1.msra.mxu0 %v697
    %2071 = vmatprep.subr.mxu0 0.0
    %2072 = vmatpush2.msra.mxu0 0.0
    %2073 = vmatprep.subr.mxu0 0.0
    %2074 = vmatpush2.msra.mxu0 0.0
    %2075 = vmatprep.subr.mxu0 0.0
    %2076 = vmatpush2.msra.mxu0 0.0
    %2077 = vmatprep.subr.mxu0 0.0
    %2078 = vmatpush2.msra.mxu0 0.0
    %2079 = vmatprep.subr.mxu0 0.0
    %2080 = vmatpush2.msra.mxu0 0.0
    %2081 = vmatprep.subr.mxu0 0.0
    %2082 = vmatpush2.msra.mxu0 0.0
    %2083 = vmatprep.subr.mxu0 0.0
    %2084 = vmatpush2.msra.mxu0 0.0
    %2085 = vmatprep.subr.mxu0 0.0
    %2086 = vmatpush2.msra.mxu0 0.0
    %2087 = vmatprep.subr.mxu0 0.0
    %2088 = vmatpush2.msra.mxu0 0.0
    %2089 = vmatprep.subr.mxu0 0.0
    %2090 = vmatpush2.msra.mxu0 0.0
    %2091 = vmatprep.subr.mxu0 0.0
    %2092 = vmatpush2.msra.mxu0 0.0
    %2093 = vmatprep.subr.mxu0 0.0
    %2094 = vmatpush2.msra.mxu0 0.0
    %2095 = vmatprep.subr.mxu0 0.0
    %2096 = vmatpush2.msra.mxu0 0.0
    %2097 = vmatprep.subr.mxu0 0.0
    %2098 = vmatpush2.msra.mxu0 0.0
    %2099 = vmatprep.subr.mxu0 0.0
    %2100 = vmatpush2.msra.mxu0 0.0
    %2101 = vmatprep.subr.mxu0 0.0
    %2102 = vmatpush2.msra.mxu0 0.0
    %2103 = vmatprep.mubr.f32.mxu0 0.0
    %2104 = vmatmul.mubr.f32.gmra.mxu0 %v2037
    %v2105 = vpop.f32.mrf.mxu0
    %v2106 = vadd.f32 0.0, %v2105
    %v2107 = vpop.f32.mrf.mxu0
    %v2108 = vadd.f32 0.0, %v2107
    %2109 = vdwg.mxu0
    %2110 = vmatprep.subr.mxu0 %v760
    %2111 = vmatpush1.msra.mxu0 %v759
    %2112 = vmatprep.subr.mxu0 %v756
    %2113 = vmatpush1.msra.mxu0 %v755
    %2114 = vmatprep.subr.mxu0 %v752
    %2115 = vmatpush1.msra.mxu0 %v751
    %2116 = vmatprep.subr.mxu0 %v748
    %2117 = vmatpush1.msra.mxu0 %v747
    %2118 = vmatprep.subr.mxu0 %v744
    %2119 = vmatpush1.msra.mxu0 %v743
    %2120 = vmatprep.subr.mxu0 %v740
    %2121 = vmatpush1.msra.mxu0 %v739
    %2122 = vmatprep.subr.mxu0 %v736
    %2123 = vmatpush1.msra.mxu0 %v735
    %2124 = vmatprep.subr.mxu0 %v732
    %2125 = vmatpush1.msra.mxu0 %v731
    %2126 = vmatprep.subr.mxu0 %v728
    %2127 = vmatpush1.msra.mxu0 %v727
    %2128 = vmatprep.subr.mxu0 %v724
    %2129 = vmatpush1.msra.mxu0 %v723
    %2130 = vmatprep.subr.mxu0 %v720
    %2131 = vmatpush1.msra.mxu0 %v719
    %2132 = vmatprep.subr.mxu0 %v716
    %2133 = vmatpush1.msra.mxu0 %v715
    %2134 = vmatprep.subr.mxu0 %v712
    %2135 = vmatpush1.msra.mxu0 %v711
    %2136 = vmatprep.subr.mxu0 %v708
    %2137 = vmatpush1.msra.mxu0 %v707
    %2138 = vmatprep.subr.mxu0 %v704
    %2139 = vmatpush1.msra.mxu0 %v703
    %2140 = vmatprep.subr.mxu0 %v700
    %2141 = vmatpush1.msra.mxu0 %v699
    %2142 = vmatprep.subr.mxu0 0.0
    %2143 = vmatpush2.msra.mxu0 0.0
    %2144 = vmatprep.subr.mxu0 0.0
    %2145 = vmatpush2.msra.mxu0 0.0
    %2146 = vmatprep.subr.mxu0 0.0
    %2147 = vmatpush2.msra.mxu0 0.0
    %2148 = vmatprep.subr.mxu0 0.0
    %2149 = vmatpush2.msra.mxu0 0.0
    %2150 = vmatprep.subr.mxu0 0.0
    %2151 = vmatpush2.msra.mxu0 0.0
    %2152 = vmatprep.subr.mxu0 0.0
    %2153 = vmatpush2.msra.mxu0 0.0
    %2154 = vmatprep.subr.mxu0 0.0
    %2155 = vmatpush2.msra.mxu0 0.0
    %2156 = vmatprep.subr.mxu0 0.0
    %2157 = vmatpush2.msra.mxu0 0.0
    %2158 = vmatprep.subr.mxu0 0.0
    %2159 = vmatpush2.msra.mxu0 0.0
    %2160 = vmatprep.subr.mxu0 0.0
    %2161 = vmatpush2.msra.mxu0 0.0
    %2162 = vmatprep.subr.mxu0 0.0
    %2163 = vmatpush2.msra.mxu0 0.0
    %2164 = vmatprep.subr.mxu0 0.0
    %2165 = vmatpush2.msra.mxu0 0.0
    %2166 = vmatprep.subr.mxu0 0.0
    %2167 = vmatpush2.msra.mxu0 0.0
    %2168 = vmatprep.subr.mxu0 0.0
    %2169 = vmatpush2.msra.mxu0 0.0
    %2170 = vmatprep.subr.mxu0 0.0
    %2171 = vmatpush2.msra.mxu0 0.0
    %2172 = vmatprep.subr.mxu0 0.0
    %2173 = vmatpush2.msra.mxu0 0.0
    %2174 = vmatprep.mubr.f32.mxu0 0.0
    %2175 = vmatmul.mubr.f32.gmra.mxu0 %v2037
    %v2176 = vpop.f32.mrf.mxu0
    %v2177 = vadd.f32 0.0, %v2176
    %v2178 = vpop.f32.mrf.mxu0
    %v2179 = vadd.f32 0.0, %v2178
    %2180 = vdwg.mxu0
    %v2181 = vadd.f32 %v1874, %v2106
    %v2182 = vadd.f32 %v1875, %v2108
    %v2183 = vadd.f32 %v1876, %v2177
    %v2184 = vadd.f32 %v1877, %v2179
    %v2185 = vxor.u32 %v2032, 2147483648
    %v2186 = vxor.u32 %v2033, 2147483648
    %v2187 = vxor.u32 %v2035, 2147483648
    %v2188 = vmul.f32 %v2185, 1.442695
    %v2189 = vpow.pop %v2188
    %v2190 = vmul.f32 %v2186, 1.442695
    %v2191 = vpow.pop %v2190
    %v2192 = vmul.f32 %v2187, 1.442695
    %v2193 = vpow.pop %v2192
    %v2194 = vadd.f32 %v2189, 1.0
    %v2195 = vadd.f32 %v2191, 1.0
    %v2196 = vadd.f32 %v2193, 1.0
    %v2197 = vrcp.pop %v2194
    %v2198 = vmul.f32 1.0, %v2197
    %v2199 = vrcp.pop %v2195
    %v2200 = vmul.f32 1.0, %v2199
    %v2201 = vrcp.pop %v2196
    %v2202 = vmul.f32 1.0, %v2201
    %v2203 = vxor.u32 %v2181, 2147483648
    %v2204 = vxor.u32 %v2182, 2147483648
    %v2205 = vxor.u32 %v2184, 2147483648
    %v2206 = vmul.f32 %v2203, 1.442695
    %v2207 = vpow.pop %v2206
    %v2208 = vmul.f32 %v2204, 1.442695
    %v2209 = vpow.pop %v2208
    %v2210 = vmul.f32 %v2205, 1.442695
    %v2211 = vpow.pop %v2210
    %v2212 = vadd.f32 %v2207, 1.0
    %v2213 = vadd.f32 %v2209, 1.0
    %v2214 = vadd.f32 %v2211, 1.0
    %v2215 = vrcp.pop %v2212
    %v2216 = vmul.f32 1.0, %v2215
    %v2217 = vrcp.pop %v2213
    %v2218 = vmul.f32 1.0, %v2217
    %v2219 = vrcp.pop %v2214
    %v2220 = vmul.f32 1.0, %v2219
    %v2221 = vtanh.pop %v2034
    %v2222 = vtanh.pop %v2183
    %v2224 = vrot.slane %v1855, 4
    %v2226 = vmul.f32 %v2200, %v2224
    %v2227 = vmul.f32 %v2198, %v2221
    %v2228 = vadd.f32 %v2226, %v2227
    %v2230 = vrot.slane %v1861, 4
    %v2232 = vmul.f32 %v2218, %v2230
    %v2233 = vmul.f32 %v2216, %v2222
    %v2234 = vadd.f32 %v2232, %v2233
    %v2235 = vtanh.pop %v2228
    %v2236 = vmul.f32 %v2202, %v2235
    %v2237 = vtanh.pop %v2234
    %v2238 = vmul.f32 %v2220, %v2237
    %s2239 = scalar_lea.vmem [#allocation3], 12
    %2240 = vst [vmem:[%s2239 - $0x4] sm:$0xf0] %v2236
    %s2241 = scalar_lea.vmem [#allocation4], 16
    %2242 = vst [vmem:[%s2241] sm:$0xf] %v2238
    %v2243 = vld [vmem:[#allocation2 + $0x80] sm:$0xf]
    %v2244 = vld [vmem:[#allocation2 + $0x88] sm:$0xf]
    %v2245 = vld [vmem:[#allocation2 + $0x90] sm:$0xf]
    %v2246 = vld [vmem:[#allocation2 + $0x98] sm:$0xf]
    %v2247 = vld [vmem:[#allocation2 + $0x60] sm:$0xf0]
    %v2248 = vld [vmem:[#allocation2 + $0x68] sm:$0xf0]
    %v2249 = vld [vmem:[#allocation2 + $0x70] sm:$0xf0]
    %v2250 = vld [vmem:[#allocation2 + $0x78] sm:$0xf0]
    %v2252 = vrot.slane %v2236, 4
    %2254 = vmatprep.subr.mxu0 %v694
    %2255 = vmatpush1.msra.mxu0 %v693
    %2256 = vmatprep.subr.mxu0 %v690
    %2257 = vmatpush1.msra.mxu0 %v689
    %2258 = vmatprep.subr.mxu0 %v686
    %2259 = vmatpush1.msra.mxu0 %v685
    %2260 = vmatprep.subr.mxu0 %v682
    %2261 = vmatpush1.msra.mxu0 %v681
    %2262 = vmatprep.subr.mxu0 %v678
    %2263 = vmatpush1.msra.mxu0 %v677
    %2264 = vmatprep.subr.mxu0 %v674
    %2265 = vmatpush1.msra.mxu0 %v673
    %2266 = vmatprep.subr.mxu0 %v670
    %2267 = vmatpush1.msra.mxu0 %v669
    %2268 = vmatprep.subr.mxu0 %v666
    %2269 = vmatpush1.msra.mxu0 %v665
    %2270 = vmatprep.subr.mxu0 %v662
    %2271 = vmatpush1.msra.mxu0 %v661
    %2272 = vmatprep.subr.mxu0 %v658
    %2273 = vmatpush1.msra.mxu0 %v657
    %2274 = vmatprep.subr.mxu0 %v654
    %2275 = vmatpush1.msra.mxu0 %v653
    %2276 = vmatprep.subr.mxu0 %v650
    %2277 = vmatpush1.msra.mxu0 %v649
    %2278 = vmatprep.subr.mxu0 %v646
    %2279 = vmatpush1.msra.mxu0 %v645
    %2280 = vmatprep.subr.mxu0 %v642
    %2281 = vmatpush1.msra.mxu0 %v641
    %2282 = vmatprep.subr.mxu0 %v638
    %2283 = vmatpush1.msra.mxu0 %v637
    %2284 = vmatprep.subr.mxu0 %v634
    %2285 = vmatpush1.msra.mxu0 %v633
    %2286 = vmatprep.subr.mxu0 0.0
    %2287 = vmatpush2.msra.mxu0 0.0
    %2288 = vmatprep.subr.mxu0 0.0
    %2289 = vmatpush2.msra.mxu0 0.0
    %2290 = vmatprep.subr.mxu0 0.0
    %2291 = vmatpush2.msra.mxu0 0.0
    %2292 = vmatprep.subr.mxu0 0.0
    %2293 = vmatpush2.msra.mxu0 0.0
    %2294 = vmatprep.subr.mxu0 0.0
    %2295 = vmatpush2.msra.mxu0 0.0
    %2296 = vmatprep.subr.mxu0 0.0
    %2297 = vmatpush2.msra.mxu0 0.0
    %2298 = vmatprep.subr.mxu0 0.0
    %2299 = vmatpush2.msra.mxu0 0.0
    %2300 = vmatprep.subr.mxu0 0.0
    %2301 = vmatpush2.msra.mxu0 0.0
    %2302 = vmatprep.subr.mxu0 0.0
    %2303 = vmatpush2.msra.mxu0 0.0
    %2304 = vmatprep.subr.mxu0 0.0
    %2305 = vmatpush2.msra.mxu0 0.0
    %2306 = vmatprep.subr.mxu0 0.0
    %2307 = vmatpush2.msra.mxu0 0.0
    %2308 = vmatprep.subr.mxu0 0.0
    %2309 = vmatpush2.msra.mxu0 0.0
    %2310 = vmatprep.subr.mxu0 0.0
    %2311 = vmatpush2.msra.mxu0 0.0
    %2312 = vmatprep.subr.mxu0 0.0
    %2313 = vmatpush2.msra.mxu0 0.0
    %2314 = vmatprep.subr.mxu0 0.0
    %2315 = vmatpush2.msra.mxu0 0.0
    %2316 = vmatprep.subr.mxu0 0.0
    %2317 = vmatpush2.msra.mxu0 0.0
    %2318 = vmatprep.mubr.f32.mxu0 0.0
    %2319 = vmatmul.mubr.f32.gmra.mxu0 %v2252
    %v2320 = vpop.f32.mrf.mxu0
    %v2321 = vadd.f32 0.0, %v2320
    %v2322 = vpop.f32.mrf.mxu0
    %v2323 = vadd.f32 0.0, %v2322
    %2324 = vdwg.mxu0
    %2325 = vmatprep.subr.mxu0 %v696
    %2326 = vmatpush1.msra.mxu0 %v695
    %2327 = vmatprep.subr.mxu0 %v692
    %2328 = vmatpush1.msra.mxu0 %v691
    %2329 = vmatprep.subr.mxu0 %v688
    %2330 = vmatpush1.msra.mxu0 %v687
    %2331 = vmatprep.subr.mxu0 %v684
    %2332 = vmatpush1.msra.mxu0 %v683
    %2333 = vmatprep.subr.mxu0 %v680
    %2334 = vmatpush1.msra.mxu0 %v679
    %2335 = vmatprep.subr.mxu0 %v676
    %2336 = vmatpush1.msra.mxu0 %v675
    %2337 = vmatprep.subr.mxu0 %v672
    %2338 = vmatpush1.msra.mxu0 %v671
    %2339 = vmatprep.subr.mxu0 %v668
    %2340 = vmatpush1.msra.mxu0 %v667
    %2341 = vmatprep.subr.mxu0 %v664
    %2342 = vmatpush1.msra.mxu0 %v663
    %2343 = vmatprep.subr.mxu0 %v660
    %2344 = vmatpush1.msra.mxu0 %v659
    %2345 = vmatprep.subr.mxu0 %v656
    %2346 = vmatpush1.msra.mxu0 %v655
    %2347 = vmatprep.subr.mxu0 %v652
    %2348 = vmatpush1.msra.mxu0 %v651
    %2349 = vmatprep.subr.mxu0 %v648
    %2350 = vmatpush1.msra.mxu0 %v647
    %2351 = vmatprep.subr.mxu0 %v644
    %2352 = vmatpush1.msra.mxu0 %v643
    %2353 = vmatprep.subr.mxu0 %v640
    %2354 = vmatpush1.msra.mxu0 %v639
    %2355 = vmatprep.subr.mxu0 %v636
    %2356 = vmatpush1.msra.mxu0 %v635
    %2357 = vmatprep.subr.mxu0 0.0
    %2358 = vmatpush2.msra.mxu0 0.0
    %2359 = vmatprep.subr.mxu0 0.0
    %2360 = vmatpush2.msra.mxu0 0.0
    %2361 = vmatprep.subr.mxu0 0.0
    %2362 = vmatpush2.msra.mxu0 0.0
    %2363 = vmatprep.subr.mxu0 0.0
    %2364 = vmatpush2.msra.mxu0 0.0
    %2365 = vmatprep.subr.mxu0 0.0
    %2366 = vmatpush2.msra.mxu0 0.0
    %2367 = vmatprep.subr.mxu0 0.0
    %2368 = vmatpush2.msra.mxu0 0.0
    %2369 = vmatprep.subr.mxu0 0.0
    %2370 = vmatpush2.msra.mxu0 0.0
    %2371 = vmatprep.subr.mxu0 0.0
    %2372 = vmatpush2.msra.mxu0 0.0
    %2373 = vmatprep.subr.mxu0 0.0
    %2374 = vmatpush2.msra.mxu0 0.0
    %2375 = vmatprep.subr.mxu0 0.0
    %2376 = vmatpush2.msra.mxu0 0.0
    %2377 = vmatprep.subr.mxu0 0.0
    %2378 = vmatpush2.msra.mxu0 0.0
    %2379 = vmatprep.subr.mxu0 0.0
    %2380 = vmatpush2.msra.mxu0 0.0
    %2381 = vmatprep.subr.mxu0 0.0
    %2382 = vmatpush2.msra.mxu0 0.0
    %2383 = vmatprep.subr.mxu0 0.0
    %2384 = vmatpush2.msra.mxu0 0.0
    %2385 = vmatprep.subr.mxu0 0.0
    %2386 = vmatpush2.msra.mxu0 0.0
    %2387 = vmatprep.subr.mxu0 0.0
    %2388 = vmatpush2.msra.mxu0 0.0
    %2389 = vmatprep.mubr.f32.mxu0 0.0
    %2390 = vmatmul.mubr.f32.gmra.mxu0 %v2252
    %v2391 = vpop.f32.mrf.mxu0
    %v2392 = vadd.f32 0.0, %v2391
    %v2393 = vpop.f32.mrf.mxu0
    %v2394 = vadd.f32 0.0, %v2393
    %2395 = vdwg.mxu0
    %v2396 = vadd.f32 %v2243, %v2321
    %v2397 = vadd.f32 %v2244, %v2323
    %v2398 = vadd.f32 %v2245, %v2392
    %v2399 = vadd.f32 %v2246, %v2394
    %2400 = vmatprep.subr.mxu0 %v758
    %2401 = vmatpush1.msra.mxu0 %v757
    %2402 = vmatprep.subr.mxu0 %v754
    %2403 = vmatpush1.msra.mxu0 %v753
    %2404 = vmatprep.subr.mxu0 %v750
    %2405 = vmatpush1.msra.mxu0 %v749
    %2406 = vmatprep.subr.mxu0 %v746
    %2407 = vmatpush1.msra.mxu0 %v745
    %2408 = vmatprep.subr.mxu0 %v742
    %2409 = vmatpush1.msra.mxu0 %v741
    %2410 = vmatprep.subr.mxu0 %v738
    %2411 = vmatpush1.msra.mxu0 %v737
    %2412 = vmatprep.subr.mxu0 %v734
    %2413 = vmatpush1.msra.mxu0 %v733
    %2414 = vmatprep.subr.mxu0 %v730
    %2415 = vmatpush1.msra.mxu0 %v729
    %2416 = vmatprep.subr.mxu0 %v726
    %2417 = vmatpush1.msra.mxu0 %v725
    %2418 = vmatprep.subr.mxu0 %v722
    %2419 = vmatpush1.msra.mxu0 %v721
    %2420 = vmatprep.subr.mxu0 %v718
    %2421 = vmatpush1.msra.mxu0 %v717
    %2422 = vmatprep.subr.mxu0 %v714
    %2423 = vmatpush1.msra.mxu0 %v713
    %2424 = vmatprep.subr.mxu0 %v710
    %2425 = vmatpush1.msra.mxu0 %v709
    %2426 = vmatprep.subr.mxu0 %v706
    %2427 = vmatpush1.msra.mxu0 %v705
    %2428 = vmatprep.subr.mxu0 %v702
    %2429 = vmatpush1.msra.mxu0 %v701
    %2430 = vmatprep.subr.mxu0 %v698
    %2431 = vmatpush1.msra.mxu0 %v697
    %2432 = vmatprep.subr.mxu0 0.0
    %2433 = vmatpush2.msra.mxu0 0.0
    %2434 = vmatprep.subr.mxu0 0.0
    %2435 = vmatpush2.msra.mxu0 0.0
    %2436 = vmatprep.subr.mxu0 0.0
    %2437 = vmatpush2.msra.mxu0 0.0
    %2438 = vmatprep.subr.mxu0 0.0
    %2439 = vmatpush2.msra.mxu0 0.0
    %2440 = vmatprep.subr.mxu0 0.0
    %2441 = vmatpush2.msra.mxu0 0.0
    %2442 = vmatprep.subr.mxu0 0.0
    %2443 = vmatpush2.msra.mxu0 0.0
    %2444 = vmatprep.subr.mxu0 0.0
    %2445 = vmatpush2.msra.mxu0 0.0
    %2446 = vmatprep.subr.mxu0 0.0
    %2447 = vmatpush2.msra.mxu0 0.0
    %2448 = vmatprep.subr.mxu0 0.0
    %2449 = vmatpush2.msra.mxu0 0.0
    %2450 = vmatprep.subr.mxu0 0.0
    %2451 = vmatpush2.msra.mxu0 0.0
    %2452 = vmatprep.subr.mxu0 0.0
    %2453 = vmatpush2.msra.mxu0 0.0
    %2454 = vmatprep.subr.mxu0 0.0
    %2455 = vmatpush2.msra.mxu0 0.0
    %2456 = vmatprep.subr.mxu0 0.0
    %2457 = vmatpush2.msra.mxu0 0.0
    %2458 = vmatprep.subr.mxu0 0.0
    %2459 = vmatpush2.msra.mxu0 0.0
    %2460 = vmatprep.subr.mxu0 0.0
    %2461 = vmatpush2.msra.mxu0 0.0
    %2462 = vmatprep.subr.mxu0 0.0
    %2463 = vmatpush2.msra.mxu0 0.0
    %2464 = vmatprep.mubr.f32.mxu0 0.0
    %2465 = vmatmul.mubr.f32.gmra.mxu0 %v2238
    %v2466 = vpop.f32.mrf.mxu0
    %v2467 = vadd.f32 0.0, %v2466
    %v2468 = vpop.f32.mrf.mxu0
    %v2469 = vadd.f32 0.0, %v2468
    %2470 = vdwg.mxu0
    %2471 = vmatprep.subr.mxu0 %v760
    %2472 = vmatpush1.msra.mxu0 %v759
    %2473 = vmatprep.subr.mxu0 %v756
    %2474 = vmatpush1.msra.mxu0 %v755
    %2475 = vmatprep.subr.mxu0 %v752
    %2476 = vmatpush1.msra.mxu0 %v751
    %2477 = vmatprep.subr.mxu0 %v748
    %2478 = vmatpush1.msra.mxu0 %v747
    %2479 = vmatprep.subr.mxu0 %v744
    %2480 = vmatpush1.msra.mxu0 %v743
    %2481 = vmatprep.subr.mxu0 %v740
    %2482 = vmatpush1.msra.mxu0 %v739
    %2483 = vmatprep.subr.mxu0 %v736
    %2484 = vmatpush1.msra.mxu0 %v735
    %2485 = vmatprep.subr.mxu0 %v732
    %2486 = vmatpush1.msra.mxu0 %v731
    %2487 = vmatprep.subr.mxu0 %v728
    %2488 = vmatpush1.msra.mxu0 %v727
    %2489 = vmatprep.subr.mxu0 %v724
    %2490 = vmatpush1.msra.mxu0 %v723
    %2491 = vmatprep.subr.mxu0 %v720
    %2492 = vmatpush1.msra.mxu0 %v719
    %2493 = vmatprep.subr.mxu0 %v716
    %2494 = vmatpush1.msra.mxu0 %v715
    %2495 = vmatprep.subr.mxu0 %v712
    %2496 = vmatpush1.msra.mxu0 %v711
    %2497 = vmatprep.subr.mxu0 %v708
    %2498 = vmatpush1.msra.mxu0 %v707
    %2499 = vmatprep.subr.mxu0 %v704
    %2500 = vmatpush1.msra.mxu0 %v703
    %2501 = vmatprep.subr.mxu0 %v700
    %2502 = vmatpush1.msra.mxu0 %v699
    %2503 = vmatprep.subr.mxu0 0.0
    %2504 = vmatpush2.msra.mxu0 0.0
    %2505 = vmatprep.subr.mxu0 0.0
    %2506 = vmatpush2.msra.mxu0 0.0
    %2507 = vmatprep.subr.mxu0 0.0
    %2508 = vmatpush2.msra.mxu0 0.0
    %2509 = vmatprep.subr.mxu0 0.0
    %2510 = vmatpush2.msra.mxu0 0.0
    %2511 = vmatprep.subr.mxu0 0.0
    %2512 = vmatpush2.msra.mxu0 0.0
    %2513 = vmatprep.subr.mxu0 0.0
    %2514 = vmatpush2.msra.mxu0 0.0
    %2515 = vmatprep.subr.mxu0 0.0
    %2516 = vmatpush2.msra.mxu0 0.0
    %2517 = vmatprep.subr.mxu0 0.0
    %2518 = vmatpush2.msra.mxu0 0.0
    %2519 = vmatprep.subr.mxu0 0.0
    %2520 = vmatpush2.msra.mxu0 0.0
    %2521 = vmatprep.subr.mxu0 0.0
    %2522 = vmatpush2.msra.mxu0 0.0
    %2523 = vmatprep.subr.mxu0 0.0
    %2524 = vmatpush2.msra.mxu0 0.0
    %2525 = vmatprep.subr.mxu0 0.0
    %2526 = vmatpush2.msra.mxu0 0.0
    %2527 = vmatprep.subr.mxu0 0.0
    %2528 = vmatpush2.msra.mxu0 0.0
    %2529 = vmatprep.subr.mxu0 0.0
    %2530 = vmatpush2.msra.mxu0 0.0
    %2531 = vmatprep.subr.mxu0 0.0
    %2532 = vmatpush2.msra.mxu0 0.0
    %2533 = vmatprep.subr.mxu0 0.0
    %2534 = vmatpush2.msra.mxu0 0.0
    %2535 = vmatprep.mubr.f32.mxu0 0.0
    %2536 = vmatmul.mubr.f32.gmra.mxu0 %v2238
    %v2537 = vpop.f32.mrf.mxu0
    %v2538 = vadd.f32 0.0, %v2537
    %v2539 = vpop.f32.mrf.mxu0
    %v2540 = vadd.f32 0.0, %v2539
    %2541 = vdwg.mxu0
    %v2546 = vrot.slane %v2467, 4
    %v2547 = vrot.slane %v2469, 4
    %v2548 = vrot.slane %v2538, 4
    %v2549 = vrot.slane %v2540, 4
    %v2554 = vadd.f32 %v2247, %v2546
    %v2555 = vadd.f32 %v2248, %v2547
    %v2556 = vadd.f32 %v2249, %v2548
    %v2557 = vadd.f32 %v2250, %v2549
    %v2558 = vxor.u32 %v2396, 2147483648
    %v2559 = vxor.u32 %v2397, 2147483648
    %v2560 = vxor.u32 %v2399, 2147483648
    %v2561 = vmul.f32 %v2558, 1.442695
    %v2562 = vpow.pop %v2561
    %v2563 = vmul.f32 %v2559, 1.442695
    %v2564 = vpow.pop %v2563
    %v2565 = vmul.f32 %v2560, 1.442695
    %v2566 = vpow.pop %v2565
    %v2567 = vadd.f32 %v2562, 1.0
    %v2568 = vadd.f32 %v2564, 1.0
    %v2569 = vadd.f32 %v2566, 1.0
    %v2570 = vrcp.pop %v2567
    %v2571 = vmul.f32 1.0, %v2570
    %v2572 = vrcp.pop %v2568
    %v2573 = vmul.f32 1.0, %v2572
    %v2574 = vrcp.pop %v2569
    %v2575 = vmul.f32 1.0, %v2574
    %v2576 = vxor.u32 %v2554, 2147483648
    %v2577 = vxor.u32 %v2555, 2147483648
    %v2578 = vxor.u32 %v2557, 2147483648
    %v2579 = vmul.f32 %v2576, 1.442695
    %v2580 = vpow.pop %v2579
    %v2581 = vmul.f32 %v2577, 1.442695
    %v2582 = vpow.pop %v2581
    %v2583 = vmul.f32 %v2578, 1.442695
    %v2584 = vpow.pop %v2583
    %v2585 = vadd.f32 %v2580, 1.0
    %v2586 = vadd.f32 %v2582, 1.0
    %v2587 = vadd.f32 %v2584, 1.0
    %v2588 = vrcp.pop %v2585
    %v2589 = vmul.f32 1.0, %v2588
    %v2590 = vrcp.pop %v2586
    %v2591 = vmul.f32 1.0, %v2590
    %v2592 = vrcp.pop %v2587
    %v2593 = vmul.f32 1.0, %v2592
    %v2594 = vtanh.pop %v2398
    %v2595 = vtanh.pop %v2556
    %v2597 = vrot.slane %v2228, 4
    %v2599 = vmul.f32 %v2573, %v2597
    %v2600 = vmul.f32 %v2571, %v2594
    %v2601 = vadd.f32 %v2599, %v2600
    %v2603 = vrot.slane %v2234, 4
    %v2605 = vmul.f32 %v2591, %v2603
    %v2606 = vmul.f32 %v2589, %v2595
    %v2607 = vadd.f32 %v2605, %v2606
    %v2608 = vtanh.pop %v2601
    %v2609 = vmul.f32 %v2575, %v2608
    %v2610 = vtanh.pop %v2607
    %v2611 = vmul.f32 %v2593, %v2610
    %s2612 = scalar_lea.vmem [#allocation3], 16
    %2613 = vst [vmem:[%s2612] sm:$0xf] %v2609
    %s2614 = scalar_lea.vmem [#allocation4], 12
    %2615 = vst [vmem:[%s2614 - $0x4] sm:$0xf0] %v2611
    %v2616 = vld [vmem:[#allocation2 + $0x80] sm:$0xf0]
    %v2617 = vld [vmem:[#allocation2 + $0x88] sm:$0xf0]
    %v2618 = vld [vmem:[#allocation2 + $0x90] sm:$0xf0]
    %v2619 = vld [vmem:[#allocation2 + $0x98] sm:$0xf0]
    %v2620 = vld [vmem:[#allocation2 + $0x60] sm:$0xf]
    %v2621 = vld [vmem:[#allocation2 + $0x68] sm:$0xf]
    %v2622 = vld [vmem:[#allocation2 + $0x70] sm:$0xf]
    %v2623 = vld [vmem:[#allocation2 + $0x78] sm:$0xf]
    %2624 = vmatprep.subr.mxu0 %v694
    %2625 = vmatpush1.msra.mxu0 %v693
    %2626 = vmatprep.subr.mxu0 %v690
    %2627 = vmatpush1.msra.mxu0 %v689
    %2628 = vmatprep.subr.mxu0 %v686
    %2629 = vmatpush1.msra.mxu0 %v685
    %2630 = vmatprep.subr.mxu0 %v682
    %2631 = vmatpush1.msra.mxu0 %v681
    %2632 = vmatprep.subr.mxu0 %v678
    %2633 = vmatpush1.msra.mxu0 %v677
    %2634 = vmatprep.subr.mxu0 %v674
    %2635 = vmatpush1.msra.mxu0 %v673
    %2636 = vmatprep.subr.mxu0 %v670
    %2637 = vmatpush1.msra.mxu0 %v669
    %2638 = vmatprep.subr.mxu0 %v666
    %2639 = vmatpush1.msra.mxu0 %v665
    %2640 = vmatprep.subr.mxu0 %v662
    %2641 = vmatpush1.msra.mxu0 %v661
    %2642 = vmatprep.subr.mxu0 %v658
    %2643 = vmatpush1.msra.mxu0 %v657
    %2644 = vmatprep.subr.mxu0 %v654
    %2645 = vmatpush1.msra.mxu0 %v653
    %2646 = vmatprep.subr.mxu0 %v650
    %2647 = vmatpush1.msra.mxu0 %v649
    %2648 = vmatprep.subr.mxu0 %v646
    %2649 = vmatpush1.msra.mxu0 %v645
    %2650 = vmatprep.subr.mxu0 %v642
    %2651 = vmatpush1.msra.mxu0 %v641
    %2652 = vmatprep.subr.mxu0 %v638
    %2653 = vmatpush1.msra.mxu0 %v637
    %2654 = vmatprep.subr.mxu0 %v634
    %2655 = vmatpush1.msra.mxu0 %v633
    %2656 = vmatprep.subr.mxu0 0.0
    %2657 = vmatpush2.msra.mxu0 0.0
    %2658 = vmatprep.subr.mxu0 0.0
    %2659 = vmatpush2.msra.mxu0 0.0
    %2660 = vmatprep.subr.mxu0 0.0
    %2661 = vmatpush2.msra.mxu0 0.0
    %2662 = vmatprep.subr.mxu0 0.0
    %2663 = vmatpush2.msra.mxu0 0.0
    %2664 = vmatprep.subr.mxu0 0.0
    %2665 = vmatpush2.msra.mxu0 0.0
    %2666 = vmatprep.subr.mxu0 0.0
    %2667 = vmatpush2.msra.mxu0 0.0
    %2668 = vmatprep.subr.mxu0 0.0
    %2669 = vmatpush2.msra.mxu0 0.0
    %2670 = vmatprep.subr.mxu0 0.0
    %2671 = vmatpush2.msra.mxu0 0.0
    %2672 = vmatprep.subr.mxu0 0.0
    %2673 = vmatpush2.msra.mxu0 0.0
    %2674 = vmatprep.subr.mxu0 0.0
    %2675 = vmatpush2.msra.mxu0 0.0
    %2676 = vmatprep.subr.mxu0 0.0
    %2677 = vmatpush2.msra.mxu0 0.0
    %2678 = vmatprep.subr.mxu0 0.0
    %2679 = vmatpush2.msra.mxu0 0.0
    %2680 = vmatprep.subr.mxu0 0.0
    %2681 = vmatpush2.msra.mxu0 0.0
    %2682 = vmatprep.subr.mxu0 0.0
    %2683 = vmatpush2.msra.mxu0 0.0
    %2684 = vmatprep.subr.mxu0 0.0
    %2685 = vmatpush2.msra.mxu0 0.0
    %2686 = vmatprep.subr.mxu0 0.0
    %2687 = vmatpush2.msra.mxu0 0.0
    %2688 = vmatprep.mubr.f32.mxu0 0.0
    %2689 = vmatmul.mubr.f32.gmra.mxu0 %v2609
    %v2690 = vpop.f32.mrf.mxu0
    %v2691 = vadd.f32 0.0, %v2690
    %v2692 = vpop.f32.mrf.mxu0
    %v2693 = vadd.f32 0.0, %v2692
    %2694 = vdwg.mxu0
    %2695 = vmatprep.subr.mxu0 %v696
    %2696 = vmatpush1.msra.mxu0 %v695
    %2697 = vmatprep.subr.mxu0 %v692
    %2698 = vmatpush1.msra.mxu0 %v691
    %2699 = vmatprep.subr.mxu0 %v688
    %2700 = vmatpush1.msra.mxu0 %v687
    %2701 = vmatprep.subr.mxu0 %v684
    %2702 = vmatpush1.msra.mxu0 %v683
    %2703 = vmatprep.subr.mxu0 %v680
    %2704 = vmatpush1.msra.mxu0 %v679
    %2705 = vmatprep.subr.mxu0 %v676
    %2706 = vmatpush1.msra.mxu0 %v675
    %2707 = vmatprep.subr.mxu0 %v672
    %2708 = vmatpush1.msra.mxu0 %v671
    %2709 = vmatprep.subr.mxu0 %v668
    %2710 = vmatpush1.msra.mxu0 %v667
    %2711 = vmatprep.subr.mxu0 %v664
    %2712 = vmatpush1.msra.mxu0 %v663
    %2713 = vmatprep.subr.mxu0 %v660
    %2714 = vmatpush1.msra.mxu0 %v659
    %2715 = vmatprep.subr.mxu0 %v656
    %2716 = vmatpush1.msra.mxu0 %v655
    %2717 = vmatprep.subr.mxu0 %v652
    %2718 = vmatpush1.msra.mxu0 %v651
    %2719 = vmatprep.subr.mxu0 %v648
    %2720 = vmatpush1.msra.mxu0 %v647
    %2721 = vmatprep.subr.mxu0 %v644
    %2722 = vmatpush1.msra.mxu0 %v643
    %2723 = vmatprep.subr.mxu0 %v640
    %2724 = vmatpush1.msra.mxu0 %v639
    %2725 = vmatprep.subr.mxu0 %v636
    %2726 = vmatpush1.msra.mxu0 %v635
    %2727 = vmatprep.subr.mxu0 0.0
    %2728 = vmatpush2.msra.mxu0 0.0
    %2729 = vmatprep.subr.mxu0 0.0
    %2730 = vmatpush2.msra.mxu0 0.0
    %2731 = vmatprep.subr.mxu0 0.0
    %2732 = vmatpush2.msra.mxu0 0.0
    %2733 = vmatprep.subr.mxu0 0.0
    %2734 = vmatpush2.msra.mxu0 0.0
    %2735 = vmatprep.subr.mxu0 0.0
    %2736 = vmatpush2.msra.mxu0 0.0
    %2737 = vmatprep.subr.mxu0 0.0
    %2738 = vmatpush2.msra.mxu0 0.0
    %2739 = vmatprep.subr.mxu0 0.0
    %2740 = vmatpush2.msra.mxu0 0.0
    %2741 = vmatprep.subr.mxu0 0.0
    %2742 = vmatpush2.msra.mxu0 0.0
    %2743 = vmatprep.subr.mxu0 0.0
    %2744 = vmatpush2.msra.mxu0 0.0
    %2745 = vmatprep.subr.mxu0 0.0
    %2746 = vmatpush2.msra.mxu0 0.0
    %2747 = vmatprep.subr.mxu0 0.0
    %2748 = vmatpush2.msra.mxu0 0.0
    %2749 = vmatprep.subr.mxu0 0.0
    %2750 = vmatpush2.msra.mxu0 0.0
    %2751 = vmatprep.subr.mxu0 0.0
    %2752 = vmatpush2.msra.mxu0 0.0
    %2753 = vmatprep.subr.mxu0 0.0
    %2754 = vmatpush2.msra.mxu0 0.0
    %2755 = vmatprep.subr.mxu0 0.0
    %2756 = vmatpush2.msra.mxu0 0.0
    %2757 = vmatprep.subr.mxu0 0.0
    %2758 = vmatpush2.msra.mxu0 0.0
    %2759 = vmatprep.mubr.f32.mxu0 0.0
    %2760 = vmatmul.mubr.f32.gmra.mxu0 %v2609
    %v2761 = vpop.f32.mrf.mxu0
    %v2762 = vadd.f32 0.0, %v2761
    %v2763 = vpop.f32.mrf.mxu0
    %v2764 = vadd.f32 0.0, %v2763
    %2765 = vdwg.mxu0
    %v2770 = vrot.slane %v2691, 4
    %v2771 = vrot.slane %v2693, 4
    %v2772 = vrot.slane %v2762, 4
    %v2773 = vrot.slane %v2764, 4
    %v2778 = vadd.f32 %v2616, %v2770
    %v2779 = vadd.f32 %v2617, %v2771
    %v2780 = vadd.f32 %v2618, %v2772
    %v2781 = vadd.f32 %v2619, %v2773
    %v2783 = vrot.slane %v2611, 4
    %2785 = vmatprep.subr.mxu0 %v758
    %2786 = vmatpush1.msra.mxu0 %v757
    %2787 = vmatprep.subr.mxu0 %v754
    %2788 = vmatpush1.msra.mxu0 %v753
    %2789 = vmatprep.subr.mxu0 %v750
    %2790 = vmatpush1.msra.mxu0 %v749
    %2791 = vmatprep.subr.mxu0 %v746
    %2792 = vmatpush1.msra.mxu0 %v745
    %2793 = vmatprep.subr.mxu0 %v742
    %2794 = vmatpush1.msra.mxu0 %v741
    %2795 = vmatprep.subr.mxu0 %v738
    %2796 = vmatpush1.msra.mxu0 %v737
    %2797 = vmatprep.subr.mxu0 %v734
    %2798 = vmatpush1.msra.mxu0 %v733
    %2799 = vmatprep.subr.mxu0 %v730
    %2800 = vmatpush1.msra.mxu0 %v729
    %2801 = vmatprep.subr.mxu0 %v726
    %2802 = vmatpush1.msra.mxu0 %v725
    %2803 = vmatprep.subr.mxu0 %v722
    %2804 = vmatpush1.msra.mxu0 %v721
    %2805 = vmatprep.subr.mxu0 %v718
    %2806 = vmatpush1.msra.mxu0 %v717
    %2807 = vmatprep.subr.mxu0 %v714
    %2808 = vmatpush1.msra.mxu0 %v713
    %2809 = vmatprep.subr.mxu0 %v710
    %2810 = vmatpush1.msra.mxu0 %v709
    %2811 = vmatprep.subr.mxu0 %v706
    %2812 = vmatpush1.msra.mxu0 %v705
    %2813 = vmatprep.subr.mxu0 %v702
    %2814 = vmatpush1.msra.mxu0 %v701
    %2815 = vmatprep.subr.mxu0 %v698
    %2816 = vmatpush1.msra.mxu0 %v697
    %2817 = vmatprep.subr.mxu0 0.0
    %2818 = vmatpush2.msra.mxu0 0.0
    %2819 = vmatprep.subr.mxu0 0.0
    %2820 = vmatpush2.msra.mxu0 0.0
    %2821 = vmatprep.subr.mxu0 0.0
    %2822 = vmatpush2.msra.mxu0 0.0
    %2823 = vmatprep.subr.mxu0 0.0
    %2824 = vmatpush2.msra.mxu0 0.0
    %2825 = vmatprep.subr.mxu0 0.0
    %2826 = vmatpush2.msra.mxu0 0.0
    %2827 = vmatprep.subr.mxu0 0.0
    %2828 = vmatpush2.msra.mxu0 0.0
    %2829 = vmatprep.subr.mxu0 0.0
    %2830 = vmatpush2.msra.mxu0 0.0
    %2831 = vmatprep.subr.mxu0 0.0
    %2832 = vmatpush2.msra.mxu0 0.0
    %2833 = vmatprep.subr.mxu0 0.0
    %2834 = vmatpush2.msra.mxu0 0.0
    %2835 = vmatprep.subr.mxu0 0.0
    %2836 = vmatpush2.msra.mxu0 0.0
    %2837 = vmatprep.subr.mxu0 0.0
    %2838 = vmatpush2.msra.mxu0 0.0
    %2839 = vmatprep.subr.mxu0 0.0
    %2840 = vmatpush2.msra.mxu0 0.0
    %2841 = vmatprep.subr.mxu0 0.0
    %2842 = vmatpush2.msra.mxu0 0.0
    %2843 = vmatprep.subr.mxu0 0.0
    %2844 = vmatpush2.msra.mxu0 0.0
    %2845 = vmatprep.subr.mxu0 0.0
    %2846 = vmatpush2.msra.mxu0 0.0
    %2847 = vmatprep.subr.mxu0 0.0
    %2848 = vmatpush2.msra.mxu0 0.0
    %2849 = vmatprep.mubr.f32.mxu0 0.0
    %2850 = vmatmul.mubr.f32.gmra.mxu0 %v2783
    %v2851 = vpop.f32.mrf.mxu0
    %v2852 = vadd.f32 0.0, %v2851
    %v2853 = vpop.f32.mrf.mxu0
    %v2854 = vadd.f32 0.0, %v2853
    %2855 = vdwg.mxu0
    %2856 = vmatprep.subr.mxu0 %v760
    %2857 = vmatpush1.msra.mxu0 %v759
    %2858 = vmatprep.subr.mxu0 %v756
    %2859 = vmatpush1.msra.mxu0 %v755
    %2860 = vmatprep.subr.mxu0 %v752
    %2861 = vmatpush1.msra.mxu0 %v751
    %2862 = vmatprep.subr.mxu0 %v748
    %2863 = vmatpush1.msra.mxu0 %v747
    %2864 = vmatprep.subr.mxu0 %v744
    %2865 = vmatpush1.msra.mxu0 %v743
    %2866 = vmatprep.subr.mxu0 %v740
    %2867 = vmatpush1.msra.mxu0 %v739
    %2868 = vmatprep.subr.mxu0 %v736
    %2869 = vmatpush1.msra.mxu0 %v735
    %2870 = vmatprep.subr.mxu0 %v732
    %2871 = vmatpush1.msra.mxu0 %v731
    %2872 = vmatprep.subr.mxu0 %v728
    %2873 = vmatpush1.msra.mxu0 %v727
    %2874 = vmatprep.subr.mxu0 %v724
    %2875 = vmatpush1.msra.mxu0 %v723
    %2876 = vmatprep.subr.mxu0 %v720
    %2877 = vmatpush1.msra.mxu0 %v719
    %2878 = vmatprep.subr.mxu0 %v716
    %2879 = vmatpush1.msra.mxu0 %v715
    %2880 = vmatprep.subr.mxu0 %v712
    %2881 = vmatpush1.msra.mxu0 %v711
    %2882 = vmatprep.subr.mxu0 %v708
    %2883 = vmatpush1.msra.mxu0 %v707
    %2884 = vmatprep.subr.mxu0 %v704
    %2885 = vmatpush1.msra.mxu0 %v703
    %2886 = vmatprep.subr.mxu0 %v700
    %2887 = vmatpush1.msra.mxu0 %v699
    %2888 = vmatprep.subr.mxu0 0.0
    %2889 = vmatpush2.msra.mxu0 0.0
    %2890 = vmatprep.subr.mxu0 0.0
    %2891 = vmatpush2.msra.mxu0 0.0
    %2892 = vmatprep.subr.mxu0 0.0
    %2893 = vmatpush2.msra.mxu0 0.0
    %2894 = vmatprep.subr.mxu0 0.0
    %2895 = vmatpush2.msra.mxu0 0.0
    %2896 = vmatprep.subr.mxu0 0.0
    %2897 = vmatpush2.msra.mxu0 0.0
    %2898 = vmatprep.subr.mxu0 0.0
    %2899 = vmatpush2.msra.mxu0 0.0
    %2900 = vmatprep.subr.mxu0 0.0
    %2901 = vmatpush2.msra.mxu0 0.0
    %2902 = vmatprep.subr.mxu0 0.0
    %2903 = vmatpush2.msra.mxu0 0.0
    %2904 = vmatprep.subr.mxu0 0.0
    %2905 = vmatpush2.msra.mxu0 0.0
    %2906 = vmatprep.subr.mxu0 0.0
    %2907 = vmatpush2.msra.mxu0 0.0
    %2908 = vmatprep.subr.mxu0 0.0
    %2909 = vmatpush2.msra.mxu0 0.0
    %2910 = vmatprep.subr.mxu0 0.0
    %2911 = vmatpush2.msra.mxu0 0.0
    %2912 = vmatprep.subr.mxu0 0.0
    %2913 = vmatpush2.msra.mxu0 0.0
    %2914 = vmatprep.subr.mxu0 0.0
    %2915 = vmatpush2.msra.mxu0 0.0
    %2916 = vmatprep.subr.mxu0 0.0
    %2917 = vmatpush2.msra.mxu0 0.0
    %2918 = vmatprep.subr.mxu0 0.0
    %2919 = vmatpush2.msra.mxu0 0.0
    %2920 = vmatprep.mubr.f32.mxu0 0.0
    %2921 = vmatmul.mubr.f32.gmra.mxu0 %v2783
    %v2922 = vpop.f32.mrf.mxu0
    %v2923 = vadd.f32 0.0, %v2922
    %v2924 = vpop.f32.mrf.mxu0
    %v2925 = vadd.f32 0.0, %v2924
    %2926 = vdwg.mxu0
    %v2927 = vadd.f32 %v2620, %v2852
    %v2928 = vadd.f32 %v2621, %v2854
    %v2929 = vadd.f32 %v2622, %v2923
    %v2930 = vadd.f32 %v2623, %v2925
    %v2931 = vxor.u32 %v2778, 2147483648
    %v2932 = vxor.u32 %v2779, 2147483648
    %v2933 = vxor.u32 %v2781, 2147483648
    %v2934 = vmul.f32 %v2931, 1.442695
    %v2935 = vpow.pop %v2934
    %v2936 = vmul.f32 %v2932, 1.442695
    %v2937 = vpow.pop %v2936
    %v2938 = vmul.f32 %v2933, 1.442695
    %v2939 = vpow.pop %v2938
    %v2940 = vadd.f32 %v2935, 1.0
    %v2941 = vadd.f32 %v2937, 1.0
    %v2942 = vadd.f32 %v2939, 1.0
    %v2943 = vrcp.pop %v2940
    %v2944 = vmul.f32 1.0, %v2943
    %v2945 = vrcp.pop %v2941
    %v2946 = vmul.f32 1.0, %v2945
    %v2947 = vrcp.pop %v2942
    %v2948 = vmul.f32 1.0, %v2947
    %v2949 = vxor.u32 %v2927, 2147483648
    %v2950 = vxor.u32 %v2928, 2147483648
    %v2951 = vxor.u32 %v2930, 2147483648
    %v2952 = vmul.f32 %v2949, 1.442695
    %v2953 = vpow.pop %v2952
    %v2954 = vmul.f32 %v2950, 1.442695
    %v2955 = vpow.pop %v2954
    %v2956 = vmul.f32 %v2951, 1.442695
    %v2957 = vpow.pop %v2956
    %v2958 = vadd.f32 %v2953, 1.0
    %v2959 = vadd.f32 %v2955, 1.0
    %v2960 = vadd.f32 %v2957, 1.0
    %v2961 = vrcp.pop %v2958
    %v2962 = vmul.f32 1.0, %v2961
    %v2963 = vrcp.pop %v2959
    %v2964 = vmul.f32 1.0, %v2963
    %v2965 = vrcp.pop %v2960
    %v2966 = vmul.f32 1.0, %v2965
    %v2967 = vtanh.pop %v2780
    %v2968 = vtanh.pop %v2929
    %v2970 = vrot.slane %v2601, 4
    %v2972 = vmul.f32 %v2946, %v2970
    %v2973 = vmul.f32 %v2944, %v2967
    %v2974 = vadd.f32 %v2972, %v2973
    %v2976 = vrot.slane %v2607, 4
    %v2978 = vmul.f32 %v2964, %v2976
    %v2979 = vmul.f32 %v2962, %v2968
    %v2980 = vadd.f32 %v2978, %v2979
    %v2981 = vtanh.pop %v2974
    %v2982 = vmul.f32 %v2948, %v2981
    %v2983 = vtanh.pop %v2980
    %v2984 = vmul.f32 %v2966, %v2983
    %s2985 = scalar_lea.vmem [#allocation3], 20
    %2986 = vst [vmem:[%s2985 - $0x4] sm:$0xf0] %v2982
    %s2987 = scalar_lea.vmem [#allocation4], 8
    %2988 = vst [vmem:[%s2987] sm:$0xf] %v2984
    %v2989 = vld [vmem:[#allocation2 + $0xc0] sm:$0xf]
    %v2990 = vld [vmem:[#allocation2 + $0xc8] sm:$0xf]
    %v2991 = vld [vmem:[#allocation2 + $0xd0] sm:$0xf]
    %v2992 = vld [vmem:[#allocation2 + $0xd8] sm:$0xf]
    %v2993 = vld [vmem:[#allocation2 + $0x20] sm:$0xf0]
    %v2994 = vld [vmem:[#allocation2 + $0x28] sm:$0xf0]
    %v2995 = vld [vmem:[#allocation2 + $0x30] sm:$0xf0]
    %v2996 = vld [vmem:[#allocation2 + $0x38] sm:$0xf0]
    %v2998 = vrot.slane %v2982, 4
    %3000 = vmatprep.subr.mxu0 %v694
    %3001 = vmatpush1.msra.mxu0 %v693
    %3002 = vmatprep.subr.mxu0 %v690
    %3003 = vmatpush1.msra.mxu0 %v689
    %3004 = vmatprep.subr.mxu0 %v686
    %3005 = vmatpush1.msra.mxu0 %v685
    %3006 = vmatprep.subr.mxu0 %v682
    %3007 = vmatpush1.msra.mxu0 %v681
    %3008 = vmatprep.subr.mxu0 %v678
    %3009 = vmatpush1.msra.mxu0 %v677
    %3010 = vmatprep.subr.mxu0 %v674
    %3011 = vmatpush1.msra.mxu0 %v673
    %3012 = vmatprep.subr.mxu0 %v670
    %3013 = vmatpush1.msra.mxu0 %v669
    %3014 = vmatprep.subr.mxu0 %v666
    %3015 = vmatpush1.msra.mxu0 %v665
    %3016 = vmatprep.subr.mxu0 %v662
    %3017 = vmatpush1.msra.mxu0 %v661
    %3018 = vmatprep.subr.mxu0 %v658
    %3019 = vmatpush1.msra.mxu0 %v657
    %3020 = vmatprep.subr.mxu0 %v654
    %3021 = vmatpush1.msra.mxu0 %v653
    %3022 = vmatprep.subr.mxu0 %v650
    %3023 = vmatpush1.msra.mxu0 %v649
    %3024 = vmatprep.subr.mxu0 %v646
    %3025 = vmatpush1.msra.mxu0 %v645
    %3026 = vmatprep.subr.mxu0 %v642
    %3027 = vmatpush1.msra.mxu0 %v641
    %3028 = vmatprep.subr.mxu0 %v638
    %3029 = vmatpush1.msra.mxu0 %v637
    %3030 = vmatprep.subr.mxu0 %v634
    %3031 = vmatpush1.msra.mxu0 %v633
    %3032 = vmatprep.subr.mxu0 0.0
    %3033 = vmatpush2.msra.mxu0 0.0
    %3034 = vmatprep.subr.mxu0 0.0
    %3035 = vmatpush2.msra.mxu0 0.0
    %3036 = vmatprep.subr.mxu0 0.0
    %3037 = vmatpush2.msra.mxu0 0.0
    %3038 = vmatprep.subr.mxu0 0.0
    %3039 = vmatpush2.msra.mxu0 0.0
    %3040 = vmatprep.subr.mxu0 0.0
    %3041 = vmatpush2.msra.mxu0 0.0
    %3042 = vmatprep.subr.mxu0 0.0
    %3043 = vmatpush2.msra.mxu0 0.0
    %3044 = vmatprep.subr.mxu0 0.0
    %3045 = vmatpush2.msra.mxu0 0.0
    %3046 = vmatprep.subr.mxu0 0.0
    %3047 = vmatpush2.msra.mxu0 0.0
    %3048 = vmatprep.subr.mxu0 0.0
    %3049 = vmatpush2.msra.mxu0 0.0
    %3050 = vmatprep.subr.mxu0 0.0
    %3051 = vmatpush2.msra.mxu0 0.0
    %3052 = vmatprep.subr.mxu0 0.0
    %3053 = vmatpush2.msra.mxu0 0.0
    %3054 = vmatprep.subr.mxu0 0.0
    %3055 = vmatpush2.msra.mxu0 0.0
    %3056 = vmatprep.subr.mxu0 0.0
    %3057 = vmatpush2.msra.mxu0 0.0
    %3058 = vmatprep.subr.mxu0 0.0
    %3059 = vmatpush2.msra.mxu0 0.0
    %3060 = vmatprep.subr.mxu0 0.0
    %3061 = vmatpush2.msra.mxu0 0.0
    %3062 = vmatprep.subr.mxu0 0.0
    %3063 = vmatpush2.msra.mxu0 0.0
    %3064 = vmatprep.mubr.f32.mxu0 0.0
    %3065 = vmatmul.mubr.f32.gmra.mxu0 %v2998
    %v3066 = vpop.f32.mrf.mxu0
    %v3067 = vadd.f32 0.0, %v3066
    %v3068 = vpop.f32.mrf.mxu0
    %v3069 = vadd.f32 0.0, %v3068
    %3070 = vdwg.mxu0
    %3071 = vmatprep.subr.mxu0 %v696
    %3072 = vmatpush1.msra.mxu0 %v695
    %3073 = vmatprep.subr.mxu0 %v692
    %3074 = vmatpush1.msra.mxu0 %v691
    %3075 = vmatprep.subr.mxu0 %v688
    %3076 = vmatpush1.msra.mxu0 %v687
    %3077 = vmatprep.subr.mxu0 %v684
    %3078 = vmatpush1.msra.mxu0 %v683
    %3079 = vmatprep.subr.mxu0 %v680
    %3080 = vmatpush1.msra.mxu0 %v679
    %3081 = vmatprep.subr.mxu0 %v676
    %3082 = vmatpush1.msra.mxu0 %v675
    %3083 = vmatprep.subr.mxu0 %v672
    %3084 = vmatpush1.msra.mxu0 %v671
    %3085 = vmatprep.subr.mxu0 %v668
    %3086 = vmatpush1.msra.mxu0 %v667
    %3087 = vmatprep.subr.mxu0 %v664
    %3088 = vmatpush1.msra.mxu0 %v663
    %3089 = vmatprep.subr.mxu0 %v660
    %3090 = vmatpush1.msra.mxu0 %v659
    %3091 = vmatprep.subr.mxu0 %v656
    %3092 = vmatpush1.msra.mxu0 %v655
    %3093 = vmatprep.subr.mxu0 %v652
    %3094 = vmatpush1.msra.mxu0 %v651
    %3095 = vmatprep.subr.mxu0 %v648
    %3096 = vmatpush1.msra.mxu0 %v647
    %3097 = vmatprep.subr.mxu0 %v644
    %3098 = vmatpush1.msra.mxu0 %v643
    %3099 = vmatprep.subr.mxu0 %v640
    %3100 = vmatpush1.msra.mxu0 %v639
    %3101 = vmatprep.subr.mxu0 %v636
    %3102 = vmatpush1.msra.mxu0 %v635
    %3103 = vmatprep.subr.mxu0 0.0
    %3104 = vmatpush2.msra.mxu0 0.0
    %3105 = vmatprep.subr.mxu0 0.0
    %3106 = vmatpush2.msra.mxu0 0.0
    %3107 = vmatprep.subr.mxu0 0.0
    %3108 = vmatpush2.msra.mxu0 0.0
    %3109 = vmatprep.subr.mxu0 0.0
    %3110 = vmatpush2.msra.mxu0 0.0
    %3111 = vmatprep.subr.mxu0 0.0
    %3112 = vmatpush2.msra.mxu0 0.0
    %3113 = vmatprep.subr.mxu0 0.0
    %3114 = vmatpush2.msra.mxu0 0.0
    %3115 = vmatprep.subr.mxu0 0.0
    %3116 = vmatpush2.msra.mxu0 0.0
    %3117 = vmatprep.subr.mxu0 0.0
    %3118 = vmatpush2.msra.mxu0 0.0
    %3119 = vmatprep.subr.mxu0 0.0
    %3120 = vmatpush2.msra.mxu0 0.0
    %3121 = vmatprep.subr.mxu0 0.0
    %3122 = vmatpush2.msra.mxu0 0.0
    %3123 = vmatprep.subr.mxu0 0.0
    %3124 = vmatpush2.msra.mxu0 0.0
    %3125 = vmatprep.subr.mxu0 0.0
    %3126 = vmatpush2.msra.mxu0 0.0
    %3127 = vmatprep.subr.mxu0 0.0
    %3128 = vmatpush2.msra.mxu0 0.0
    %3129 = vmatprep.subr.mxu0 0.0
    %3130 = vmatpush2.msra.mxu0 0.0
    %3131 = vmatprep.subr.mxu0 0.0
    %3132 = vmatpush2.msra.mxu0 0.0
    %3133 = vmatprep.subr.mxu0 0.0
    %3134 = vmatpush2.msra.mxu0 0.0
    %3135 = vmatprep.mubr.f32.mxu0 0.0
    %3136 = vmatmul.mubr.f32.gmra.mxu0 %v2998
    %v3137 = vpop.f32.mrf.mxu0
    %v3138 = vadd.f32 0.0, %v3137
    %v3139 = vpop.f32.mrf.mxu0
    %v3140 = vadd.f32 0.0, %v3139
    %3141 = vdwg.mxu0
    %v3142 = vadd.f32 %v2989, %v3067
    %v3143 = vadd.f32 %v2990, %v3069
    %v3144 = vadd.f32 %v2991, %v3138
    %v3145 = vadd.f32 %v2992, %v3140
    %3146 = vmatprep.subr.mxu0 %v758
    %3147 = vmatpush1.msra.mxu0 %v757
    %3148 = vmatprep.subr.mxu0 %v754
    %3149 = vmatpush1.msra.mxu0 %v753
    %3150 = vmatprep.subr.mxu0 %v750
    %3151 = vmatpush1.msra.mxu0 %v749
    %3152 = vmatprep.subr.mxu0 %v746
    %3153 = vmatpush1.msra.mxu0 %v745
    %3154 = vmatprep.subr.mxu0 %v742
    %3155 = vmatpush1.msra.mxu0 %v741
    %3156 = vmatprep.subr.mxu0 %v738
    %3157 = vmatpush1.msra.mxu0 %v737
    %3158 = vmatprep.subr.mxu0 %v734
    %3159 = vmatpush1.msra.mxu0 %v733
    %3160 = vmatprep.subr.mxu0 %v730
    %3161 = vmatpush1.msra.mxu0 %v729
    %3162 = vmatprep.subr.mxu0 %v726
    %3163 = vmatpush1.msra.mxu0 %v725
    %3164 = vmatprep.subr.mxu0 %v722
    %3165 = vmatpush1.msra.mxu0 %v721
    %3166 = vmatprep.subr.mxu0 %v718
    %3167 = vmatpush1.msra.mxu0 %v717
    %3168 = vmatprep.subr.mxu0 %v714
    %3169 = vmatpush1.msra.mxu0 %v713
    %3170 = vmatprep.subr.mxu0 %v710
    %3171 = vmatpush1.msra.mxu0 %v709
    %3172 = vmatprep.subr.mxu0 %v706
    %3173 = vmatpush1.msra.mxu0 %v705
    %3174 = vmatprep.subr.mxu0 %v702
    %3175 = vmatpush1.msra.mxu0 %v701
    %3176 = vmatprep.subr.mxu0 %v698
    %3177 = vmatpush1.msra.mxu0 %v697
    %3178 = vmatprep.subr.mxu0 0.0
    %3179 = vmatpush2.msra.mxu0 0.0
    %3180 = vmatprep.subr.mxu0 0.0
    %3181 = vmatpush2.msra.mxu0 0.0
    %3182 = vmatprep.subr.mxu0 0.0
    %3183 = vmatpush2.msra.mxu0 0.0
    %3184 = vmatprep.subr.mxu0 0.0
    %3185 = vmatpush2.msra.mxu0 0.0
    %3186 = vmatprep.subr.mxu0 0.0
    %3187 = vmatpush2.msra.mxu0 0.0
    %3188 = vmatprep.subr.mxu0 0.0
    %3189 = vmatpush2.msra.mxu0 0.0
    %3190 = vmatprep.subr.mxu0 0.0
    %3191 = vmatpush2.msra.mxu0 0.0
    %3192 = vmatprep.subr.mxu0 0.0
    %3193 = vmatpush2.msra.mxu0 0.0
    %3194 = vmatprep.subr.mxu0 0.0
    %3195 = vmatpush2.msra.mxu0 0.0
    %3196 = vmatprep.subr.mxu0 0.0
    %3197 = vmatpush2.msra.mxu0 0.0
    %3198 = vmatprep.subr.mxu0 0.0
    %3199 = vmatpush2.msra.mxu0 0.0
    %3200 = vmatprep.subr.mxu0 0.0
    %3201 = vmatpush2.msra.mxu0 0.0
    %3202 = vmatprep.subr.mxu0 0.0
    %3203 = vmatpush2.msra.mxu0 0.0
    %3204 = vmatprep.subr.mxu0 0.0
    %3205 = vmatpush2.msra.mxu0 0.0
    %3206 = vmatprep.subr.mxu0 0.0
    %3207 = vmatpush2.msra.mxu0 0.0
    %3208 = vmatprep.subr.mxu0 0.0
    %3209 = vmatpush2.msra.mxu0 0.0
    %3210 = vmatprep.mubr.f32.mxu0 0.0
    %3211 = vmatmul.mubr.f32.gmra.mxu0 %v2984
    %v3212 = vpop.f32.mrf.mxu0
    %v3213 = vadd.f32 0.0, %v3212
    %v3214 = vpop.f32.mrf.mxu0
    %v3215 = vadd.f32 0.0, %v3214
    %3216 = vdwg.mxu0
    %3217 = vmatprep.subr.mxu0 %v760
    %3218 = vmatpush1.msra.mxu0 %v759
    %3219 = vmatprep.subr.mxu0 %v756
    %3220 = vmatpush1.msra.mxu0 %v755
    %3221 = vmatprep.subr.mxu0 %v752
    %3222 = vmatpush1.msra.mxu0 %v751
    %3223 = vmatprep.subr.mxu0 %v748
    %3224 = vmatpush1.msra.mxu0 %v747
    %3225 = vmatprep.subr.mxu0 %v744
    %3226 = vmatpush1.msra.mxu0 %v743
    %3227 = vmatprep.subr.mxu0 %v740
    %3228 = vmatpush1.msra.mxu0 %v739
    %3229 = vmatprep.subr.mxu0 %v736
    %3230 = vmatpush1.msra.mxu0 %v735
    %3231 = vmatprep.subr.mxu0 %v732
    %3232 = vmatpush1.msra.mxu0 %v731
    %3233 = vmatprep.subr.mxu0 %v728
    %3234 = vmatpush1.msra.mxu0 %v727
    %3235 = vmatprep.subr.mxu0 %v724
    %3236 = vmatpush1.msra.mxu0 %v723
    %3237 = vmatprep.subr.mxu0 %v720
    %3238 = vmatpush1.msra.mxu0 %v719
    %3239 = vmatprep.subr.mxu0 %v716
    %3240 = vmatpush1.msra.mxu0 %v715
    %3241 = vmatprep.subr.mxu0 %v712
    %3242 = vmatpush1.msra.mxu0 %v711
    %3243 = vmatprep.subr.mxu0 %v708
    %3244 = vmatpush1.msra.mxu0 %v707
    %3245 = vmatprep.subr.mxu0 %v704
    %3246 = vmatpush1.msra.mxu0 %v703
    %3247 = vmatprep.subr.mxu0 %v700
    %3248 = vmatpush1.msra.mxu0 %v699
    %3249 = vmatprep.subr.mxu0 0.0
    %3250 = vmatpush2.msra.mxu0 0.0
    %3251 = vmatprep.subr.mxu0 0.0
    %3252 = vmatpush2.msra.mxu0 0.0
    %3253 = vmatprep.subr.mxu0 0.0
    %3254 = vmatpush2.msra.mxu0 0.0
    %3255 = vmatprep.subr.mxu0 0.0
    %3256 = vmatpush2.msra.mxu0 0.0
    %3257 = vmatprep.subr.mxu0 0.0
    %3258 = vmatpush2.msra.mxu0 0.0
    %3259 = vmatprep.subr.mxu0 0.0
    %3260 = vmatpush2.msra.mxu0 0.0
    %3261 = vmatprep.subr.mxu0 0.0
    %3262 = vmatpush2.msra.mxu0 0.0
    %3263 = vmatprep.subr.mxu0 0.0
    %3264 = vmatpush2.msra.mxu0 0.0
    %3265 = vmatprep.subr.mxu0 0.0
    %3266 = vmatpush2.msra.mxu0 0.0
    %3267 = vmatprep.subr.mxu0 0.0
    %3268 = vmatpush2.msra.mxu0 0.0
    %3269 = vmatprep.subr.mxu0 0.0
    %3270 = vmatpush2.msra.mxu0 0.0
    %3271 = vmatprep.subr.mxu0 0.0
    %3272 = vmatpush2.msra.mxu0 0.0
    %3273 = vmatprep.subr.mxu0 0.0
    %3274 = vmatpush2.msra.mxu0 0.0
    %3275 = vmatprep.subr.mxu0 0.0
    %3276 = vmatpush2.msra.mxu0 0.0
    %3277 = vmatprep.subr.mxu0 0.0
    %3278 = vmatpush2.msra.mxu0 0.0
    %3279 = vmatprep.subr.mxu0 0.0
    %3280 = vmatpush2.msra.mxu0 0.0
    %3281 = vmatprep.mubr.f32.mxu0 0.0
    %3282 = vmatmul.mubr.f32.gmra.mxu0 %v2984
    %v3283 = vpop.f32.mrf.mxu0
    %v3284 = vadd.f32 0.0, %v3283
    %v3285 = vpop.f32.mrf.mxu0
    %v3286 = vadd.f32 0.0, %v3285
    %3287 = vdwg.mxu0
    %v3292 = vrot.slane %v3213, 4
    %v3293 = vrot.slane %v3215, 4
    %v3294 = vrot.slane %v3284, 4
    %v3295 = vrot.slane %v3286, 4
    %v3300 = vadd.f32 %v2993, %v3292
    %v3301 = vadd.f32 %v2994, %v3293
    %v3302 = vadd.f32 %v2995, %v3294
    %v3303 = vadd.f32 %v2996, %v3295
    %v3304 = vxor.u32 %v3142, 2147483648
    %v3305 = vxor.u32 %v3143, 2147483648
    %v3306 = vxor.u32 %v3145, 2147483648
    %v3307 = vmul.f32 %v3304, 1.442695
    %v3308 = vpow.pop %v3307
    %v3309 = vmul.f32 %v3305, 1.442695
    %v3310 = vpow.pop %v3309
    %v3311 = vmul.f32 %v3306, 1.442695
    %v3312 = vpow.pop %v3311
    %v3313 = vadd.f32 %v3308, 1.0
    %v3314 = vadd.f32 %v3310, 1.0
    %v3315 = vadd.f32 %v3312, 1.0
    %v3316 = vrcp.pop %v3313
    %v3317 = vmul.f32 1.0, %v3316
    %v3318 = vrcp.pop %v3314
    %v3319 = vmul.f32 1.0, %v3318
    %v3320 = vrcp.pop %v3315
    %v3321 = vmul.f32 1.0, %v3320
    %v3322 = vxor.u32 %v3300, 2147483648
    %v3323 = vxor.u32 %v3301, 2147483648
    %v3324 = vxor.u32 %v3303, 2147483648
    %v3325 = vmul.f32 %v3322, 1.442695
    %v3326 = vpow.pop %v3325
    %v3327 = vmul.f32 %v3323, 1.442695
    %v3328 = vpow.pop %v3327
    %v3329 = vmul.f32 %v3324, 1.442695
    %v3330 = vpow.pop %v3329
    %v3331 = vadd.f32 %v3326, 1.0
    %v3332 = vadd.f32 %v3328, 1.0
    %v3333 = vadd.f32 %v3330, 1.0
    %v3334 = vrcp.pop %v3331
    %v3335 = vmul.f32 1.0, %v3334
    %v3336 = vrcp.pop %v3332
    %v3337 = vmul.f32 1.0, %v3336
    %v3338 = vrcp.pop %v3333
    %v3339 = vmul.f32 1.0, %v3338
    %v3340 = vtanh.pop %v3144
    %v3341 = vtanh.pop %v3302
    %v3343 = vrot.slane %v2974, 4
    %v3345 = vmul.f32 %v3319, %v3343
    %v3346 = vmul.f32 %v3317, %v3340
    %v3347 = vadd.f32 %v3345, %v3346
    %v3349 = vrot.slane %v2980, 4
    %v3351 = vmul.f32 %v3337, %v3349
    %v3352 = vmul.f32 %v3335, %v3341
    %v3353 = vadd.f32 %v3351, %v3352
    %v3354 = vtanh.pop %v3347
    %v3355 = vmul.f32 %v3321, %v3354
    %v3356 = vtanh.pop %v3353
    %v3357 = vmul.f32 %v3339, %v3356
    %s3358 = scalar_lea.vmem [#allocation3], 24
    %3359 = vst [vmem:[%s3358] sm:$0xf] %v3355
    %s3360 = scalar_lea.vmem [#allocation4], 4
    %3361 = vst [vmem:[%s3360 - $0x4] sm:$0xf0] %v3357
    %v3362 = vld [vmem:[#allocation2 + $0xc0] sm:$0xf0]
    %v3363 = vld [vmem:[#allocation2 + $0xc8] sm:$0xf0]
    %v3364 = vld [vmem:[#allocation2 + $0xd0] sm:$0xf0]
    %v3365 = vld [vmem:[#allocation2 + $0xd8] sm:$0xf0]
    %v3366 = vld [vmem:[#allocation2 + $0x20] sm:$0xf]
    %v3367 = vld [vmem:[#allocation2 + $0x28] sm:$0xf]
    %v3368 = vld [vmem:[#allocation2 + $0x30] sm:$0xf]
    %v3369 = vld [vmem:[#allocation2 + $0x38] sm:$0xf]
    %3370 = vmatprep.subr.mxu0 %v694
    %3371 = vmatpush1.msra.mxu0 %v693
    %3372 = vmatprep.subr.mxu0 %v690
    %3373 = vmatpush1.msra.mxu0 %v689
    %3374 = vmatprep.subr.mxu0 %v686
    %3375 = vmatpush1.msra.mxu0 %v685
    %3376 = vmatprep.subr.mxu0 %v682
    %3377 = vmatpush1.msra.mxu0 %v681
    %3378 = vmatprep.subr.mxu0 %v678
    %3379 = vmatpush1.msra.mxu0 %v677
    %3380 = vmatprep.subr.mxu0 %v674
    %3381 = vmatpush1.msra.mxu0 %v673
    %3382 = vmatprep.subr.mxu0 %v670
    %3383 = vmatpush1.msra.mxu0 %v669
    %3384 = vmatprep.subr.mxu0 %v666
    %3385 = vmatpush1.msra.mxu0 %v665
    %3386 = vmatprep.subr.mxu0 %v662
    %3387 = vmatpush1.msra.mxu0 %v661
    %3388 = vmatprep.subr.mxu0 %v658
    %3389 = vmatpush1.msra.mxu0 %v657
    %3390 = vmatprep.subr.mxu0 %v654
    %3391 = vmatpush1.msra.mxu0 %v653
    %3392 = vmatprep.subr.mxu0 %v650
    %3393 = vmatpush1.msra.mxu0 %v649
    %3394 = vmatprep.subr.mxu0 %v646
    %3395 = vmatpush1.msra.mxu0 %v645
    %3396 = vmatprep.subr.mxu0 %v642
    %3397 = vmatpush1.msra.mxu0 %v641
    %3398 = vmatprep.subr.mxu0 %v638
    %3399 = vmatpush1.msra.mxu0 %v637
    %3400 = vmatprep.subr.mxu0 %v634
    %3401 = vmatpush1.msra.mxu0 %v633
    %3402 = vmatprep.subr.mxu0 0.0
    %3403 = vmatpush2.msra.mxu0 0.0
    %3404 = vmatprep.subr.mxu0 0.0
    %3405 = vmatpush2.msra.mxu0 0.0
    %3406 = vmatprep.subr.mxu0 0.0
    %3407 = vmatpush2.msra.mxu0 0.0
    %3408 = vmatprep.subr.mxu0 0.0
    %3409 = vmatpush2.msra.mxu0 0.0
    %3410 = vmatprep.subr.mxu0 0.0
    %3411 = vmatpush2.msra.mxu0 0.0
    %3412 = vmatprep.subr.mxu0 0.0
    %3413 = vmatpush2.msra.mxu0 0.0
    %3414 = vmatprep.subr.mxu0 0.0
    %3415 = vmatpush2.msra.mxu0 0.0
    %3416 = vmatprep.subr.mxu0 0.0
    %3417 = vmatpush2.msra.mxu0 0.0
    %3418 = vmatprep.subr.mxu0 0.0
    %3419 = vmatpush2.msra.mxu0 0.0
    %3420 = vmatprep.subr.mxu0 0.0
    %3421 = vmatpush2.msra.mxu0 0.0
    %3422 = vmatprep.subr.mxu0 0.0
    %3423 = vmatpush2.msra.mxu0 0.0
    %3424 = vmatprep.subr.mxu0 0.0
    %3425 = vmatpush2.msra.mxu0 0.0
    %3426 = vmatprep.subr.mxu0 0.0
    %3427 = vmatpush2.msra.mxu0 0.0
    %3428 = vmatprep.subr.mxu0 0.0
    %3429 = vmatpush2.msra.mxu0 0.0
    %3430 = vmatprep.subr.mxu0 0.0
    %3431 = vmatpush2.msra.mxu0 0.0
    %3432 = vmatprep.subr.mxu0 0.0
    %3433 = vmatpush2.msra.mxu0 0.0
    %3434 = vmatprep.mubr.f32.mxu0 0.0
    %3435 = vmatmul.mubr.f32.gmra.mxu0 %v3355
    %v3436 = vpop.f32.mrf.mxu0
    %v3437 = vadd.f32 0.0, %v3436
    %v3438 = vpop.f32.mrf.mxu0
    %v3439 = vadd.f32 0.0, %v3438
    %3440 = vdwg.mxu0
    %3441 = vmatprep.subr.mxu0 %v696
    %3442 = vmatpush1.msra.mxu0 %v695
    %3443 = vmatprep.subr.mxu0 %v692
    %3444 = vmatpush1.msra.mxu0 %v691
    %3445 = vmatprep.subr.mxu0 %v688
    %3446 = vmatpush1.msra.mxu0 %v687
    %3447 = vmatprep.subr.mxu0 %v684
    %3448 = vmatpush1.msra.mxu0 %v683
    %3449 = vmatprep.subr.mxu0 %v680
    %3450 = vmatpush1.msra.mxu0 %v679
    %3451 = vmatprep.subr.mxu0 %v676
    %3452 = vmatpush1.msra.mxu0 %v675
    %3453 = vmatprep.subr.mxu0 %v672
    %3454 = vmatpush1.msra.mxu0 %v671
    %3455 = vmatprep.subr.mxu0 %v668
    %3456 = vmatpush1.msra.mxu0 %v667
    %3457 = vmatprep.subr.mxu0 %v664
    %3458 = vmatpush1.msra.mxu0 %v663
    %3459 = vmatprep.subr.mxu0 %v660
    %3460 = vmatpush1.msra.mxu0 %v659
    %3461 = vmatprep.subr.mxu0 %v656
    %3462 = vmatpush1.msra.mxu0 %v655
    %3463 = vmatprep.subr.mxu0 %v652
    %3464 = vmatpush1.msra.mxu0 %v651
    %3465 = vmatprep.subr.mxu0 %v648
    %3466 = vmatpush1.msra.mxu0 %v647
    %3467 = vmatprep.subr.mxu0 %v644
    %3468 = vmatpush1.msra.mxu0 %v643
    %3469 = vmatprep.subr.mxu0 %v640
    %3470 = vmatpush1.msra.mxu0 %v639
    %3471 = vmatprep.subr.mxu0 %v636
    %3472 = vmatpush1.msra.mxu0 %v635
    %3473 = vmatprep.subr.mxu0 0.0
    %3474 = vmatpush2.msra.mxu0 0.0
    %3475 = vmatprep.subr.mxu0 0.0
    %3476 = vmatpush2.msra.mxu0 0.0
    %3477 = vmatprep.subr.mxu0 0.0
    %3478 = vmatpush2.msra.mxu0 0.0
    %3479 = vmatprep.subr.mxu0 0.0
    %3480 = vmatpush2.msra.mxu0 0.0
    %3481 = vmatprep.subr.mxu0 0.0
    %3482 = vmatpush2.msra.mxu0 0.0
    %3483 = vmatprep.subr.mxu0 0.0
    %3484 = vmatpush2.msra.mxu0 0.0
    %3485 = vmatprep.subr.mxu0 0.0
    %3486 = vmatpush2.msra.mxu0 0.0
    %3487 = vmatprep.subr.mxu0 0.0
    %3488 = vmatpush2.msra.mxu0 0.0
    %3489 = vmatprep.subr.mxu0 0.0
    %3490 = vmatpush2.msra.mxu0 0.0
    %3491 = vmatprep.subr.mxu0 0.0
    %3492 = vmatpush2.msra.mxu0 0.0
    %3493 = vmatprep.subr.mxu0 0.0
    %3494 = vmatpush2.msra.mxu0 0.0
    %3495 = vmatprep.subr.mxu0 0.0
    %3496 = vmatpush2.msra.mxu0 0.0
    %3497 = vmatprep.subr.mxu0 0.0
    %3498 = vmatpush2.msra.mxu0 0.0
    %3499 = vmatprep.subr.mxu0 0.0
    %3500 = vmatpush2.msra.mxu0 0.0
    %3501 = vmatprep.subr.mxu0 0.0
    %3502 = vmatpush2.msra.mxu0 0.0
    %3503 = vmatprep.subr.mxu0 0.0
    %3504 = vmatpush2.msra.mxu0 0.0
    %3505 = vmatprep.mubr.f32.mxu0 0.0
    %3506 = vmatmul.mubr.f32.gmra.mxu0 %v3355
    %v3507 = vpop.f32.mrf.mxu0
    %v3508 = vadd.f32 0.0, %v3507
    %v3509 = vpop.f32.mrf.mxu0
    %v3510 = vadd.f32 0.0, %v3509
    %3511 = vdwg.mxu0
    %v3516 = vrot.slane %v3437, 4
    %v3517 = vrot.slane %v3439, 4
    %v3518 = vrot.slane %v3508, 4
    %v3519 = vrot.slane %v3510, 4
    %v3524 = vadd.f32 %v3362, %v3516
    %v3525 = vadd.f32 %v3363, %v3517
    %v3526 = vadd.f32 %v3364, %v3518
    %v3527 = vadd.f32 %v3365, %v3519
    %v3529 = vrot.slane %v3357, 4
    %3531 = vmatprep.subr.mxu0 %v758
    %3532 = vmatpush1.msra.mxu0 %v757
    %3533 = vmatprep.subr.mxu0 %v754
    %3534 = vmatpush1.msra.mxu0 %v753
    %3535 = vmatprep.subr.mxu0 %v750
    %3536 = vmatpush1.msra.mxu0 %v749
    %3537 = vmatprep.subr.mxu0 %v746
    %3538 = vmatpush1.msra.mxu0 %v745
    %3539 = vmatprep.subr.mxu0 %v742
    %3540 = vmatpush1.msra.mxu0 %v741
    %3541 = vmatprep.subr.mxu0 %v738
    %3542 = vmatpush1.msra.mxu0 %v737
    %3543 = vmatprep.subr.mxu0 %v734
    %3544 = vmatpush1.msra.mxu0 %v733
    %3545 = vmatprep.subr.mxu0 %v730
    %3546 = vmatpush1.msra.mxu0 %v729
    %3547 = vmatprep.subr.mxu0 %v726
    %3548 = vmatpush1.msra.mxu0 %v725
    %3549 = vmatprep.subr.mxu0 %v722
    %3550 = vmatpush1.msra.mxu0 %v721
    %3551 = vmatprep.subr.mxu0 %v718
    %3552 = vmatpush1.msra.mxu0 %v717
    %3553 = vmatprep.subr.mxu0 %v714
    %3554 = vmatpush1.msra.mxu0 %v713
    %3555 = vmatprep.subr.mxu0 %v710
    %3556 = vmatpush1.msra.mxu0 %v709
    %3557 = vmatprep.subr.mxu0 %v706
    %3558 = vmatpush1.msra.mxu0 %v705
    %3559 = vmatprep.subr.mxu0 %v702
    %3560 = vmatpush1.msra.mxu0 %v701
    %3561 = vmatprep.subr.mxu0 %v698
    %3562 = vmatpush1.msra.mxu0 %v697
    %3563 = vmatprep.subr.mxu0 0.0
    %3564 = vmatpush2.msra.mxu0 0.0
    %3565 = vmatprep.subr.mxu0 0.0
    %3566 = vmatpush2.msra.mxu0 0.0
    %3567 = vmatprep.subr.mxu0 0.0
    %3568 = vmatpush2.msra.mxu0 0.0
    %3569 = vmatprep.subr.mxu0 0.0
    %3570 = vmatpush2.msra.mxu0 0.0
    %3571 = vmatprep.subr.mxu0 0.0
    %3572 = vmatpush2.msra.mxu0 0.0
    %3573 = vmatprep.subr.mxu0 0.0
    %3574 = vmatpush2.msra.mxu0 0.0
    %3575 = vmatprep.subr.mxu0 0.0
    %3576 = vmatpush2.msra.mxu0 0.0
    %3577 = vmatprep.subr.mxu0 0.0
    %3578 = vmatpush2.msra.mxu0 0.0
    %3579 = vmatprep.subr.mxu0 0.0
    %3580 = vmatpush2.msra.mxu0 0.0
    %3581 = vmatprep.subr.mxu0 0.0
    %3582 = vmatpush2.msra.mxu0 0.0
    %3583 = vmatprep.subr.mxu0 0.0
    %3584 = vmatpush2.msra.mxu0 0.0
    %3585 = vmatprep.subr.mxu0 0.0
    %3586 = vmatpush2.msra.mxu0 0.0
    %3587 = vmatprep.subr.mxu0 0.0
    %3588 = vmatpush2.msra.mxu0 0.0
    %3589 = vmatprep.subr.mxu0 0.0
    %3590 = vmatpush2.msra.mxu0 0.0
    %3591 = vmatprep.subr.mxu0 0.0
    %3592 = vmatpush2.msra.mxu0 0.0
    %3593 = vmatprep.subr.mxu0 0.0
    %3594 = vmatpush2.msra.mxu0 0.0
    %3595 = vmatprep.mubr.f32.mxu0 0.0
    %3596 = vmatmul.mubr.f32.gmra.mxu0 %v3529
    %v3597 = vpop.f32.mrf.mxu0
    %v3598 = vadd.f32 0.0, %v3597
    %v3599 = vpop.f32.mrf.mxu0
    %v3600 = vadd.f32 0.0, %v3599
    %3601 = vdwg.mxu0
    %3602 = vmatprep.subr.mxu0 %v760
    %3603 = vmatpush1.msra.mxu0 %v759
    %3604 = vmatprep.subr.mxu0 %v756
    %3605 = vmatpush1.msra.mxu0 %v755
    %3606 = vmatprep.subr.mxu0 %v752
    %3607 = vmatpush1.msra.mxu0 %v751
    %3608 = vmatprep.subr.mxu0 %v748
    %3609 = vmatpush1.msra.mxu0 %v747
    %3610 = vmatprep.subr.mxu0 %v744
    %3611 = vmatpush1.msra.mxu0 %v743
    %3612 = vmatprep.subr.mxu0 %v740
    %3613 = vmatpush1.msra.mxu0 %v739
    %3614 = vmatprep.subr.mxu0 %v736
    %3615 = vmatpush1.msra.mxu0 %v735
    %3616 = vmatprep.subr.mxu0 %v732
    %3617 = vmatpush1.msra.mxu0 %v731
    %3618 = vmatprep.subr.mxu0 %v728
    %3619 = vmatpush1.msra.mxu0 %v727
    %3620 = vmatprep.subr.mxu0 %v724
    %3621 = vmatpush1.msra.mxu0 %v723
    %3622 = vmatprep.subr.mxu0 %v720
    %3623 = vmatpush1.msra.mxu0 %v719
    %3624 = vmatprep.subr.mxu0 %v716
    %3625 = vmatpush1.msra.mxu0 %v715
    %3626 = vmatprep.subr.mxu0 %v712
    %3627 = vmatpush1.msra.mxu0 %v711
    %3628 = vmatprep.subr.mxu0 %v708
    %3629 = vmatpush1.msra.mxu0 %v707
    %3630 = vmatprep.subr.mxu0 %v704
    %3631 = vmatpush1.msra.mxu0 %v703
    %3632 = vmatprep.subr.mxu0 %v700
    %3633 = vmatpush1.msra.mxu0 %v699
    %3634 = vmatprep.subr.mxu0 0.0
    %3635 = vmatpush2.msra.mxu0 0.0
    %3636 = vmatprep.subr.mxu0 0.0
    %3637 = vmatpush2.msra.mxu0 0.0
    %3638 = vmatprep.subr.mxu0 0.0
    %3639 = vmatpush2.msra.mxu0 0.0
    %3640 = vmatprep.subr.mxu0 0.0
    %3641 = vmatpush2.msra.mxu0 0.0
    %3642 = vmatprep.subr.mxu0 0.0
    %3643 = vmatpush2.msra.mxu0 0.0
    %3644 = vmatprep.subr.mxu0 0.0
    %3645 = vmatpush2.msra.mxu0 0.0
    %3646 = vmatprep.subr.mxu0 0.0
    %3647 = vmatpush2.msra.mxu0 0.0
    %3648 = vmatprep.subr.mxu0 0.0
    %3649 = vmatpush2.msra.mxu0 0.0
    %3650 = vmatprep.subr.mxu0 0.0
    %3651 = vmatpush2.msra.mxu0 0.0
    %3652 = vmatprep.subr.mxu0 0.0
    %3653 = vmatpush2.msra.mxu0 0.0
    %3654 = vmatprep.subr.mxu0 0.0
    %3655 = vmatpush2.msra.mxu0 0.0
    %3656 = vmatprep.subr.mxu0 0.0
    %3657 = vmatpush2.msra.mxu0 0.0
    %3658 = vmatprep.subr.mxu0 0.0
    %3659 = vmatpush2.msra.mxu0 0.0
    %3660 = vmatprep.subr.mxu0 0.0
    %3661 = vmatpush2.msra.mxu0 0.0
    %3662 = vmatprep.subr.mxu0 0.0
    %3663 = vmatpush2.msra.mxu0 0.0
    %3664 = vmatprep.subr.mxu0 0.0
    %3665 = vmatpush2.msra.mxu0 0.0
    %3666 = vmatprep.mubr.f32.mxu0 0.0
    %3667 = vmatmul.mubr.f32.gmra.mxu0 %v3529
    %v3668 = vpop.f32.mrf.mxu0
    %v3669 = vadd.f32 0.0, %v3668
    %v3670 = vpop.f32.mrf.mxu0
    %v3671 = vadd.f32 0.0, %v3670
    %3672 = vdwg.mxu0
    %v3673 = vadd.f32 %v3366, %v3598
    %v3674 = vadd.f32 %v3367, %v3600
    %v3675 = vadd.f32 %v3368, %v3669
    %v3676 = vadd.f32 %v3369, %v3671
    %v3677 = vxor.u32 %v3524, 2147483648
    %v3678 = vxor.u32 %v3525, 2147483648
    %v3679 = vxor.u32 %v3527, 2147483648
    %v3680 = vmul.f32 %v3677, 1.442695
    %v3681 = vpow.pop %v3680
    %v3682 = vmul.f32 %v3678, 1.442695
    %v3683 = vpow.pop %v3682
    %v3684 = vmul.f32 %v3679, 1.442695
    %v3685 = vpow.pop %v3684
    %v3686 = vadd.f32 %v3681, 1.0
    %v3687 = vadd.f32 %v3683, 1.0
    %v3688 = vadd.f32 %v3685, 1.0
    %v3689 = vrcp.pop %v3686
    %v3690 = vmul.f32 1.0, %v3689
    %v3691 = vrcp.pop %v3687
    %v3692 = vmul.f32 1.0, %v3691
    %v3693 = vrcp.pop %v3688
    %v3694 = vmul.f32 1.0, %v3693
    %v3695 = vxor.u32 %v3673, 2147483648
    %v3696 = vxor.u32 %v3674, 2147483648
    %v3697 = vxor.u32 %v3676, 2147483648
    %v3698 = vmul.f32 %v3695, 1.442695
    %v3699 = vpow.pop %v3698
    %v3700 = vmul.f32 %v3696, 1.442695
    %v3701 = vpow.pop %v3700
    %v3702 = vmul.f32 %v3697, 1.442695
    %v3703 = vpow.pop %v3702
    %v3704 = vadd.f32 %v3699, 1.0
    %v3705 = vadd.f32 %v3701, 1.0
    %v3706 = vadd.f32 %v3703, 1.0
    %v3707 = vrcp.pop %v3704
    %v3708 = vmul.f32 1.0, %v3707
    %v3709 = vrcp.pop %v3705
    %v3710 = vmul.f32 1.0, %v3709
    %v3711 = vrcp.pop %v3706
    %v3712 = vmul.f32 1.0, %v3711
    %v3713 = vtanh.pop %v3526
    %v3714 = vtanh.pop %v3675
    %v3716 = vrot.slane %v3347, 4
    %v3718 = vmul.f32 %v3692, %v3716
    %v3719 = vmul.f32 %v3690, %v3713
    %v3720 = vadd.f32 %v3718, %v3719
    %v3722 = vrot.slane %v3353, 4
    %v3724 = vmul.f32 %v3710, %v3722
    %v3725 = vmul.f32 %v3708, %v3714
    %v3726 = vadd.f32 %v3724, %v3725
    %v3727 = vtanh.pop %v3720
    %v3728 = vmul.f32 %v3694, %v3727
    %v3729 = vtanh.pop %v3726
    %v3730 = vmul.f32 %v3712, %v3729
    %s3731 = scalar_lea.vmem [#allocation3], 28
    %3732 = vst [vmem:[%s3731 - $0x4] sm:$0xf0] %v3728
    %3733 = vst [vmem:[#allocation4] sm:$0xf] %v3730
    %v3734 = vld [vmem:[#allocation3] sm:$0xf]
    %v3735 = vld [vmem:[#allocation3 + $0x4] sm:$0xf]
    %v3736 = vld [vmem:[#allocation3 + $0x8] sm:$0xf]
    %v3737 = vld [vmem:[#allocation3 + $0xc] sm:$0xf]
    %v3738 = vld [vmem:[#allocation3 + $0x10] sm:$0xf]
    %v3739 = vld [vmem:[#allocation3 + $0x14] sm:$0xf]
    %v3740 = vld [vmem:[#allocation3 + $0x18] sm:$0xf]
    %v3741 = vld [vmem:[#allocation3 + $0x1c] sm:$0xf]
    %v3742 = vld [vmem:[#allocation4] sm:$0xf]
    %v3743 = vld [vmem:[#allocation4 + $0x4] sm:$0xf]
    %v3744 = vld [vmem:[#allocation4 + $0x8] sm:$0xf]
    %v3745 = vld [vmem:[#allocation4 + $0xc] sm:$0xf]
    %v3746 = vld [vmem:[#allocation4 + $0x10] sm:$0xf]
    %v3747 = vld [vmem:[#allocation4 + $0x14] sm:$0xf]
    %v3748 = vld [vmem:[#allocation4 + $0x18] sm:$0xf]
    %v3749 = vld [vmem:[#allocation4 + $0x1c] sm:$0xf]
    %v3750 = vld [vmem:[%s5] sm:$0x3]
    %v3752 = vlaneseq
    %v3753 = vshrl.u32 %v3752, 7
    %v3754 = vsub.s32 0, %v3753
    %v3755 = vrot.slane %v3750, %v3754
    %v3757 = vmul.f32 %v3734, %v3755
    %v3758 = vmul.f32 %v3735, %v3755
    %v3759 = vmul.f32 %v3736, %v3755
    %v3760 = vmul.f32 %v3737, %v3755
    %v3761 = vmul.f32 %v3738, %v3755
    %v3762 = vmul.f32 %v3739, %v3755
    %v3763 = vmul.f32 %v3740, %v3755
    %v3764 = vmul.f32 %v3741, %v3755
    %vm3765 = vcmask 1043456
    %v3766 = vsel %vm3765, %v3757, 0.0
    %3767 = vadd.xlane.f32.xlu0 %v3766
    %v3768 = vpop.xlane.xlu0 %3767
    %v3769 = vsel %vm3765, %v3758, 0.0
    %3770 = vadd.xlane.f32.xlu0 %v3769
    %v3771 = vpop.xlane.xlu0 %3770
    %v3772 = vsel %vm3765, %v3759, 0.0
    %3773 = vadd.xlane.f32.xlu0 %v3772
    %v3774 = vpop.xlane.xlu0 %3773
    %v3775 = vsel %vm3765, %v3760, 0.0
    %3776 = vadd.xlane.f32.xlu0 %v3775
    %v3777 = vpop.xlane.xlu0 %3776
    %v3778 = vsel %vm3765, %v3761, 0.0
    %3779 = vadd.xlane.f32.xlu0 %v3778
    %v3780 = vpop.xlane.xlu0 %3779
    %v3781 = vsel %vm3765, %v3762, 0.0
    %3782 = vadd.xlane.f32.xlu0 %v3781
    %v3783 = vpop.xlane.xlu0 %3782
    %v3784 = vsel %vm3765, %v3763, 0.0
    %3785 = vadd.xlane.f32.xlu0 %v3784
    %v3786 = vpop.xlane.xlu0 %3785
    %v3787 = vsel %vm3765, %v3764, 0.0
    %3788 = vadd.xlane.f32.xlu0 %v3787
    %v3789 = vpop.xlane.xlu0 %3788
    %v3790 = vrot.slane %v3750, 1
    %v3791 = vlaneseq
    %v3792 = vshrl.u32 %v3791, 7
    %v3793 = vsub.s32 0, %v3792
    %v3794 = vrot.slane %v3790, %v3793
    %v3796 = vmul.f32 %v3742, %v3794
    %v3797 = vmul.f32 %v3743, %v3794
    %v3798 = vmul.f32 %v3744, %v3794
    %v3799 = vmul.f32 %v3745, %v3794
    %v3800 = vmul.f32 %v3746, %v3794
    %v3801 = vmul.f32 %v3747, %v3794
    %v3802 = vmul.f32 %v3748, %v3794
    %v3803 = vmul.f32 %v3749, %v3794
    %v3804 = vsel %vm3765, %v3796, 0.0
    %3805 = vadd.xlane.f32.xlu0 %v3804
    %v3806 = vpop.xlane.xlu0 %3805
    %v3807 = vsel %vm3765, %v3797, 0.0
    %3808 = vadd.xlane.f32.xlu0 %v3807
    %v3809 = vpop.xlane.xlu0 %3808
    %v3810 = vsel %vm3765, %v3798, 0.0
    %3811 = vadd.xlane.f32.xlu0 %v3810
    %v3812 = vpop.xlane.xlu0 %3811
    %v3813 = vsel %vm3765, %v3799, 0.0
    %3814 = vadd.xlane.f32.xlu0 %v3813
    %v3815 = vpop.xlane.xlu0 %3814
    %v3816 = vsel %vm3765, %v3800, 0.0
    %3817 = vadd.xlane.f32.xlu0 %v3816
    %v3818 = vpop.xlane.xlu0 %3817
    %v3819 = vsel %vm3765, %v3801, 0.0
    %3820 = vadd.xlane.f32.xlu0 %v3819
    %v3821 = vpop.xlane.xlu0 %3820
    %v3822 = vsel %vm3765, %v3802, 0.0
    %3823 = vadd.xlane.f32.xlu0 %v3822
    %v3824 = vpop.xlane.xlu0 %3823
    %v3825 = vsel %vm3765, %v3803, 0.0
    %3826 = vadd.xlane.f32.xlu0 %v3825
    %v3827 = vpop.xlane.xlu0 %3826
    %v3828 = vadd.f32 %v3768, %v3806
    %v3829 = vadd.f32 %v3771, %v3809
    %v3830 = vadd.f32 %v3774, %v3812
    %v3831 = vadd.f32 %v3777, %v3815
    %v3832 = vadd.f32 %v3780, %v3818
    %v3833 = vadd.f32 %v3783, %v3821
    %v3834 = vadd.f32 %v3786, %v3824
    %v3835 = vadd.f32 %v3789, %v3827
    %v3836 = vsel %vm3765, %v3828, -inf
    %v3837 = vsel %vm3765, %v3829, -inf
    %v3838 = vsel %vm3765, %v3830, -inf
    %v3839 = vsel %vm3765, %v3831, -inf
    %v3840 = vsel %vm3765, %v3832, -inf
    %v3841 = vmax.f32 %v3836, %v3840
    %v3842 = vsel %vm3765, %v3833, -inf
    %v3843 = vmax.f32 %v3837, %v3842
    %v3844 = vsel %vm3765, %v3834, -inf
    %v3845 = vmax.f32 %v3838, %v3844
    %v3846 = vsel %vm3765, %v3835, -inf
    %v3847 = vmax.f32 %v3839, %v3846
    %v3848 = vmax.f32 %v3841, %v3843
    %v3849 = vmax.f32 %v3845, %v3847
    %v3850 = vmax.f32 %v3848, %v3849
    %v3851 = vsub.f32 %v3828, %v3850
    %v3852 = vsub.f32 %v3829, %v3850
    %v3853 = vsub.f32 %v3830, %v3850
    %v3854 = vsub.f32 %v3831, %v3850
    %v3855 = vsub.f32 %v3832, %v3850
    %v3856 = vsub.f32 %v3833, %v3850
    %v3857 = vsub.f32 %v3834, %v3850
    %v3858 = vsub.f32 %v3835, %v3850
    %v3859 = vmul.f32 %v3851, 1.442695
    %v3860 = vpow.pop %v3859
    %v3861 = vmul.f32 %v3852, 1.442695
    %v3862 = vpow.pop %v3861
    %v3863 = vmul.f32 %v3853, 1.442695
    %v3864 = vpow.pop %v3863
    %v3865 = vmul.f32 %v3854, 1.442695
    %v3866 = vpow.pop %v3865
    %v3867 = vmul.f32 %v3855, 1.442695
    %v3868 = vpow.pop %v3867
    %v3869 = vmul.f32 %v3856, 1.442695
    %v3870 = vpow.pop %v3869
    %v3871 = vmul.f32 %v3857, 1.442695
    %v3872 = vpow.pop %v3871
    %v3873 = vmul.f32 %v3858, 1.442695
    %v3874 = vpow.pop %v3873
    %v3875 = vsel %vm3765, %v3860, 0.0
    %v3876 = vsel %vm3765, %v3862, 0.0
    %v3877 = vadd.f32 %v3875, %v3876
    %v3878 = vsel %vm3765, %v3864, 0.0
    %v3879 = vadd.f32 %v3877, %v3878
    %v3880 = vsel %vm3765, %v3866, 0.0
    %v3881 = vadd.f32 %v3879, %v3880
    %v3882 = vsel %vm3765, %v3868, 0.0
    %v3883 = vadd.f32 %v3881, %v3882
    %v3884 = vsel %vm3765, %v3870, 0.0
    %v3885 = vadd.f32 %v3883, %v3884
    %v3886 = vsel %vm3765, %v3872, 0.0
    %v3887 = vadd.f32 %v3885, %v3886
    %v3888 = vsel %vm3765, %v3874, 0.0
    %v3889 = vadd.f32 %v3887, %v3888
    %v3890 = vrcp.pop %v3889
    %v3891 = vmul.f32 %v3860, %v3890
    %v3892 = vmul.f32 %v3862, %v3890
    %v3893 = vmul.f32 %v3864, %v3890
    %v3894 = vmul.f32 %v3866, %v3890
    %v3895 = vmul.f32 %v3868, %v3890
    %v3896 = vmul.f32 %v3870, %v3890
    %v3897 = vmul.f32 %v3872, %v3890
    %v3898 = vmul.f32 %v3874, %v3890
    %v3899 = vmul.f32 %v3891, %v3734
    %v3900 = vmul.f32 %v3892, %v3735
    %v3901 = vmul.f32 %v3893, %v3736
    %v3902 = vmul.f32 %v3894, %v3737
    %v3903 = vmul.f32 %v3895, %v3738
    %v3904 = vmul.f32 %v3896, %v3739
    %v3905 = vmul.f32 %v3897, %v3740
    %v3906 = vmul.f32 %v3898, %v3741
    %v3907 = vsel %vm3765, %v3899, 0.0
    %v3908 = vsel %vm3765, %v3900, 0.0
    %v3909 = vadd.f32 %v3907, %v3908
    %v3910 = vsel %vm3765, %v3901, 0.0
    %v3911 = vadd.f32 %v3909, %v3910
    %v3912 = vsel %vm3765, %v3902, 0.0
    %v3913 = vadd.f32 %v3911, %v3912
    %v3914 = vsel %vm3765, %v3903, 0.0
    %v3915 = vadd.f32 %v3913, %v3914
    %v3916 = vsel %vm3765, %v3904, 0.0
    %v3917 = vadd.f32 %v3915, %v3916
    %v3918 = vsel %vm3765, %v3905, 0.0
    %v3919 = vadd.f32 %v3917, %v3918
    %v3920 = vsel %vm3765, %v3906, 0.0
    %v3921 = vadd.f32 %v3919, %v3920
    %v3922 = vmul.f32 %v3891, %v3742
    %v3923 = vmul.f32 %v3892, %v3743
    %v3924 = vmul.f32 %v3893, %v3744
    %v3925 = vmul.f32 %v3894, %v3745
    %v3926 = vmul.f32 %v3895, %v3746
    %v3927 = vmul.f32 %v3896, %v3747
    %v3928 = vmul.f32 %v3897, %v3748
    %v3929 = vmul.f32 %v3898, %v3749
    %v3930 = vsel %vm3765, %v3922, 0.0
    %v3931 = vsel %vm3765, %v3923, 0.0
    %v3932 = vadd.f32 %v3930, %v3931
    %v3933 = vsel %vm3765, %v3924, 0.0
    %v3934 = vadd.f32 %v3932, %v3933
    %v3935 = vsel %vm3765, %v3925, 0.0
    %v3936 = vadd.f32 %v3934, %v3935
    %v3937 = vsel %vm3765, %v3926, 0.0
    %v3938 = vadd.f32 %v3936, %v3937
    %v3939 = vsel %vm3765, %v3927, 0.0
    %v3940 = vadd.f32 %v3938, %v3939
    %v3941 = vsel %vm3765, %v3928, 0.0
    %v3942 = vadd.f32 %v3940, %v3941
    %v3943 = vsel %vm3765, %v3929, 0.0
    %v3944 = vadd.f32 %v3942, %v3943
    %v3945 = vsel %vm3765, %v3921, 0.0
    %v3946 = vrot.slane %v3945, 4
    %v3947 = vadd.f32 %v3945, %v3946
    %v3948 = vrot.slane %v3947, 2
    %v3949 = vadd.f32 %v3947, %v3948
    %v3950 = vrot.slane %v3949, 1
    %v3951 = vadd.f32 %v3949, %v3950
    %v3952 = vmul.f32 %v3951, 0.25
    %v3953 = vsel %vm3765, %v3944, 0.0
    %v3954 = vrot.slane %v3953, 4
    %v3955 = vadd.f32 %v3953, %v3954
    %v3956 = vrot.slane %v3955, 2
    %v3957 = vadd.f32 %v3955, %v3956
    %v3958 = vrot.slane %v3957, 1
    %v3959 = vadd.f32 %v3957, %v3958
    %v3960 = vmul.f32 %v3959, 0.25
    %v3961 = vld [vmem:[%s6] sm:$0xff]
    %v3962 = vld [vmem:[%s6 + $0x8] sm:$0xff]
    %v3963 = vld [vmem:[%s6 + $0x10] sm:$0xff]
    %v3964 = vld [vmem:[%s6 + $0x18] sm:$0xff]
    %v3965 = vld [vmem:[%s6 + $0x20] sm:$0xff]
    %v3966 = vld [vmem:[%s6 + $0x28] sm:$0xff]
    %v3967 = vld [vmem:[%s6 + $0x30] sm:$0xff]
    %v3968 = vld [vmem:[%s6 + $0x38] sm:$0xff]
    %v3969 = vld [vmem:[%s6 + $0x40] sm:$0xff]
    %v3970 = vld [vmem:[%s6 + $0x48] sm:$0xff]
    %v3971 = vld [vmem:[%s6 + $0x50] sm:$0xff]
    %v3972 = vld [vmem:[%s6 + $0x58] sm:$0xff]
    %v3973 = vld [vmem:[%s6 + $0x60] sm:$0xff]
    %v3974 = vld [vmem:[%s6 + $0x68] sm:$0xff]
    %v3975 = vld [vmem:[%s6 + $0x70] sm:$0xff]
    %v3976 = vld [vmem:[%s6 + $0x78] sm:$0xff]
    %v3977 = vld [vmem:[%s6 + $0x80] sm:$0xff]
    %v3978 = vld [vmem:[%s6 + $0x88] sm:$0xff]
    %v3979 = vld [vmem:[%s6 + $0x90] sm:$0xff]
    %v3980 = vld [vmem:[%s6 + $0x98] sm:$0xff]
    %v3981 = vld [vmem:[%s6 + $0xa0] sm:$0xff]
    %v3982 = vld [vmem:[%s6 + $0xa8] sm:$0xff]
    %v3983 = vld [vmem:[%s6 + $0xb0] sm:$0xff]
    %v3984 = vld [vmem:[%s6 + $0xb8] sm:$0xff]
    %v3985 = vld [vmem:[%s6 + $0xc0] sm:$0xff]
    %v3986 = vld [vmem:[%s6 + $0xc8] sm:$0xff]
    %v3987 = vld [vmem:[%s6 + $0xd0] sm:$0xff]
    %v3988 = vld [vmem:[%s6 + $0xd8] sm:$0xff]
    %v3989 = vld [vmem:[%s6 + $0xe0] sm:$0xff]
    %v3990 = vld [vmem:[%s6 + $0xe8] sm:$0xff]
    %v3991 = vld [vmem:[%s6 + $0xf0] sm:$0xff]
    %v3992 = vld [vmem:[%s6 + $0xf8] sm:$0xff]
    %3993 = vmatprep.subr.mxu0 0.0
    %3994 = vmatpush1.msra.mxu0 %v3992
    %3995 = vmatprep.subr.mxu0 0.0
    %3996 = vmatpush1.msra.mxu0 %v3991
    %3997 = vmatprep.subr.mxu0 0.0
    %3998 = vmatpush1.msra.mxu0 %v3990
    %3999 = vmatprep.subr.mxu0 0.0
    %4000 = vmatpush1.msra.mxu0 %v3989
    %4001 = vmatprep.subr.mxu0 0.0
    %4002 = vmatpush1.msra.mxu0 %v3988
    %4003 = vmatprep.subr.mxu0 0.0
    %4004 = vmatpush1.msra.mxu0 %v3987
    %4005 = vmatprep.subr.mxu0 0.0
    %4006 = vmatpush1.msra.mxu0 %v3986
    %4007 = vmatprep.subr.mxu0 0.0
    %4008 = vmatpush1.msra.mxu0 %v3985
    %4009 = vmatprep.subr.mxu0 0.0
    %4010 = vmatpush1.msra.mxu0 %v3984
    %4011 = vmatprep.subr.mxu0 0.0
    %4012 = vmatpush1.msra.mxu0 %v3983
    %4013 = vmatprep.subr.mxu0 0.0
    %4014 = vmatpush1.msra.mxu0 %v3982
    %4015 = vmatprep.subr.mxu0 0.0
    %4016 = vmatpush1.msra.mxu0 %v3981
    %4017 = vmatprep.subr.mxu0 0.0
    %4018 = vmatpush1.msra.mxu0 %v3980
    %4019 = vmatprep.subr.mxu0 0.0
    %4020 = vmatpush1.msra.mxu0 %v3979
    %4021 = vmatprep.subr.mxu0 0.0
    %4022 = vmatpush1.msra.mxu0 %v3978
    %4023 = vmatprep.subr.mxu0 0.0
    %4024 = vmatpush1.msra.mxu0 %v3977
    %4025 = vmatprep.subr.mxu0 0.0
    %4026 = vmatpush2.msra.mxu0 0.0
    %4027 = vmatprep.subr.mxu0 0.0
    %4028 = vmatpush2.msra.mxu0 0.0
    %4029 = vmatprep.subr.mxu0 0.0
    %4030 = vmatpush2.msra.mxu0 0.0
    %4031 = vmatprep.subr.mxu0 0.0
    %4032 = vmatpush2.msra.mxu0 0.0
    %4033 = vmatprep.subr.mxu0 0.0
    %4034 = vmatpush2.msra.mxu0 0.0
    %4035 = vmatprep.subr.mxu0 0.0
    %4036 = vmatpush2.msra.mxu0 0.0
    %4037 = vmatprep.subr.mxu0 0.0
    %4038 = vmatpush2.msra.mxu0 0.0
    %4039 = vmatprep.subr.mxu0 0.0
    %4040 = vmatpush2.msra.mxu0 0.0
    %4041 = vmatprep.subr.mxu0 0.0
    %4042 = vmatpush2.msra.mxu0 0.0
    %4043 = vmatprep.subr.mxu0 0.0
    %4044 = vmatpush2.msra.mxu0 0.0
    %4045 = vmatprep.subr.mxu0 0.0
    %4046 = vmatpush2.msra.mxu0 0.0
    %4047 = vmatprep.subr.mxu0 0.0
    %4048 = vmatpush2.msra.mxu0 0.0
    %4049 = vmatprep.subr.mxu0 0.0
    %4050 = vmatpush2.msra.mxu0 0.0
    %4051 = vmatprep.subr.mxu0 0.0
    %4052 = vmatpush2.msra.mxu0 0.0
    %4053 = vmatprep.subr.mxu0 0.0
    %4054 = vmatpush2.msra.mxu0 0.0
    %4055 = vmatprep.subr.mxu0 0.0
    %4056 = vmatpush2.msra.mxu0 0.0
    %4057 = vmatprep.mubr.f32.mxu0 0.0
    %4058 = vmatmul.mubr.f32.gmra.mxu0 %v3960
    %v4059 = vpop.f32.mrf.mxu0
    %v4060 = vadd.f32 0.0, %v4059
    %v4061 = vpop.f32.mrf.mxu0
    %4062 = vdwg.mxu0
    %4063 = vmatprep.subr.mxu0 0.0
    %4064 = vmatpush1.msra.mxu0 %v3976
    %4065 = vmatprep.subr.mxu0 0.0
    %4066 = vmatpush1.msra.mxu0 %v3975
    %4067 = vmatprep.subr.mxu0 0.0
    %4068 = vmatpush1.msra.mxu0 %v3974
    %4069 = vmatprep.subr.mxu0 0.0
    %4070 = vmatpush1.msra.mxu0 %v3973
    %4071 = vmatprep.subr.mxu0 0.0
    %4072 = vmatpush1.msra.mxu0 %v3972
    %4073 = vmatprep.subr.mxu0 0.0
    %4074 = vmatpush1.msra.mxu0 %v3971
    %4075 = vmatprep.subr.mxu0 0.0
    %4076 = vmatpush1.msra.mxu0 %v3970
    %4077 = vmatprep.subr.mxu0 0.0
    %4078 = vmatpush1.msra.mxu0 %v3969
    %4079 = vmatprep.subr.mxu0 0.0
    %4080 = vmatpush1.msra.mxu0 %v3968
    %4081 = vmatprep.subr.mxu0 0.0
    %4082 = vmatpush1.msra.mxu0 %v3967
    %4083 = vmatprep.subr.mxu0 0.0
    %4084 = vmatpush1.msra.mxu0 %v3966
    %4085 = vmatprep.subr.mxu0 0.0
    %4086 = vmatpush1.msra.mxu0 %v3965
    %4087 = vmatprep.subr.mxu0 0.0
    %4088 = vmatpush1.msra.mxu0 %v3964
    %4089 = vmatprep.subr.mxu0 0.0
    %4090 = vmatpush1.msra.mxu0 %v3963
    %4091 = vmatprep.subr.mxu0 0.0
    %4092 = vmatpush1.msra.mxu0 %v3962
    %4093 = vmatprep.subr.mxu0 0.0
    %4094 = vmatpush1.msra.mxu0 %v3961
    %4095 = vmatprep.subr.mxu0 0.0
    %4096 = vmatpush2.msra.mxu0 0.0
    %4097 = vmatprep.subr.mxu0 0.0
    %4098 = vmatpush2.msra.mxu0 0.0
    %4099 = vmatprep.subr.mxu0 0.0
    %4100 = vmatpush2.msra.mxu0 0.0
    %4101 = vmatprep.subr.mxu0 0.0
    %4102 = vmatpush2.msra.mxu0 0.0
    %4103 = vmatprep.subr.mxu0 0.0
    %4104 = vmatpush2.msra.mxu0 0.0
    %4105 = vmatprep.subr.mxu0 0.0
    %4106 = vmatpush2.msra.mxu0 0.0
    %4107 = vmatprep.subr.mxu0 0.0
    %4108 = vmatpush2.msra.mxu0 0.0
    %4109 = vmatprep.subr.mxu0 0.0
    %4110 = vmatpush2.msra.mxu0 0.0
    %4111 = vmatprep.subr.mxu0 0.0
    %4112 = vmatpush2.msra.mxu0 0.0
    %4113 = vmatprep.subr.mxu0 0.0
    %4114 = vmatpush2.msra.mxu0 0.0
    %4115 = vmatprep.subr.mxu0 0.0
    %4116 = vmatpush2.msra.mxu0 0.0
    %4117 = vmatprep.subr.mxu0 0.0
    %4118 = vmatpush2.msra.mxu0 0.0
    %4119 = vmatprep.subr.mxu0 0.0
    %4120 = vmatpush2.msra.mxu0 0.0
    %4121 = vmatprep.subr.mxu0 0.0
    %4122 = vmatpush2.msra.mxu0 0.0
    %4123 = vmatprep.subr.mxu0 0.0
    %4124 = vmatpush2.msra.mxu0 0.0
    %4125 = vmatprep.subr.mxu0 0.0
    %4126 = vmatpush2.msra.mxu0 0.0
    %4127 = vmatprep.mubr.f32.mxu0 0.0
    %4128 = vmatmul.mubr.f32.gmra.mxu0 %v3952
    %v4129 = vpop.f32.mrf.mxu0
    %v4130 = vadd.f32 %v4060, %v4129
    %v4131 = vpop.f32.mrf.mxu0
    %4132 = vdwg.mxu0
    %v4133 = vld [vmem:[%s7] sm:$0x1]
    %v4134 = vadd.f32 %v4130, %v4133
    %vm4135 = vcmask 516096
    %4136 = vst.msk [vmem:[#allocation11] sm:$0x1] %vm4135, %v4134
    // Predicated region
    $region46: #{tpu_custom_call.1} parent=1 // pred_check
      _
    $region47: #{tpu_custom_call.1} parent=1 // pred_check_branch
      %4138 = sbr.rel (0) target = $region49
    $region48: #{tpu_custom_call.1} parent=1 // pred_region
      %s4140 = ssub.s32 16, 16
      %4141 = vsyncadd [#allocation7], %s4140
      %s4143 = sshll.u32 [#allocation11], 4
      %s4144 = int_to_ptr.vmem [resolvable:$true] %s4143
      %4146 = dma.vmem_to_hbm [thread:$0]  %s4144, 16, %s8, [#allocation7]
    $region49: #{tpu_custom_call.1} parent=1 // pred_fallthru
      _
    // Predicated region
    $region50: #{tpu_custom_call.1} parent=1 // pred_check
      _
    $region51: #{tpu_custom_call.1} parent=1 // pred_check_branch
      %4148 = sbr.rel (0) target = $region53
    $region52: #{tpu_custom_call.1} parent=1 // pred_region
      %4149 = dma.done [#allocation7], 16
    $region53: #{tpu_custom_call.1} parent=1 // pred_fallthru
      _
    %4150 = vsyncpa [#allocation6], 1
    %4151 = vsyncpa [#allocation9], 1
    %4152 = vsyncpa [#allocation7], 1

</llo_original>
